<compile_context>
chip_gen: v7x
topology: tpu7x:2x2x1
jax: 0.10.0
libtpu: 0.0.40
codegen_flags: <defaults>
</compile_context>

<pallas_src>
import math

import jax
import jax.numpy as jnp
from jax.experimental import pallas as pl
from jax.experimental.pallas import tpu as pltpu


# ----------------------------------------------------------------------------
# Single fused kernel for the entire forward pass
# ----------------------------------------------------------------------------
def fused_forward_kernel(
    x_ref,                                   # (T, B, F)      time-major input
    rnn_wih_ref, rnn_whh_ref,                # (2, F, 3H1), (2, H1, 3H1)
    rnn_bih_ref, rnn_bhh_ref,                # (2, 1, 3H1) x2
    cnn1_wa_ref, cnn1_wb_ref, cnn1_b_ref,    # (B, B), (B, B), (B, 1)
    cnn2_wa_ref, cnn2_wb_ref, cnn2_b_ref,    # (B, B), (B, B), (B, 1)
    g0_wih_ref, g0_whh_ref,                  # (2, L2, 3H2), (2, H2, 3H2)
    g0_bih_ref, g0_bhh_ref,                  # (2, 1, 3H2) x2
    g1_wih_ref, g1_whh_ref,                  # (2, 2H2, 3H2), (2, H2, 3H2)
    g1_bih_ref, g1_bhh_ref,                  # (2, 1, 3H2) x2
    wfc_ref, bfc_ref,                        # (2H2, OUT), (1, OUT)
    out_ref,                                 # (B, OUT)
):
    f32 = jnp.float32
    T, B, _ = x_ref.shape
    H1 = rnn_whh_ref.shape[1]
    H2 = g0_whh_ref.shape[1]

    def gru_cell(gx, h, whh, bhh, H):
        # gx = x @ W_ih + b_ih (precomputed).  PyTorch gate order (r, z, n):
        #   r = sig(gx_r + gh_r); z = sig(gx_z + gh_z); n = tanh(gx_n + r*gh_n)
        gh = jnp.dot(h, whh, preferred_element_type=f32) + bhh
        r = jax.nn.sigmoid(gx[:, :H] + gh[:, :H])
        z = jax.nn.sigmoid(gx[:, H:2 * H] + gh[:, H:2 * H])
        n = jnp.tanh(gx[:, 2 * H:] + r * gh[:, 2 * H:])
        return (1.0 - z) * n + z * h

    x = x_ref[...].astype(f32)               # (T, B, F), VMEM resident

    # ---- frozen bidirectional rnn (batch_first=True); only out[:, -1] is needed.
    # Forward half of out[:, -1]: full T-step recurrence.
    wih_f, whh_f = rnn_wih_ref[0], rnn_whh_ref[0]
    bih_f, bhh_f = rnn_bih_ref[0], rnn_bhh_ref[0]
    # Input projections are independent of the recurrence (hoisted off the serial
    # h-chain; everything here is unrolled straight-line code at these sizes).
    gx_f = [jnp.dot(x[t], wih_f, preferred_element_type=f32) + bih_f for t in range(T)]
    h = jnp.zeros((B, H1), f32)
    for t in range(T):
        h = gru_cell(gx_f[t], h, whh_f, bhh_f, H1)
    h_fwd = h
    # Backward half of out[:, -1]: the reverse direction's output at t = T-1 is its
    # FIRST step (it processes x[T-1] from h0 = 0), so a single cell step suffices.
    gx_b = jnp.dot(x[T - 1], rnn_wih_ref[1], preferred_element_type=f32) + rnn_bih_ref[1]
    h_bwd = gru_cell(gx_b, jnp.zeros((B, H1), f32),
                     rnn_whh_ref[1], rnn_bhh_ref[1], H1)

    last = jnp.concatenate([h_fwd, h_bwd], axis=-1)     # (B, 2*H1) == out[:, -1]
    # dropout(p=0.2) in eval mode == identity.
    # TODO(synk): training-mode dropout (random mask + 1/(1-p) scale) not implemented.

    # ---- two Conv1d layers on the unbatched (C=B, L) view, kernel=2, stride=1.
    # (W @ y)[:, j] == W @ y[:, j], so shift AFTER the matmul (lane-dense dots).
    L0 = 2 * H1
    a1 = jnp.dot(cnn1_wa_ref[...], last, preferred_element_type=f32)
    s1 = jnp.dot(cnn1_wb_ref[...], last, preferred_element_type=f32)
    o1 = a1[:, :L0 - 1] + s1[:, 1:] + cnn1_b_ref[...]   # (B, L0-1)
    L1 = L0 - 1
    a2 = jnp.dot(cnn2_wa_ref[...], o1, preferred_element_type=f32)
    s2 = jnp.dot(cnn2_wb_ref[...], o1, preferred_element_type=f32)
    o2 = a2[:, :L1 - 1] + s2[:, 1:] + cnn2_b_ref[...]   # (B, L0-2) == (S, L2)

    # ---- trailing 2-layer bidirectional GRU on the unbatched 2-D input:
    # rows of o2 are the sequence (seq_len = S = B, batch = 1).
    S = B

    def bidi_layer(gxf, gxb, whh_fw, bhh_fw, whh_bw, bhh_bw):
        # gxf/gxb: (S, 3H2) hoisted per-direction input projections (incl. b_ih).
        hs_f = []
        hh = jnp.zeros((1, H2), f32)
        for s in range(S):
            hh = gru_cell(gxf[s:s + 1, :], hh, whh_fw, bhh_fw, H2)
            hs_f.append(hh)
        hs_b = [None] * S
        hh = jnp.zeros((1, H2), f32)
        for s in range(S - 1, -1, -1):       # reversed loop index replaces [::-1]
            hh = gru_cell(gxb[s:s + 1, :], hh, whh_bw, bhh_bw, H2)
            hs_b[s] = hh
        return jnp.concatenate(hs_f, axis=0), jnp.concatenate(hs_b, axis=0)

    # layer 0: hoisted input projection — one matmul per direction for all S steps
    gx0_f = jnp.dot(o2, g0_wih_ref[0], preferred_element_type=f32) + g0_bih_ref[0]
    gx0_b = jnp.dot(o2, g0_wih_ref[1], preferred_element_type=f32) + g0_bih_ref[1]
    of0, ob0 = bidi_layer(gx0_f, gx0_b,
                          g0_whh_ref[0], g0_bhh_ref[0],
                          g0_whh_ref[1], g0_bhh_ref[1])

    # layer 1: concat(of0, ob0) @ W == of0 @ W_top + ob0 @ W_bot  (no concat op)
    w1f = g1_wih_ref[0]
    w1b = g1_wih_ref[1]
    gx1_f = (jnp.dot(of0, w1f[:H2, :], preferred_element_type=f32)
             + jnp.dot(ob0, w1f[H2:, :], preferred_element_type=f32)
             + g1_bih_ref[0])
    gx1_b = (jnp.dot(of0, w1b[:H2, :], preferred_element_type=f32)
             + jnp.dot(ob0, w1b[H2:, :], preferred_element_type=f32)
             + g1_bih_ref[1])
    of1, ob1 = bidi_layer(gx1_f, gx1_b,
                          g1_whh_ref[0], g1_bhh_ref[0],
                          g1_whh_ref[1], g1_bhh_ref[1])

    # ---- final Linear on the (S, 2*H2) GRU output (split-weight, no concat).
    wfc = wfc_ref[...]
    out = (jnp.dot(of1, wfc[:H2, :], preferred_element_type=f32)
           + jnp.dot(ob1, wfc[H2:, :], preferred_element_type=f32)
           + bfc_ref[...])
    out_ref[...] = out.astype(out_ref.dtype)


# ----------------------------------------------------------------------------
# Wrapper: one pallas_call, everything (weights + activations) VMEM resident
# ----------------------------------------------------------------------------
def model_forward(batch, params):
    """batch: (B, T, F) as in the PyTorch module (batch_first=True)."""
    x_tbf = jnp.transpose(batch, (1, 0, 2))  # time-major -> leading-dim loads only

    args = (
        x_tbf,
        params["rnn_wih"], params["rnn_whh"], params["rnn_bih"], params["rnn_bhh"],
        params["cnn1_wa"], params["cnn1_wb"], params["cnn1_b"],
        params["cnn2_wa"], params["cnn2_wb"], params["cnn2_b"],
        params["g0_wih"], params["g0_whh"], params["g0_bih"], params["g0_bhh"],
        params["g1_wih"], params["g1_whh"], params["g1_bih"], params["g1_bhh"],
        params["wfc"], params["bfc"],
    )

    B = batch.shape[0]
    out_features = params["wfc"].shape[1]

    def _full_spec(a):
        nd = a.ndim
        return pl.BlockSpec(a.shape, lambda i, _nd=nd: (0,) * _nd)

    # TODO(synk): on v7x the two GRU directions could be split across the 2
    # TensorCores (pl.core_map / size-2 "parallel" axis); single-core here.
    return pl.pallas_call(
        fused_forward_kernel,
        out_shape=jax.ShapeDtypeStruct((B, out_features), jnp.float32),
        grid=(1,),
        in_specs=[_full_spec(a) for a in args],
        out_specs=pl.BlockSpec((B, out_features), lambda i: (0, 0)),
        compiler_params=pltpu.CompilerParams(dimension_semantics=("arbitrary",)),
    )(*args)


# ----------------------------------------------------------------------------
# Parameter initialization (deterministic, PyTorch default-style uniform init)
# ----------------------------------------------------------------------------
def _init_gru_direction(key, in_sz, H):
    k = 1.0 / math.sqrt(H)
    key, k1, k2, k3, k4 = jax.random.split(key, 5)
    wih = jax.random.uniform(k1, (3 * H, in_sz), jnp.float32, -k, k)
    whh = jax.random.uniform(k2, (3 * H, H), jnp.float32, -k, k)
    bih = jax.random.uniform(k3, (3 * H,), jnp.float32, -k, k)
    bhh = jax.random.uniform(k4, (3 * H,), jnp.float32, -k, k)
    # Pre-transpose so the kernel computes x @ W; PyTorch gate order (r, z, n)
    # is preserved along the packed 3H axis.
    return key, (wih.T, whh.T, bih.reshape(1, 3 * H), bhh.reshape(1, 3 * H))


def _init_bidi_gru_layer(key, in_sz, H):
    key, fwd = _init_gru_direction(key, in_sz, H)
    key, bwd = _init_gru_direction(key, in_sz, H)
    packed = tuple(jnp.stack([pf, pb], axis=0) for pf, pb in zip(fwd, bwd))
    return key, packed


def init_model_params(key, B, F_IN, H1, H2, OUT, K=2):
    p = {}

    key, rnn_p = _init_bidi_gru_layer(key, F_IN, H1)
    p["rnn_wih"], p["rnn_whh"], p["rnn_bih"], p["rnn_bhh"] = rnn_p

    kc = 1.0 / math.sqrt(B * K)
    key, k1, k2, k3, k4 = jax.random.split(key, 5)
    w1 = jax.random.uniform(k1, (B, B, K), jnp.float32, -kc, kc)
    b1 = jax.random.uniform(k2, (B,), jnp.float32, -kc, kc)
    w2 = jax.random.uniform(k3, (B, B, K), jnp.float32, -kc, kc)
    b2 = jax.random.uniform(k4, (B,), jnp.float32, -kc, kc)
    p["cnn1_wa"], p["cnn1_wb"], p["cnn1_b"] = w1[:, :, 0], w1[:, :, 1], b1.reshape(B, 1)
    p["cnn2_wa"], p["cnn2_wb"], p["cnn2_b"] = w2[:, :, 0], w2[:, :, 1], b2.reshape(B, 1)

    cnn_out = 2 * H1 - K + 1
    cnn_out = cnn_out - K + 1                 # == 2*H1 - 2 for K=2
    key, g0_p = _init_bidi_gru_layer(key, cnn_out, H2)
    p["g0_wih"], p["g0_whh"], p["g0_bih"], p["g0_bhh"] = g0_p
    key, g1_p = _init_bidi_gru_layer(key, 2 * H2, H2)
    p["g1_wih"], p["g1_whh"], p["g1_bih"], p["g1_bhh"] = g1_p

    kf = 1.0 / math.sqrt(2 * H2)
    key, k5, k6 = jax.random.split(key, 3)
    wfc = jax.random.uniform(k5, (OUT, 2 * H2), jnp.float32, -kf, kf)
    bfc = jax.random.uniform(k6, (OUT,), jnp.float32, -kf, kf)
    p["wfc"], p["bfc"] = wfc.T, bfc.reshape(1, OUT)
    return p


if __name__ == "__main__":
    B = 4       # BATCH_SIZE: conv channels == trailing-GRU sequence length
    T = 6       # sequence length fed to the frozen rnn
    F_IN = 8    # rnn input feature size
    H1 = 16     # recur_model.rnn.hidden_size
    H2 = 32     # self.gru hidden_size (302 in the original, scaled down)
    OUT = 5     # output_size
    K = 2       # kernelsize

    key = jax.random.PRNGKey(0)
    key, kin = jax.random.split(key)
    batch = jax.random.normal(kin, (B, T, F_IN), jnp.float32)

    params = init_model_params(key, B, F_IN, H1, H2, OUT, K)

    y = model_forward(batch, params)
    y = jax.block_until_ready(y)
    assert y.shape == (B, OUT), y.shape
    assert bool(jnp.all(jnp.isfinite(y)))
    print("KERNEL_OK")
</pallas_src>

<mosaic_0001>
module attributes {stable_mosaic.version = 11 : i64} {
  func.func @fused_forward_kernel(%arg0: i32, %arg1: memref<6x4x8xf32, #tpu.memory_space<vmem>>, %arg2: memref<2x8x48xf32, #tpu.memory_space<vmem>>, %arg3: memref<2x16x48xf32, #tpu.memory_space<vmem>>, %arg4: memref<2x1x48xf32, #tpu.memory_space<vmem>>, %arg5: memref<2x1x48xf32, #tpu.memory_space<vmem>>, %arg6: memref<4x4xf32, #tpu.memory_space<vmem>>, %arg7: memref<4x4xf32, #tpu.memory_space<vmem>>, %arg8: memref<4x1xf32, #tpu.memory_space<vmem>>, %arg9: memref<4x4xf32, #tpu.memory_space<vmem>>, %arg10: memref<4x4xf32, #tpu.memory_space<vmem>>, %arg11: memref<4x1xf32, #tpu.memory_space<vmem>>, %arg12: memref<2x30x96xf32, #tpu.memory_space<vmem>>, %arg13: memref<2x32x96xf32, #tpu.memory_space<vmem>>, %arg14: memref<2x1x96xf32, #tpu.memory_space<vmem>>, %arg15: memref<2x1x96xf32, #tpu.memory_space<vmem>>, %arg16: memref<2x64x96xf32, #tpu.memory_space<vmem>>, %arg17: memref<2x32x96xf32, #tpu.memory_space<vmem>>, %arg18: memref<2x1x96xf32, #tpu.memory_space<vmem>>, %arg19: memref<2x1x96xf32, #tpu.memory_space<vmem>>, %arg20: memref<64x5xf32, #tpu.memory_space<vmem>>, %arg21: memref<1x5xf32, #tpu.memory_space<vmem>>, %arg22: memref<4x5xf32, #tpu.memory_space<vmem>>) attributes {dimension_semantics = [#tpu.dimension_semantics<arbitrary>], iteration_bounds = array<i64: 1>, scalar_prefetch = 0 : i64, scratch_operands = 0 : i64, tpu.core_type = #tpu.core_type<tc>, window_params = [{pipeline_mode = #tpu.pipeline_mode<synchronous>, transform_indices = @transform_0, window_bounds = array<i64: 6, 4, 8>}, {pipeline_mode = #tpu.pipeline_mode<synchronous>, transform_indices = @transform_1, window_bounds = array<i64: 2, 8, 48>}, {pipeline_mode = #tpu.pipeline_mode<synchronous>, transform_indices = @transform_2, window_bounds = array<i64: 2, 16, 48>}, {pipeline_mode = #tpu.pipeline_mode<synchronous>, transform_indices = @transform_3, window_bounds = array<i64: 2, 1, 48>}, {pipeline_mode = #tpu.pipeline_mode<synchronous>, transform_indices = @transform_4, window_bounds = array<i64: 2, 1, 48>}, {pipeline_mode = #tpu.pipeline_mode<synchronous>, transform_indices = @transform_5, window_bounds = array<i64: 4, 4>}, {pipeline_mode = #tpu.pipeline_mode<synchronous>, transform_indices = @transform_6, window_bounds = array<i64: 4, 4>}, {pipeline_mode = #tpu.pipeline_mode<synchronous>, transform_indices = @transform_7, window_bounds = array<i64: 4, 1>}, {pipeline_mode = #tpu.pipeline_mode<synchronous>, transform_indices = @transform_8, window_bounds = array<i64: 4, 4>}, {pipeline_mode = #tpu.pipeline_mode<synchronous>, transform_indices = @transform_9, window_bounds = array<i64: 4, 4>}, {pipeline_mode = #tpu.pipeline_mode<synchronous>, transform_indices = @transform_10, window_bounds = array<i64: 4, 1>}, {pipeline_mode = #tpu.pipeline_mode<synchronous>, transform_indices = @transform_11, window_bounds = array<i64: 2, 30, 96>}, {pipeline_mode = #tpu.pipeline_mode<synchronous>, transform_indices = @transform_12, window_bounds = array<i64: 2, 32, 96>}, {pipeline_mode = #tpu.pipeline_mode<synchronous>, transform_indices = @transform_13, window_bounds = array<i64: 2, 1, 96>}, {pipeline_mode = #tpu.pipeline_mode<synchronous>, transform_indices = @transform_14, window_bounds = array<i64: 2, 1, 96>}, {pipeline_mode = #tpu.pipeline_mode<synchronous>, transform_indices = @transform_15, window_bounds = array<i64: 2, 64, 96>}, {pipeline_mode = #tpu.pipeline_mode<synchronous>, transform_indices = @transform_16, window_bounds = array<i64: 2, 32, 96>}, {pipeline_mode = #tpu.pipeline_mode<synchronous>, transform_indices = @transform_17, window_bounds = array<i64: 2, 1, 96>}, {pipeline_mode = #tpu.pipeline_mode<synchronous>, transform_indices = @transform_18, window_bounds = array<i64: 2, 1, 96>}, {pipeline_mode = #tpu.pipeline_mode<synchronous>, transform_indices = @transform_19, window_bounds = array<i64: 64, 5>}, {pipeline_mode = #tpu.pipeline_mode<synchronous>, transform_indices = @transform_20, window_bounds = array<i64: 1, 5>}, {pipeline_mode = #tpu.pipeline_mode<synchronous>, transform_indices = @transform_21, window_bounds = array<i64: 4, 5>}]} {
    %c0 = arith.constant 0 : index
    %c0_0 = arith.constant 0 : index
    %c0_1 = arith.constant 0 : index
    %0 = vector.load %arg1[%c0, %c0_0, %c0_1] : memref<6x4x8xf32, #tpu.memory_space<vmem>>, vector<6x4x8xf32>
    %c0_2 = arith.constant 0 : index
    %c0_3 = arith.constant 0 : index
    %c0_4 = arith.constant 0 : index
    %1 = vector.load %arg2[%c0_2, %c0_3, %c0_4] : memref<2x8x48xf32, #tpu.memory_space<vmem>>, vector<1x8x48xf32>
    %2 = vector.shape_cast %1 : vector<1x8x48xf32> to vector<8x48xf32>
    %c0_5 = arith.constant 0 : index
    %c0_6 = arith.constant 0 : index
    %c0_7 = arith.constant 0 : index
    %3 = vector.load %arg3[%c0_5, %c0_6, %c0_7] : memref<2x16x48xf32, #tpu.memory_space<vmem>>, vector<1x16x48xf32>
    %4 = vector.shape_cast %3 : vector<1x16x48xf32> to vector<16x48xf32>
    %c0_8 = arith.constant 0 : index
    %c0_9 = arith.constant 0 : index
    %c0_10 = arith.constant 0 : index
    %5 = vector.load %arg4[%c0_8, %c0_9, %c0_10] : memref<2x1x48xf32, #tpu.memory_space<vmem>>, vector<1x1x48xf32>
    %6 = vector.shape_cast %5 : vector<1x1x48xf32> to vector<1x48xf32>
    %c0_11 = arith.constant 0 : index
    %c0_12 = arith.constant 0 : index
    %c0_13 = arith.constant 0 : index
    %7 = vector.load %arg5[%c0_11, %c0_12, %c0_13] : memref<2x1x48xf32, #tpu.memory_space<vmem>>, vector<1x1x48xf32>
    %8 = vector.shape_cast %7 : vector<1x1x48xf32> to vector<1x48xf32>
    %9 = vector.extract_strided_slice %0 {offsets = [0, 0, 0], sizes = [1, 4, 8], strides = [1, 1, 1]} : vector<6x4x8xf32> to vector<1x4x8xf32>
    %10 = vector.shape_cast %9 : vector<1x4x8xf32> to vector<4x8xf32>
    %cst = arith.constant dense<0.000000e+00> : vector<4x48xf32>
    %11 = tpu.matmul %10, %2, %cst {dimension_numbers = #tpu.dot_dimension_numbers<[1], [0], [0], [1], [0, 0, 1, 1], [], []>} : vector<4x8xf32>, vector<8x48xf32>, vector<4x48xf32> -> vector<4x48xf32>
    %12 = vector.broadcast %6 : vector<1x48xf32> to vector<4x48xf32>
    %13 = arith.addf %11, %12 : vector<4x48xf32>
    %14 = vector.extract_strided_slice %0 {offsets = [1, 0, 0], sizes = [1, 4, 8], strides = [1, 1, 1]} : vector<6x4x8xf32> to vector<1x4x8xf32>
    %15 = vector.shape_cast %14 : vector<1x4x8xf32> to vector<4x8xf32>
    %cst_14 = arith.constant dense<0.000000e+00> : vector<4x48xf32>
    %16 = tpu.matmul %15, %2, %cst_14 {dimension_numbers = #tpu.dot_dimension_numbers<[1], [0], [0], [1], [0, 0, 1, 1], [], []>} : vector<4x8xf32>, vector<8x48xf32>, vector<4x48xf32> -> vector<4x48xf32>
    %17 = vector.broadcast %6 : vector<1x48xf32> to vector<4x48xf32>
    %18 = arith.addf %16, %17 : vector<4x48xf32>
    %19 = vector.extract_strided_slice %0 {offsets = [2, 0, 0], sizes = [1, 4, 8], strides = [1, 1, 1]} : vector<6x4x8xf32> to vector<1x4x8xf32>
    %20 = vector.shape_cast %19 : vector<1x4x8xf32> to vector<4x8xf32>
    %cst_15 = arith.constant dense<0.000000e+00> : vector<4x48xf32>
    %21 = tpu.matmul %20, %2, %cst_15 {dimension_numbers = #tpu.dot_dimension_numbers<[1], [0], [0], [1], [0, 0, 1, 1], [], []>} : vector<4x8xf32>, vector<8x48xf32>, vector<4x48xf32> -> vector<4x48xf32>
    %22 = vector.broadcast %6 : vector<1x48xf32> to vector<4x48xf32>
    %23 = arith.addf %21, %22 : vector<4x48xf32>
    %24 = vector.extract_strided_slice %0 {offsets = [3, 0, 0], sizes = [1, 4, 8], strides = [1, 1, 1]} : vector<6x4x8xf32> to vector<1x4x8xf32>
    %25 = vector.shape_cast %24 : vector<1x4x8xf32> to vector<4x8xf32>
    %cst_16 = arith.constant dense<0.000000e+00> : vector<4x48xf32>
    %26 = tpu.matmul %25, %2, %cst_16 {dimension_numbers = #tpu.dot_dimension_numbers<[1], [0], [0], [1], [0, 0, 1, 1], [], []>} : vector<4x8xf32>, vector<8x48xf32>, vector<4x48xf32> -> vector<4x48xf32>
    %27 = vector.broadcast %6 : vector<1x48xf32> to vector<4x48xf32>
    %28 = arith.addf %26, %27 : vector<4x48xf32>
    %29 = vector.extract_strided_slice %0 {offsets = [4, 0, 0], sizes = [1, 4, 8], strides = [1, 1, 1]} : vector<6x4x8xf32> to vector<1x4x8xf32>
    %30 = vector.shape_cast %29 : vector<1x4x8xf32> to vector<4x8xf32>
    %cst_17 = arith.constant dense<0.000000e+00> : vector<4x48xf32>
    %31 = tpu.matmul %30, %2, %cst_17 {dimension_numbers = #tpu.dot_dimension_numbers<[1], [0], [0], [1], [0, 0, 1, 1], [], []>} : vector<4x8xf32>, vector<8x48xf32>, vector<4x48xf32> -> vector<4x48xf32>
    %32 = vector.broadcast %6 : vector<1x48xf32> to vector<4x48xf32>
    %33 = arith.addf %31, %32 : vector<4x48xf32>
    %34 = vector.extract_strided_slice %0 {offsets = [5, 0, 0], sizes = [1, 4, 8], strides = [1, 1, 1]} : vector<6x4x8xf32> to vector<1x4x8xf32>
    %35 = vector.shape_cast %34 : vector<1x4x8xf32> to vector<4x8xf32>
    %cst_18 = arith.constant dense<0.000000e+00> : vector<4x48xf32>
    %36 = tpu.matmul %35, %2, %cst_18 {dimension_numbers = #tpu.dot_dimension_numbers<[1], [0], [0], [1], [0, 0, 1, 1], [], []>} : vector<4x8xf32>, vector<8x48xf32>, vector<4x48xf32> -> vector<4x48xf32>
    %37 = vector.broadcast %6 : vector<1x48xf32> to vector<4x48xf32>
    %38 = arith.addf %36, %37 : vector<4x48xf32>
    %cst_19 = arith.constant 0.000000e+00 : f32
    %39 = vector.broadcast %cst_19 : f32 to vector<4x16xf32>
    %cst_20 = arith.constant dense<0.000000e+00> : vector<4x48xf32>
    %40 = tpu.matmul %39, %4, %cst_20 {dimension_numbers = #tpu.dot_dimension_numbers<[1], [0], [0], [1], [0, 0, 1, 1], [], []>} : vector<4x16xf32>, vector<16x48xf32>, vector<4x48xf32> -> vector<4x48xf32>
    %41 = vector.broadcast %8 : vector<1x48xf32> to vector<4x48xf32>
    %42 = arith.addf %40, %41 : vector<4x48xf32>
    %43 = vector.extract_strided_slice %13 {offsets = [0, 0], sizes = [4, 16], strides = [1, 1]} : vector<4x48xf32> to vector<4x16xf32>
    %44 = vector.extract_strided_slice %42 {offsets = [0, 0], sizes = [4, 16], strides = [1, 1]} : vector<4x48xf32> to vector<4x16xf32>
    %45 = arith.addf %43, %44 : vector<4x16xf32>
    %46 = arith.negf %45 : vector<4x16xf32>
    %47 = math.exp %46 : vector<4x16xf32>
    %cst_21 = arith.constant 1.000000e+00 : f32
    %48 = vector.broadcast %cst_21 : f32 to vector<4x16xf32>
    %49 = arith.addf %48, %47 : vector<4x16xf32>
    %50 = arith.divf %48, %49 : vector<4x16xf32>
    %51 = vector.extract_strided_slice %13 {offsets = [0, 16], sizes = [4, 16], strides = [1, 1]} : vector<4x48xf32> to vector<4x16xf32>
    %52 = vector.extract_strided_slice %42 {offsets = [0, 16], sizes = [4, 16], strides = [1, 1]} : vector<4x48xf32> to vector<4x16xf32>
    %53 = arith.addf %51, %52 : vector<4x16xf32>
    %54 = arith.negf %53 : vector<4x16xf32>
    %55 = math.exp %54 : vector<4x16xf32>
    %cst_22 = arith.constant 1.000000e+00 : f32
    %56 = vector.broadcast %cst_22 : f32 to vector<4x16xf32>
    %57 = arith.addf %56, %55 : vector<4x16xf32>
    %58 = arith.divf %56, %57 : vector<4x16xf32>
    %59 = vector.extract_strided_slice %13 {offsets = [0, 32], sizes = [4, 16], strides = [1, 1]} : vector<4x48xf32> to vector<4x16xf32>
    %60 = vector.extract_strided_slice %42 {offsets = [0, 32], sizes = [4, 16], strides = [1, 1]} : vector<4x48xf32> to vector<4x16xf32>
    %61 = arith.mulf %50, %60 : vector<4x16xf32>
    %62 = arith.addf %59, %61 : vector<4x16xf32>
    %63 = math.tanh %62 : vector<4x16xf32>
    %cst_23 = arith.constant 1.000000e+00 : f32
    %64 = vector.broadcast %cst_23 : f32 to vector<4x16xf32>
    %65 = arith.subf %64, %58 : vector<4x16xf32>
    %66 = arith.mulf %65, %63 : vector<4x16xf32>
    %67 = arith.mulf %58, %39 : vector<4x16xf32>
    %68 = arith.addf %66, %67 : vector<4x16xf32>
    %cst_24 = arith.constant dense<0.000000e+00> : vector<4x48xf32>
    %69 = tpu.matmul %68, %4, %cst_24 {dimension_numbers = #tpu.dot_dimension_numbers<[1], [0], [0], [1], [0, 0, 1, 1], [], []>} : vector<4x16xf32>, vector<16x48xf32>, vector<4x48xf32> -> vector<4x48xf32>
    %70 = vector.broadcast %8 : vector<1x48xf32> to vector<4x48xf32>
    %71 = arith.addf %69, %70 : vector<4x48xf32>
    %72 = vector.extract_strided_slice %18 {offsets = [0, 0], sizes = [4, 16], strides = [1, 1]} : vector<4x48xf32> to vector<4x16xf32>
    %73 = vector.extract_strided_slice %71 {offsets = [0, 0], sizes = [4, 16], strides = [1, 1]} : vector<4x48xf32> to vector<4x16xf32>
    %74 = arith.addf %72, %73 : vector<4x16xf32>
    %75 = arith.negf %74 : vector<4x16xf32>
    %76 = math.exp %75 : vector<4x16xf32>
    %cst_25 = arith.constant 1.000000e+00 : f32
    %77 = vector.broadcast %cst_25 : f32 to vector<4x16xf32>
    %78 = arith.addf %77, %76 : vector<4x16xf32>
    %79 = arith.divf %77, %78 : vector<4x16xf32>
    %80 = vector.extract_strided_slice %18 {offsets = [0, 16], sizes = [4, 16], strides = [1, 1]} : vector<4x48xf32> to vector<4x16xf32>
    %81 = vector.extract_strided_slice %71 {offsets = [0, 16], sizes = [4, 16], strides = [1, 1]} : vector<4x48xf32> to vector<4x16xf32>
    %82 = arith.addf %80, %81 : vector<4x16xf32>
    %83 = arith.negf %82 : vector<4x16xf32>
    %84 = math.exp %83 : vector<4x16xf32>
    %cst_26 = arith.constant 1.000000e+00 : f32
    %85 = vector.broadcast %cst_26 : f32 to vector<4x16xf32>
    %86 = arith.addf %85, %84 : vector<4x16xf32>
    %87 = arith.divf %85, %86 : vector<4x16xf32>
    %88 = vector.extract_strided_slice %18 {offsets = [0, 32], sizes = [4, 16], strides = [1, 1]} : vector<4x48xf32> to vector<4x16xf32>
    %89 = vector.extract_strided_slice %71 {offsets = [0, 32], sizes = [4, 16], strides = [1, 1]} : vector<4x48xf32> to vector<4x16xf32>
    %90 = arith.mulf %79, %89 : vector<4x16xf32>
    %91 = arith.addf %88, %90 : vector<4x16xf32>
    %92 = math.tanh %91 : vector<4x16xf32>
    %cst_27 = arith.constant 1.000000e+00 : f32
    %93 = vector.broadcast %cst_27 : f32 to vector<4x16xf32>
    %94 = arith.subf %93, %87 : vector<4x16xf32>
    %95 = arith.mulf %94, %92 : vector<4x16xf32>
    %96 = arith.mulf %87, %68 : vector<4x16xf32>
    %97 = arith.addf %95, %96 : vector<4x16xf32>
    %cst_28 = arith.constant dense<0.000000e+00> : vector<4x48xf32>
    %98 = tpu.matmul %97, %4, %cst_28 {dimension_numbers = #tpu.dot_dimension_numbers<[1], [0], [0], [1], [0, 0, 1, 1], [], []>} : vector<4x16xf32>, vector<16x48xf32>, vector<4x48xf32> -> vector<4x48xf32>
    %99 = vector.broadcast %8 : vector<1x48xf32> to vector<4x48xf32>
    %100 = arith.addf %98, %99 : vector<4x48xf32>
    %101 = vector.extract_strided_slice %23 {offsets = [0, 0], sizes = [4, 16], strides = [1, 1]} : vector<4x48xf32> to vector<4x16xf32>
    %102 = vector.extract_strided_slice %100 {offsets = [0, 0], sizes = [4, 16], strides = [1, 1]} : vector<4x48xf32> to vector<4x16xf32>
    %103 = arith.addf %101, %102 : vector<4x16xf32>
    %104 = arith.negf %103 : vector<4x16xf32>
    %105 = math.exp %104 : vector<4x16xf32>
    %cst_29 = arith.constant 1.000000e+00 : f32
    %106 = vector.broadcast %cst_29 : f32 to vector<4x16xf32>
    %107 = arith.addf %106, %105 : vector<4x16xf32>
    %108 = arith.divf %106, %107 : vector<4x16xf32>
    %109 = vector.extract_strided_slice %23 {offsets = [0, 16], sizes = [4, 16], strides = [1, 1]} : vector<4x48xf32> to vector<4x16xf32>
    %110 = vector.extract_strided_slice %100 {offsets = [0, 16], sizes = [4, 16], strides = [1, 1]} : vector<4x48xf32> to vector<4x16xf32>
    %111 = arith.addf %109, %110 : vector<4x16xf32>
    %112 = arith.negf %111 : vector<4x16xf32>
    %113 = math.exp %112 : vector<4x16xf32>
    %cst_30 = arith.constant 1.000000e+00 : f32
    %114 = vector.broadcast %cst_30 : f32 to vector<4x16xf32>
    %115 = arith.addf %114, %113 : vector<4x16xf32>
    %116 = arith.divf %114, %115 : vector<4x16xf32>
    %117 = vector.extract_strided_slice %23 {offsets = [0, 32], sizes = [4, 16], strides = [1, 1]} : vector<4x48xf32> to vector<4x16xf32>
    %118 = vector.extract_strided_slice %100 {offsets = [0, 32], sizes = [4, 16], strides = [1, 1]} : vector<4x48xf32> to vector<4x16xf32>
    %119 = arith.mulf %108, %118 : vector<4x16xf32>
    %120 = arith.addf %117, %119 : vector<4x16xf32>
    %121 = math.tanh %120 : vector<4x16xf32>
    %cst_31 = arith.constant 1.000000e+00 : f32
    %122 = vector.broadcast %cst_31 : f32 to vector<4x16xf32>
    %123 = arith.subf %122, %116 : vector<4x16xf32>
    %124 = arith.mulf %123, %121 : vector<4x16xf32>
    %125 = arith.mulf %116, %97 : vector<4x16xf32>
    %126 = arith.addf %124, %125 : vector<4x16xf32>
    %cst_32 = arith.constant dense<0.000000e+00> : vector<4x48xf32>
    %127 = tpu.matmul %126, %4, %cst_32 {dimension_numbers = #tpu.dot_dimension_numbers<[1], [0], [0], [1], [0, 0, 1, 1], [], []>} : vector<4x16xf32>, vector<16x48xf32>, vector<4x48xf32> -> vector<4x48xf32>
    %128 = vector.broadcast %8 : vector<1x48xf32> to vector<4x48xf32>
    %129 = arith.addf %127, %128 : vector<4x48xf32>
    %130 = vector.extract_strided_slice %28 {offsets = [0, 0], sizes = [4, 16], strides = [1, 1]} : vector<4x48xf32> to vector<4x16xf32>
    %131 = vector.extract_strided_slice %129 {offsets = [0, 0], sizes = [4, 16], strides = [1, 1]} : vector<4x48xf32> to vector<4x16xf32>
    %132 = arith.addf %130, %131 : vector<4x16xf32>
    %133 = arith.negf %132 : vector<4x16xf32>
    %134 = math.exp %133 : vector<4x16xf32>
    %cst_33 = arith.constant 1.000000e+00 : f32
    %135 = vector.broadcast %cst_33 : f32 to vector<4x16xf32>
    %136 = arith.addf %135, %134 : vector<4x16xf32>
    %137 = arith.divf %135, %136 : vector<4x16xf32>
    %138 = vector.extract_strided_slice %28 {offsets = [0, 16], sizes = [4, 16], strides = [1, 1]} : vector<4x48xf32> to vector<4x16xf32>
    %139 = vector.extract_strided_slice %129 {offsets = [0, 16], sizes = [4, 16], strides = [1, 1]} : vector<4x48xf32> to vector<4x16xf32>
    %140 = arith.addf %138, %139 : vector<4x16xf32>
    %141 = arith.negf %140 : vector<4x16xf32>
    %142 = math.exp %141 : vector<4x16xf32>
    %cst_34 = arith.constant 1.000000e+00 : f32
    %143 = vector.broadcast %cst_34 : f32 to vector<4x16xf32>
    %144 = arith.addf %143, %142 : vector<4x16xf32>
    %145 = arith.divf %143, %144 : vector<4x16xf32>
    %146 = vector.extract_strided_slice %28 {offsets = [0, 32], sizes = [4, 16], strides = [1, 1]} : vector<4x48xf32> to vector<4x16xf32>
    %147 = vector.extract_strided_slice %129 {offsets = [0, 32], sizes = [4, 16], strides = [1, 1]} : vector<4x48xf32> to vector<4x16xf32>
    %148 = arith.mulf %137, %147 : vector<4x16xf32>
    %149 = arith.addf %146, %148 : vector<4x16xf32>
    %150 = math.tanh %149 : vector<4x16xf32>
    %cst_35 = arith.constant 1.000000e+00 : f32
    %151 = vector.broadcast %cst_35 : f32 to vector<4x16xf32>
    %152 = arith.subf %151, %145 : vector<4x16xf32>
    %153 = arith.mulf %152, %150 : vector<4x16xf32>
    %154 = arith.mulf %145, %126 : vector<4x16xf32>
    %155 = arith.addf %153, %154 : vector<4x16xf32>
    %cst_36 = arith.constant dense<0.000000e+00> : vector<4x48xf32>
    %156 = tpu.matmul %155, %4, %cst_36 {dimension_numbers = #tpu.dot_dimension_numbers<[1], [0], [0], [1], [0, 0, 1, 1], [], []>} : vector<4x16xf32>, vector<16x48xf32>, vector<4x48xf32> -> vector<4x48xf32>
    %157 = vector.broadcast %8 : vector<1x48xf32> to vector<4x48xf32>
    %158 = arith.addf %156, %157 : vector<4x48xf32>
    %159 = vector.extract_strided_slice %33 {offsets = [0, 0], sizes = [4, 16], strides = [1, 1]} : vector<4x48xf32> to vector<4x16xf32>
    %160 = vector.extract_strided_slice %158 {offsets = [0, 0], sizes = [4, 16], strides = [1, 1]} : vector<4x48xf32> to vector<4x16xf32>
    %161 = arith.addf %159, %160 : vector<4x16xf32>
    %162 = arith.negf %161 : vector<4x16xf32>
    %163 = math.exp %162 : vector<4x16xf32>
    %cst_37 = arith.constant 1.000000e+00 : f32
    %164 = vector.broadcast %cst_37 : f32 to vector<4x16xf32>
    %165 = arith.addf %164, %163 : vector<4x16xf32>
    %166 = arith.divf %164, %165 : vector<4x16xf32>
    %167 = vector.extract_strided_slice %33 {offsets = [0, 16], sizes = [4, 16], strides = [1, 1]} : vector<4x48xf32> to vector<4x16xf32>
    %168 = vector.extract_strided_slice %158 {offsets = [0, 16], sizes = [4, 16], strides = [1, 1]} : vector<4x48xf32> to vector<4x16xf32>
    %169 = arith.addf %167, %168 : vector<4x16xf32>
    %170 = arith.negf %169 : vector<4x16xf32>
    %171 = math.exp %170 : vector<4x16xf32>
    %cst_38 = arith.constant 1.000000e+00 : f32
    %172 = vector.broadcast %cst_38 : f32 to vector<4x16xf32>
    %173 = arith.addf %172, %171 : vector<4x16xf32>
    %174 = arith.divf %172, %173 : vector<4x16xf32>
    %175 = vector.extract_strided_slice %33 {offsets = [0, 32], sizes = [4, 16], strides = [1, 1]} : vector<4x48xf32> to vector<4x16xf32>
    %176 = vector.extract_strided_slice %158 {offsets = [0, 32], sizes = [4, 16], strides = [1, 1]} : vector<4x48xf32> to vector<4x16xf32>
    %177 = arith.mulf %166, %176 : vector<4x16xf32>
    %178 = arith.addf %175, %177 : vector<4x16xf32>
    %179 = math.tanh %178 : vector<4x16xf32>
    %cst_39 = arith.constant 1.000000e+00 : f32
    %180 = vector.broadcast %cst_39 : f32 to vector<4x16xf32>
    %181 = arith.subf %180, %174 : vector<4x16xf32>
    %182 = arith.mulf %181, %179 : vector<4x16xf32>
    %183 = arith.mulf %174, %155 : vector<4x16xf32>
    %184 = arith.addf %182, %183 : vector<4x16xf32>
    %cst_40 = arith.constant dense<0.000000e+00> : vector<4x48xf32>
    %185 = tpu.matmul %184, %4, %cst_40 {dimension_numbers = #tpu.dot_dimension_numbers<[1], [0], [0], [1], [0, 0, 1, 1], [], []>} : vector<4x16xf32>, vector<16x48xf32>, vector<4x48xf32> -> vector<4x48xf32>
    %186 = vector.broadcast %8 : vector<1x48xf32> to vector<4x48xf32>
    %187 = arith.addf %185, %186 : vector<4x48xf32>
    %188 = vector.extract_strided_slice %38 {offsets = [0, 0], sizes = [4, 16], strides = [1, 1]} : vector<4x48xf32> to vector<4x16xf32>
    %189 = vector.extract_strided_slice %187 {offsets = [0, 0], sizes = [4, 16], strides = [1, 1]} : vector<4x48xf32> to vector<4x16xf32>
    %190 = arith.addf %188, %189 : vector<4x16xf32>
    %191 = arith.negf %190 : vector<4x16xf32>
    %192 = math.exp %191 : vector<4x16xf32>
    %cst_41 = arith.constant 1.000000e+00 : f32
    %193 = vector.broadcast %cst_41 : f32 to vector<4x16xf32>
    %194 = arith.addf %193, %192 : vector<4x16xf32>
    %195 = arith.divf %193, %194 : vector<4x16xf32>
    %196 = vector.extract_strided_slice %38 {offsets = [0, 16], sizes = [4, 16], strides = [1, 1]} : vector<4x48xf32> to vector<4x16xf32>
    %197 = vector.extract_strided_slice %187 {offsets = [0, 16], sizes = [4, 16], strides = [1, 1]} : vector<4x48xf32> to vector<4x16xf32>
    %198 = arith.addf %196, %197 : vector<4x16xf32>
    %199 = arith.negf %198 : vector<4x16xf32>
    %200 = math.exp %199 : vector<4x16xf32>
    %cst_42 = arith.constant 1.000000e+00 : f32
    %201 = vector.broadcast %cst_42 : f32 to vector<4x16xf32>
    %202 = arith.addf %201, %200 : vector<4x16xf32>
    %203 = arith.divf %201, %202 : vector<4x16xf32>
    %204 = vector.extract_strided_slice %38 {offsets = [0, 32], sizes = [4, 16], strides = [1, 1]} : vector<4x48xf32> to vector<4x16xf32>
    %205 = vector.extract_strided_slice %187 {offsets = [0, 32], sizes = [4, 16], strides = [1, 1]} : vector<4x48xf32> to vector<4x16xf32>
    %206 = arith.mulf %195, %205 : vector<4x16xf32>
    %207 = arith.addf %204, %206 : vector<4x16xf32>
    %208 = math.tanh %207 : vector<4x16xf32>
    %cst_43 = arith.constant 1.000000e+00 : f32
    %209 = vector.broadcast %cst_43 : f32 to vector<4x16xf32>
    %210 = arith.subf %209, %203 : vector<4x16xf32>
    %211 = arith.mulf %210, %208 : vector<4x16xf32>
    %212 = arith.mulf %203, %184 : vector<4x16xf32>
    %213 = arith.addf %211, %212 : vector<4x16xf32>
    %214 = vector.extract_strided_slice %0 {offsets = [5, 0, 0], sizes = [1, 4, 8], strides = [1, 1, 1]} : vector<6x4x8xf32> to vector<1x4x8xf32>
    %215 = vector.shape_cast %214 : vector<1x4x8xf32> to vector<4x8xf32>
    %c1 = arith.constant 1 : index
    %c0_44 = arith.constant 0 : index
    %c0_45 = arith.constant 0 : index
    %216 = vector.load %arg2[%c1, %c0_44, %c0_45] : memref<2x8x48xf32, #tpu.memory_space<vmem>>, vector<1x8x48xf32>
    %217 = vector.shape_cast %216 : vector<1x8x48xf32> to vector<8x48xf32>
    %cst_46 = arith.constant dense<0.000000e+00> : vector<4x48xf32>
    %218 = tpu.matmul %215, %217, %cst_46 {dimension_numbers = #tpu.dot_dimension_numbers<[1], [0], [0], [1], [0, 0, 1, 1], [], []>} : vector<4x8xf32>, vector<8x48xf32>, vector<4x48xf32> -> vector<4x48xf32>
    %c1_47 = arith.constant 1 : index
    %c0_48 = arith.constant 0 : index
    %c0_49 = arith.constant 0 : index
    %219 = vector.load %arg4[%c1_47, %c0_48, %c0_49] : memref<2x1x48xf32, #tpu.memory_space<vmem>>, vector<1x1x48xf32>
    %220 = vector.shape_cast %219 : vector<1x1x48xf32> to vector<1x48xf32>
    %221 = vector.broadcast %220 : vector<1x48xf32> to vector<4x48xf32>
    %222 = arith.addf %218, %221 : vector<4x48xf32>
    %cst_50 = arith.constant 0.000000e+00 : f32
    %223 = vector.broadcast %cst_50 : f32 to vector<4x16xf32>
    %c1_51 = arith.constant 1 : index
    %c0_52 = arith.constant 0 : index
    %c0_53 = arith.constant 0 : index
    %224 = vector.load %arg3[%c1_51, %c0_52, %c0_53] : memref<2x16x48xf32, #tpu.memory_space<vmem>>, vector<1x16x48xf32>
    %225 = vector.shape_cast %224 : vector<1x16x48xf32> to vector<16x48xf32>
    %c1_54 = arith.constant 1 : index
    %c0_55 = arith.constant 0 : index
    %c0_56 = arith.constant 0 : index
    %226 = vector.load %arg5[%c1_54, %c0_55, %c0_56] : memref<2x1x48xf32, #tpu.memory_space<vmem>>, vector<1x1x48xf32>
    %227 = vector.shape_cast %226 : vector<1x1x48xf32> to vector<1x48xf32>
    %cst_57 = arith.constant dense<0.000000e+00> : vector<4x48xf32>
    %228 = tpu.matmul %223, %225, %cst_57 {dimension_numbers = #tpu.dot_dimension_numbers<[1], [0], [0], [1], [0, 0, 1, 1], [], []>} : vector<4x16xf32>, vector<16x48xf32>, vector<4x48xf32> -> vector<4x48xf32>
    %229 = vector.broadcast %227 : vector<1x48xf32> to vector<4x48xf32>
    %230 = arith.addf %228, %229 : vector<4x48xf32>
    %231 = vector.extract_strided_slice %222 {offsets = [0, 0], sizes = [4, 16], strides = [1, 1]} : vector<4x48xf32> to vector<4x16xf32>
    %232 = vector.extract_strided_slice %230 {offsets = [0, 0], sizes = [4, 16], strides = [1, 1]} : vector<4x48xf32> to vector<4x16xf32>
    %233 = arith.addf %231, %232 : vector<4x16xf32>
    %234 = arith.negf %233 : vector<4x16xf32>
    %235 = math.exp %234 : vector<4x16xf32>
    %cst_58 = arith.constant 1.000000e+00 : f32
    %236 = vector.broadcast %cst_58 : f32 to vector<4x16xf32>
    %237 = arith.addf %236, %235 : vector<4x16xf32>
    %238 = arith.divf %236, %237 : vector<4x16xf32>
    %239 = vector.extract_strided_slice %222 {offsets = [0, 16], sizes = [4, 16], strides = [1, 1]} : vector<4x48xf32> to vector<4x16xf32>
    %240 = vector.extract_strided_slice %230 {offsets = [0, 16], sizes = [4, 16], strides = [1, 1]} : vector<4x48xf32> to vector<4x16xf32>
    %241 = arith.addf %239, %240 : vector<4x16xf32>
    %242 = arith.negf %241 : vector<4x16xf32>
    %243 = math.exp %242 : vector<4x16xf32>
    %cst_59 = arith.constant 1.000000e+00 : f32
    %244 = vector.broadcast %cst_59 : f32 to vector<4x16xf32>
    %245 = arith.addf %244, %243 : vector<4x16xf32>
    %246 = arith.divf %244, %245 : vector<4x16xf32>
    %247 = vector.extract_strided_slice %222 {offsets = [0, 32], sizes = [4, 16], strides = [1, 1]} : vector<4x48xf32> to vector<4x16xf32>
    %248 = vector.extract_strided_slice %230 {offsets = [0, 32], sizes = [4, 16], strides = [1, 1]} : vector<4x48xf32> to vector<4x16xf32>
    %249 = arith.mulf %238, %248 : vector<4x16xf32>
    %250 = arith.addf %247, %249 : vector<4x16xf32>
    %251 = math.tanh %250 : vector<4x16xf32>
    %cst_60 = arith.constant 1.000000e+00 : f32
    %252 = vector.broadcast %cst_60 : f32 to vector<4x16xf32>
    %253 = arith.subf %252, %246 : vector<4x16xf32>
    %254 = arith.mulf %253, %251 : vector<4x16xf32>
    %255 = arith.mulf %246, %223 : vector<4x16xf32>
    %256 = arith.addf %254, %255 : vector<4x16xf32>
    %257 = tpu.concatenate %213, %256 in 1 : vector<4x16xf32>, vector<4x16xf32> -> vector<4x32xf32>
    %c0_61 = arith.constant 0 : index
    %c0_62 = arith.constant 0 : index
    %258 = vector.load %arg6[%c0_61, %c0_62] : memref<4x4xf32, #tpu.memory_space<vmem>>, vector<4x4xf32>
    %cst_63 = arith.constant dense<0.000000e+00> : vector<4x32xf32>
    %259 = tpu.matmul %258, %257, %cst_63 {dimension_numbers = #tpu.dot_dimension_numbers<[1], [0], [0], [1], [0, 0, 1, 1], [], []>} : vector<4x4xf32>, vector<4x32xf32>, vector<4x32xf32> -> vector<4x32xf32>
    %c0_64 = arith.constant 0 : index
    %c0_65 = arith.constant 0 : index
    %260 = vector.load %arg7[%c0_64, %c0_65] : memref<4x4xf32, #tpu.memory_space<vmem>>, vector<4x4xf32>
    %cst_66 = arith.constant dense<0.000000e+00> : vector<4x32xf32>
    %261 = tpu.matmul %260, %257, %cst_66 {dimension_numbers = #tpu.dot_dimension_numbers<[1], [0], [0], [1], [0, 0, 1, 1], [], []>} : vector<4x4xf32>, vector<4x32xf32>, vector<4x32xf32> -> vector<4x32xf32>
    %262 = vector.extract_strided_slice %259 {offsets = [0, 0], sizes = [4, 31], strides = [1, 1]} : vector<4x32xf32> to vector<4x31xf32>
    %263 = vector.extract_strided_slice %261 {offsets = [0, 1], sizes = [4, 31], strides = [1, 1]} : vector<4x32xf32> to vector<4x31xf32>
    %264 = arith.addf %262, %263 : vector<4x31xf32>
    %c0_67 = arith.constant 0 : index
    %c0_68 = arith.constant 0 : index
    %265 = vector.load %arg8[%c0_67, %c0_68] : memref<4x1xf32, #tpu.memory_space<vmem>>, vector<4x1xf32>
    %266 = vector.broadcast %265 : vector<4x1xf32> to vector<4x31xf32>
    %267 = arith.addf %264, %266 : vector<4x31xf32>
    %c0_69 = arith.constant 0 : index
    %c0_70 = arith.constant 0 : index
    %268 = vector.load %arg9[%c0_69, %c0_70] : memref<4x4xf32, #tpu.memory_space<vmem>>, vector<4x4xf32>
    %cst_71 = arith.constant dense<0.000000e+00> : vector<4x31xf32>
    %269 = tpu.matmul %268, %267, %cst_71 {dimension_numbers = #tpu.dot_dimension_numbers<[1], [0], [0], [1], [0, 0, 1, 1], [], []>} : vector<4x4xf32>, vector<4x31xf32>, vector<4x31xf32> -> vector<4x31xf32>
    %c0_72 = arith.constant 0 : index
    %c0_73 = arith.constant 0 : index
    %270 = vector.load %arg10[%c0_72, %c0_73] : memref<4x4xf32, #tpu.memory_space<vmem>>, vector<4x4xf32>
    %cst_74 = arith.constant dense<0.000000e+00> : vector<4x31xf32>
    %271 = tpu.matmul %270, %267, %cst_74 {dimension_numbers = #tpu.dot_dimension_numbers<[1], [0], [0], [1], [0, 0, 1, 1], [], []>} : vector<4x4xf32>, vector<4x31xf32>, vector<4x31xf32> -> vector<4x31xf32>
    %272 = vector.extract_strided_slice %269 {offsets = [0, 0], sizes = [4, 30], strides = [1, 1]} : vector<4x31xf32> to vector<4x30xf32>
    %273 = vector.extract_strided_slice %271 {offsets = [0, 1], sizes = [4, 30], strides = [1, 1]} : vector<4x31xf32> to vector<4x30xf32>
    %274 = arith.addf %272, %273 : vector<4x30xf32>
    %c0_75 = arith.constant 0 : index
    %c0_76 = arith.constant 0 : index
    %275 = vector.load %arg11[%c0_75, %c0_76] : memref<4x1xf32, #tpu.memory_space<vmem>>, vector<4x1xf32>
    %276 = vector.broadcast %275 : vector<4x1xf32> to vector<4x30xf32>
    %277 = arith.addf %274, %276 : vector<4x30xf32>
    %c0_77 = arith.constant 0 : index
    %c0_78 = arith.constant 0 : index
    %c0_79 = arith.constant 0 : index
    %278 = vector.load %arg12[%c0_77, %c0_78, %c0_79] : memref<2x30x96xf32, #tpu.memory_space<vmem>>, vector<1x30x96xf32>
    %279 = vector.shape_cast %278 : vector<1x30x96xf32> to vector<30x96xf32>
    %cst_80 = arith.constant dense<0.000000e+00> : vector<4x96xf32>
    %280 = tpu.matmul %277, %279, %cst_80 {dimension_numbers = #tpu.dot_dimension_numbers<[1], [0], [0], [1], [0, 0, 1, 1], [], []>} : vector<4x30xf32>, vector<30x96xf32>, vector<4x96xf32> -> vector<4x96xf32>
    %c0_81 = arith.constant 0 : index
    %c0_82 = arith.constant 0 : index
    %c0_83 = arith.constant 0 : index
    %281 = vector.load %arg14[%c0_81, %c0_82, %c0_83] : memref<2x1x96xf32, #tpu.memory_space<vmem>>, vector<1x1x96xf32>
    %282 = vector.shape_cast %281 : vector<1x1x96xf32> to vector<1x96xf32>
    %283 = vector.broadcast %282 : vector<1x96xf32> to vector<4x96xf32>
    %284 = arith.addf %280, %283 : vector<4x96xf32>
    %c1_84 = arith.constant 1 : index
    %c0_85 = arith.constant 0 : index
    %c0_86 = arith.constant 0 : index
    %285 = vector.load %arg12[%c1_84, %c0_85, %c0_86] : memref<2x30x96xf32, #tpu.memory_space<vmem>>, vector<1x30x96xf32>
    %286 = vector.shape_cast %285 : vector<1x30x96xf32> to vector<30x96xf32>
    %cst_87 = arith.constant dense<0.000000e+00> : vector<4x96xf32>
    %287 = tpu.matmul %277, %286, %cst_87 {dimension_numbers = #tpu.dot_dimension_numbers<[1], [0], [0], [1], [0, 0, 1, 1], [], []>} : vector<4x30xf32>, vector<30x96xf32>, vector<4x96xf32> -> vector<4x96xf32>
    %c1_88 = arith.constant 1 : index
    %c0_89 = arith.constant 0 : index
    %c0_90 = arith.constant 0 : index
    %288 = vector.load %arg14[%c1_88, %c0_89, %c0_90] : memref<2x1x96xf32, #tpu.memory_space<vmem>>, vector<1x1x96xf32>
    %289 = vector.shape_cast %288 : vector<1x1x96xf32> to vector<1x96xf32>
    %290 = vector.broadcast %289 : vector<1x96xf32> to vector<4x96xf32>
    %291 = arith.addf %287, %290 : vector<4x96xf32>
    %c0_91 = arith.constant 0 : index
    %c0_92 = arith.constant 0 : index
    %c0_93 = arith.constant 0 : index
    %292 = vector.load %arg13[%c0_91, %c0_92, %c0_93] : memref<2x32x96xf32, #tpu.memory_space<vmem>>, vector<1x32x96xf32>
    %293 = vector.shape_cast %292 : vector<1x32x96xf32> to vector<32x96xf32>
    %c0_94 = arith.constant 0 : index
    %c0_95 = arith.constant 0 : index
    %c0_96 = arith.constant 0 : index
    %294 = vector.load %arg15[%c0_94, %c0_95, %c0_96] : memref<2x1x96xf32, #tpu.memory_space<vmem>>, vector<1x1x96xf32>
    %295 = vector.shape_cast %294 : vector<1x1x96xf32> to vector<1x96xf32>
    %c1_97 = arith.constant 1 : index
    %c0_98 = arith.constant 0 : index
    %c0_99 = arith.constant 0 : index
    %296 = vector.load %arg13[%c1_97, %c0_98, %c0_99] : memref<2x32x96xf32, #tpu.memory_space<vmem>>, vector<1x32x96xf32>
    %297 = vector.shape_cast %296 : vector<1x32x96xf32> to vector<32x96xf32>
    %c1_100 = arith.constant 1 : index
    %c0_101 = arith.constant 0 : index
    %c0_102 = arith.constant 0 : index
    %298 = vector.load %arg15[%c1_100, %c0_101, %c0_102] : memref<2x1x96xf32, #tpu.memory_space<vmem>>, vector<1x1x96xf32>
    %299 = vector.shape_cast %298 : vector<1x1x96xf32> to vector<1x96xf32>
    %cst_103 = arith.constant 0.000000e+00 : f32
    %300 = vector.broadcast %cst_103 : f32 to vector<1x32xf32>
    %301 = vector.extract_strided_slice %284 {offsets = [0, 0], sizes = [1, 96], strides = [1, 1]} : vector<4x96xf32> to vector<1x96xf32>
    %cst_104 = arith.constant dense<0.000000e+00> : vector<1x96xf32>
    %302 = tpu.matmul %300, %293, %cst_104 {dimension_numbers = #tpu.dot_dimension_numbers<[1], [0], [0], [1], [0, 0, 1, 1], [], []>} : vector<1x32xf32>, vector<32x96xf32>, vector<1x96xf32> -> vector<1x96xf32>
    %303 = arith.addf %302, %295 : vector<1x96xf32>
    %304 = vector.extract_strided_slice %301 {offsets = [0, 0], sizes = [1, 32], strides = [1, 1]} : vector<1x96xf32> to vector<1x32xf32>
    %305 = vector.extract_strided_slice %303 {offsets = [0, 0], sizes = [1, 32], strides = [1, 1]} : vector<1x96xf32> to vector<1x32xf32>
    %306 = arith.addf %304, %305 : vector<1x32xf32>
    %307 = arith.negf %306 : vector<1x32xf32>
    %308 = math.exp %307 : vector<1x32xf32>
    %cst_105 = arith.constant 1.000000e+00 : f32
    %309 = vector.broadcast %cst_105 : f32 to vector<1x32xf32>
    %310 = arith.addf %309, %308 : vector<1x32xf32>
    %311 = arith.divf %309, %310 : vector<1x32xf32>
    %312 = vector.extract_strided_slice %301 {offsets = [0, 32], sizes = [1, 32], strides = [1, 1]} : vector<1x96xf32> to vector<1x32xf32>
    %313 = vector.extract_strided_slice %303 {offsets = [0, 32], sizes = [1, 32], strides = [1, 1]} : vector<1x96xf32> to vector<1x32xf32>
    %314 = arith.addf %312, %313 : vector<1x32xf32>
    %315 = arith.negf %314 : vector<1x32xf32>
    %316 = math.exp %315 : vector<1x32xf32>
    %cst_106 = arith.constant 1.000000e+00 : f32
    %317 = vector.broadcast %cst_106 : f32 to vector<1x32xf32>
    %318 = arith.addf %317, %316 : vector<1x32xf32>
    %319 = arith.divf %317, %318 : vector<1x32xf32>
    %320 = vector.extract_strided_slice %301 {offsets = [0, 64], sizes = [1, 32], strides = [1, 1]} : vector<1x96xf32> to vector<1x32xf32>
    %321 = vector.extract_strided_slice %303 {offsets = [0, 64], sizes = [1, 32], strides = [1, 1]} : vector<1x96xf32> to vector<1x32xf32>
    %322 = arith.mulf %311, %321 : vector<1x32xf32>
    %323 = arith.addf %320, %322 : vector<1x32xf32>
    %324 = math.tanh %323 : vector<1x32xf32>
    %cst_107 = arith.constant 1.000000e+00 : f32
    %325 = vector.broadcast %cst_107 : f32 to vector<1x32xf32>
    %326 = arith.subf %325, %319 : vector<1x32xf32>
    %327 = arith.mulf %326, %324 : vector<1x32xf32>
    %328 = arith.mulf %319, %300 : vector<1x32xf32>
    %329 = arith.addf %327, %328 : vector<1x32xf32>
    %330 = vector.extract_strided_slice %284 {offsets = [1, 0], sizes = [1, 96], strides = [1, 1]} : vector<4x96xf32> to vector<1x96xf32>
    %cst_108 = arith.constant dense<0.000000e+00> : vector<1x96xf32>
    %331 = tpu.matmul %329, %293, %cst_108 {dimension_numbers = #tpu.dot_dimension_numbers<[1], [0], [0], [1], [0, 0, 1, 1], [], []>} : vector<1x32xf32>, vector<32x96xf32>, vector<1x96xf32> -> vector<1x96xf32>
    %332 = arith.addf %331, %295 : vector<1x96xf32>
    %333 = vector.extract_strided_slice %330 {offsets = [0, 0], sizes = [1, 32], strides = [1, 1]} : vector<1x96xf32> to vector<1x32xf32>
    %334 = vector.extract_strided_slice %332 {offsets = [0, 0], sizes = [1, 32], strides = [1, 1]} : vector<1x96xf32> to vector<1x32xf32>
    %335 = arith.addf %333, %334 : vector<1x32xf32>
    %336 = arith.negf %335 : vector<1x32xf32>
    %337 = math.exp %336 : vector<1x32xf32>
    %cst_109 = arith.constant 1.000000e+00 : f32
    %338 = vector.broadcast %cst_109 : f32 to vector<1x32xf32>
    %339 = arith.addf %338, %337 : vector<1x32xf32>
    %340 = arith.divf %338, %339 : vector<1x32xf32>
    %341 = vector.extract_strided_slice %330 {offsets = [0, 32], sizes = [1, 32], strides = [1, 1]} : vector<1x96xf32> to vector<1x32xf32>
    %342 = vector.extract_strided_slice %332 {offsets = [0, 32], sizes = [1, 32], strides = [1, 1]} : vector<1x96xf32> to vector<1x32xf32>
    %343 = arith.addf %341, %342 : vector<1x32xf32>
    %344 = arith.negf %343 : vector<1x32xf32>
    %345 = math.exp %344 : vector<1x32xf32>
    %cst_110 = arith.constant 1.000000e+00 : f32
    %346 = vector.broadcast %cst_110 : f32 to vector<1x32xf32>
    %347 = arith.addf %346, %345 : vector<1x32xf32>
    %348 = arith.divf %346, %347 : vector<1x32xf32>
    %349 = vector.extract_strided_slice %330 {offsets = [0, 64], sizes = [1, 32], strides = [1, 1]} : vector<1x96xf32> to vector<1x32xf32>
    %350 = vector.extract_strided_slice %332 {offsets = [0, 64], sizes = [1, 32], strides = [1, 1]} : vector<1x96xf32> to vector<1x32xf32>
    %351 = arith.mulf %340, %350 : vector<1x32xf32>
    %352 = arith.addf %349, %351 : vector<1x32xf32>
    %353 = math.tanh %352 : vector<1x32xf32>
    %cst_111 = arith.constant 1.000000e+00 : f32
    %354 = vector.broadcast %cst_111 : f32 to vector<1x32xf32>
    %355 = arith.subf %354, %348 : vector<1x32xf32>
    %356 = arith.mulf %355, %353 : vector<1x32xf32>
    %357 = arith.mulf %348, %329 : vector<1x32xf32>
    %358 = arith.addf %356, %357 : vector<1x32xf32>
    %359 = vector.extract_strided_slice %284 {offsets = [2, 0], sizes = [1, 96], strides = [1, 1]} : vector<4x96xf32> to vector<1x96xf32>
    %cst_112 = arith.constant dense<0.000000e+00> : vector<1x96xf32>
    %360 = tpu.matmul %358, %293, %cst_112 {dimension_numbers = #tpu.dot_dimension_numbers<[1], [0], [0], [1], [0, 0, 1, 1], [], []>} : vector<1x32xf32>, vector<32x96xf32>, vector<1x96xf32> -> vector<1x96xf32>
    %361 = arith.addf %360, %295 : vector<1x96xf32>
    %362 = vector.extract_strided_slice %359 {offsets = [0, 0], sizes = [1, 32], strides = [1, 1]} : vector<1x96xf32> to vector<1x32xf32>
    %363 = vector.extract_strided_slice %361 {offsets = [0, 0], sizes = [1, 32], strides = [1, 1]} : vector<1x96xf32> to vector<1x32xf32>
    %364 = arith.addf %362, %363 : vector<1x32xf32>
    %365 = arith.negf %364 : vector<1x32xf32>
    %366 = math.exp %365 : vector<1x32xf32>
    %cst_113 = arith.constant 1.000000e+00 : f32
    %367 = vector.broadcast %cst_113 : f32 to vector<1x32xf32>
    %368 = arith.addf %367, %366 : vector<1x32xf32>
    %369 = arith.divf %367, %368 : vector<1x32xf32>
    %370 = vector.extract_strided_slice %359 {offsets = [0, 32], sizes = [1, 32], strides = [1, 1]} : vector<1x96xf32> to vector<1x32xf32>
    %371 = vector.extract_strided_slice %361 {offsets = [0, 32], sizes = [1, 32], strides = [1, 1]} : vector<1x96xf32> to vector<1x32xf32>
    %372 = arith.addf %370, %371 : vector<1x32xf32>
    %373 = arith.negf %372 : vector<1x32xf32>
    %374 = math.exp %373 : vector<1x32xf32>
    %cst_114 = arith.constant 1.000000e+00 : f32
    %375 = vector.broadcast %cst_114 : f32 to vector<1x32xf32>
    %376 = arith.addf %375, %374 : vector<1x32xf32>
    %377 = arith.divf %375, %376 : vector<1x32xf32>
    %378 = vector.extract_strided_slice %359 {offsets = [0, 64], sizes = [1, 32], strides = [1, 1]} : vector<1x96xf32> to vector<1x32xf32>
    %379 = vector.extract_strided_slice %361 {offsets = [0, 64], sizes = [1, 32], strides = [1, 1]} : vector<1x96xf32> to vector<1x32xf32>
    %380 = arith.mulf %369, %379 : vector<1x32xf32>
    %381 = arith.addf %378, %380 : vector<1x32xf32>
    %382 = math.tanh %381 : vector<1x32xf32>
    %cst_115 = arith.constant 1.000000e+00 : f32
    %383 = vector.broadcast %cst_115 : f32 to vector<1x32xf32>
    %384 = arith.subf %383, %377 : vector<1x32xf32>
    %385 = arith.mulf %384, %382 : vector<1x32xf32>
    %386 = arith.mulf %377, %358 : vector<1x32xf32>
    %387 = arith.addf %385, %386 : vector<1x32xf32>
    %388 = vector.extract_strided_slice %284 {offsets = [3, 0], sizes = [1, 96], strides = [1, 1]} : vector<4x96xf32> to vector<1x96xf32>
    %cst_116 = arith.constant dense<0.000000e+00> : vector<1x96xf32>
    %389 = tpu.matmul %387, %293, %cst_116 {dimension_numbers = #tpu.dot_dimension_numbers<[1], [0], [0], [1], [0, 0, 1, 1], [], []>} : vector<1x32xf32>, vector<32x96xf32>, vector<1x96xf32> -> vector<1x96xf32>
    %390 = arith.addf %389, %295 : vector<1x96xf32>
    %391 = vector.extract_strided_slice %388 {offsets = [0, 0], sizes = [1, 32], strides = [1, 1]} : vector<1x96xf32> to vector<1x32xf32>
    %392 = vector.extract_strided_slice %390 {offsets = [0, 0], sizes = [1, 32], strides = [1, 1]} : vector<1x96xf32> to vector<1x32xf32>
    %393 = arith.addf %391, %392 : vector<1x32xf32>
    %394 = arith.negf %393 : vector<1x32xf32>
    %395 = math.exp %394 : vector<1x32xf32>
    %cst_117 = arith.constant 1.000000e+00 : f32
    %396 = vector.broadcast %cst_117 : f32 to vector<1x32xf32>
    %397 = arith.addf %396, %395 : vector<1x32xf32>
    %398 = arith.divf %396, %397 : vector<1x32xf32>
    %399 = vector.extract_strided_slice %388 {offsets = [0, 32], sizes = [1, 32], strides = [1, 1]} : vector<1x96xf32> to vector<1x32xf32>
    %400 = vector.extract_strided_slice %390 {offsets = [0, 32], sizes = [1, 32], strides = [1, 1]} : vector<1x96xf32> to vector<1x32xf32>
    %401 = arith.addf %399, %400 : vector<1x32xf32>
    %402 = arith.negf %401 : vector<1x32xf32>
    %403 = math.exp %402 : vector<1x32xf32>
    %cst_118 = arith.constant 1.000000e+00 : f32
    %404 = vector.broadcast %cst_118 : f32 to vector<1x32xf32>
    %405 = arith.addf %404, %403 : vector<1x32xf32>
    %406 = arith.divf %404, %405 : vector<1x32xf32>
    %407 = vector.extract_strided_slice %388 {offsets = [0, 64], sizes = [1, 32], strides = [1, 1]} : vector<1x96xf32> to vector<1x32xf32>
    %408 = vector.extract_strided_slice %390 {offsets = [0, 64], sizes = [1, 32], strides = [1, 1]} : vector<1x96xf32> to vector<1x32xf32>
    %409 = arith.mulf %398, %408 : vector<1x32xf32>
    %410 = arith.addf %407, %409 : vector<1x32xf32>
    %411 = math.tanh %410 : vector<1x32xf32>
    %cst_119 = arith.constant 1.000000e+00 : f32
    %412 = vector.broadcast %cst_119 : f32 to vector<1x32xf32>
    %413 = arith.subf %412, %406 : vector<1x32xf32>
    %414 = arith.mulf %413, %411 : vector<1x32xf32>
    %415 = arith.mulf %406, %387 : vector<1x32xf32>
    %416 = arith.addf %414, %415 : vector<1x32xf32>
    %cst_120 = arith.constant 0.000000e+00 : f32
    %417 = vector.broadcast %cst_120 : f32 to vector<1x32xf32>
    %418 = vector.extract_strided_slice %291 {offsets = [3, 0], sizes = [1, 96], strides = [1, 1]} : vector<4x96xf32> to vector<1x96xf32>
    %cst_121 = arith.constant dense<0.000000e+00> : vector<1x96xf32>
    %419 = tpu.matmul %417, %297, %cst_121 {dimension_numbers = #tpu.dot_dimension_numbers<[1], [0], [0], [1], [0, 0, 1, 1], [], []>} : vector<1x32xf32>, vector<32x96xf32>, vector<1x96xf32> -> vector<1x96xf32>
    %420 = arith.addf %419, %299 : vector<1x96xf32>
    %421 = vector.extract_strided_slice %418 {offsets = [0, 0], sizes = [1, 32], strides = [1, 1]} : vector<1x96xf32> to vector<1x32xf32>
    %422 = vector.extract_strided_slice %420 {offsets = [0, 0], sizes = [1, 32], strides = [1, 1]} : vector<1x96xf32> to vector<1x32xf32>
    %423 = arith.addf %421, %422 : vector<1x32xf32>
    %424 = arith.negf %423 : vector<1x32xf32>
    %425 = math.exp %424 : vector<1x32xf32>
    %cst_122 = arith.constant 1.000000e+00 : f32
    %426 = vector.broadcast %cst_122 : f32 to vector<1x32xf32>
    %427 = arith.addf %426, %425 : vector<1x32xf32>
    %428 = arith.divf %426, %427 : vector<1x32xf32>
    %429 = vector.extract_strided_slice %418 {offsets = [0, 32], sizes = [1, 32], strides = [1, 1]} : vector<1x96xf32> to vector<1x32xf32>
    %430 = vector.extract_strided_slice %420 {offsets = [0, 32], sizes = [1, 32], strides = [1, 1]} : vector<1x96xf32> to vector<1x32xf32>
    %431 = arith.addf %429, %430 : vector<1x32xf32>
    %432 = arith.negf %431 : vector<1x32xf32>
    %433 = math.exp %432 : vector<1x32xf32>
    %cst_123 = arith.constant 1.000000e+00 : f32
    %434 = vector.broadcast %cst_123 : f32 to vector<1x32xf32>
    %435 = arith.addf %434, %433 : vector<1x32xf32>
    %436 = arith.divf %434, %435 : vector<1x32xf32>
    %437 = vector.extract_strided_slice %418 {offsets = [0, 64], sizes = [1, 32], strides = [1, 1]} : vector<1x96xf32> to vector<1x32xf32>
    %438 = vector.extract_strided_slice %420 {offsets = [0, 64], sizes = [1, 32], strides = [1, 1]} : vector<1x96xf32> to vector<1x32xf32>
    %439 = arith.mulf %428, %438 : vector<1x32xf32>
    %440 = arith.addf %437, %439 : vector<1x32xf32>
    %441 = math.tanh %440 : vector<1x32xf32>
    %cst_124 = arith.constant 1.000000e+00 : f32
    %442 = vector.broadcast %cst_124 : f32 to vector<1x32xf32>
    %443 = arith.subf %442, %436 : vector<1x32xf32>
    %444 = arith.mulf %443, %441 : vector<1x32xf32>
    %445 = arith.mulf %436, %417 : vector<1x32xf32>
    %446 = arith.addf %444, %445 : vector<1x32xf32>
    %447 = vector.extract_strided_slice %291 {offsets = [2, 0], sizes = [1, 96], strides = [1, 1]} : vector<4x96xf32> to vector<1x96xf32>
    %cst_125 = arith.constant dense<0.000000e+00> : vector<1x96xf32>
    %448 = tpu.matmul %446, %297, %cst_125 {dimension_numbers = #tpu.dot_dimension_numbers<[1], [0], [0], [1], [0, 0, 1, 1], [], []>} : vector<1x32xf32>, vector<32x96xf32>, vector<1x96xf32> -> vector<1x96xf32>
    %449 = arith.addf %448, %299 : vector<1x96xf32>
    %450 = vector.extract_strided_slice %447 {offsets = [0, 0], sizes = [1, 32], strides = [1, 1]} : vector<1x96xf32> to vector<1x32xf32>
    %451 = vector.extract_strided_slice %449 {offsets = [0, 0], sizes = [1, 32], strides = [1, 1]} : vector<1x96xf32> to vector<1x32xf32>
    %452 = arith.addf %450, %451 : vector<1x32xf32>
    %453 = arith.negf %452 : vector<1x32xf32>
    %454 = math.exp %453 : vector<1x32xf32>
    %cst_126 = arith.constant 1.000000e+00 : f32
    %455 = vector.broadcast %cst_126 : f32 to vector<1x32xf32>
    %456 = arith.addf %455, %454 : vector<1x32xf32>
    %457 = arith.divf %455, %456 : vector<1x32xf32>
    %458 = vector.extract_strided_slice %447 {offsets = [0, 32], sizes = [1, 32], strides = [1, 1]} : vector<1x96xf32> to vector<1x32xf32>
    %459 = vector.extract_strided_slice %449 {offsets = [0, 32], sizes = [1, 32], strides = [1, 1]} : vector<1x96xf32> to vector<1x32xf32>
    %460 = arith.addf %458, %459 : vector<1x32xf32>
    %461 = arith.negf %460 : vector<1x32xf32>
    %462 = math.exp %461 : vector<1x32xf32>
    %cst_127 = arith.constant 1.000000e+00 : f32
    %463 = vector.broadcast %cst_127 : f32 to vector<1x32xf32>
    %464 = arith.addf %463, %462 : vector<1x32xf32>
    %465 = arith.divf %463, %464 : vector<1x32xf32>
    %466 = vector.extract_strided_slice %447 {offsets = [0, 64], sizes = [1, 32], strides = [1, 1]} : vector<1x96xf32> to vector<1x32xf32>
    %467 = vector.extract_strided_slice %449 {offsets = [0, 64], sizes = [1, 32], strides = [1, 1]} : vector<1x96xf32> to vector<1x32xf32>
    %468 = arith.mulf %457, %467 : vector<1x32xf32>
    %469 = arith.addf %466, %468 : vector<1x32xf32>
    %470 = math.tanh %469 : vector<1x32xf32>
    %cst_128 = arith.constant 1.000000e+00 : f32
    %471 = vector.broadcast %cst_128 : f32 to vector<1x32xf32>
    %472 = arith.subf %471, %465 : vector<1x32xf32>
    %473 = arith.mulf %472, %470 : vector<1x32xf32>
    %474 = arith.mulf %465, %446 : vector<1x32xf32>
    %475 = arith.addf %473, %474 : vector<1x32xf32>
    %476 = vector.extract_strided_slice %291 {offsets = [1, 0], sizes = [1, 96], strides = [1, 1]} : vector<4x96xf32> to vector<1x96xf32>
    %cst_129 = arith.constant dense<0.000000e+00> : vector<1x96xf32>
    %477 = tpu.matmul %475, %297, %cst_129 {dimension_numbers = #tpu.dot_dimension_numbers<[1], [0], [0], [1], [0, 0, 1, 1], [], []>} : vector<1x32xf32>, vector<32x96xf32>, vector<1x96xf32> -> vector<1x96xf32>
    %478 = arith.addf %477, %299 : vector<1x96xf32>
    %479 = vector.extract_strided_slice %476 {offsets = [0, 0], sizes = [1, 32], strides = [1, 1]} : vector<1x96xf32> to vector<1x32xf32>
    %480 = vector.extract_strided_slice %478 {offsets = [0, 0], sizes = [1, 32], strides = [1, 1]} : vector<1x96xf32> to vector<1x32xf32>
    %481 = arith.addf %479, %480 : vector<1x32xf32>
    %482 = arith.negf %481 : vector<1x32xf32>
    %483 = math.exp %482 : vector<1x32xf32>
    %cst_130 = arith.constant 1.000000e+00 : f32
    %484 = vector.broadcast %cst_130 : f32 to vector<1x32xf32>
    %485 = arith.addf %484, %483 : vector<1x32xf32>
    %486 = arith.divf %484, %485 : vector<1x32xf32>
    %487 = vector.extract_strided_slice %476 {offsets = [0, 32], sizes = [1, 32], strides = [1, 1]} : vector<1x96xf32> to vector<1x32xf32>
    %488 = vector.extract_strided_slice %478 {offsets = [0, 32], sizes = [1, 32], strides = [1, 1]} : vector<1x96xf32> to vector<1x32xf32>
    %489 = arith.addf %487, %488 : vector<1x32xf32>
    %490 = arith.negf %489 : vector<1x32xf32>
    %491 = math.exp %490 : vector<1x32xf32>
    %cst_131 = arith.constant 1.000000e+00 : f32
    %492 = vector.broadcast %cst_131 : f32 to vector<1x32xf32>
    %493 = arith.addf %492, %491 : vector<1x32xf32>
    %494 = arith.divf %492, %493 : vector<1x32xf32>
    %495 = vector.extract_strided_slice %476 {offsets = [0, 64], sizes = [1, 32], strides = [1, 1]} : vector<1x96xf32> to vector<1x32xf32>
    %496 = vector.extract_strided_slice %478 {offsets = [0, 64], sizes = [1, 32], strides = [1, 1]} : vector<1x96xf32> to vector<1x32xf32>
    %497 = arith.mulf %486, %496 : vector<1x32xf32>
    %498 = arith.addf %495, %497 : vector<1x32xf32>
    %499 = math.tanh %498 : vector<1x32xf32>
    %cst_132 = arith.constant 1.000000e+00 : f32
    %500 = vector.broadcast %cst_132 : f32 to vector<1x32xf32>
    %501 = arith.subf %500, %494 : vector<1x32xf32>
    %502 = arith.mulf %501, %499 : vector<1x32xf32>
    %503 = arith.mulf %494, %475 : vector<1x32xf32>
    %504 = arith.addf %502, %503 : vector<1x32xf32>
    %505 = vector.extract_strided_slice %291 {offsets = [0, 0], sizes = [1, 96], strides = [1, 1]} : vector<4x96xf32> to vector<1x96xf32>
    %cst_133 = arith.constant dense<0.000000e+00> : vector<1x96xf32>
    %506 = tpu.matmul %504, %297, %cst_133 {dimension_numbers = #tpu.dot_dimension_numbers<[1], [0], [0], [1], [0, 0, 1, 1], [], []>} : vector<1x32xf32>, vector<32x96xf32>, vector<1x96xf32> -> vector<1x96xf32>
    %507 = arith.addf %506, %299 : vector<1x96xf32>
    %508 = vector.extract_strided_slice %505 {offsets = [0, 0], sizes = [1, 32], strides = [1, 1]} : vector<1x96xf32> to vector<1x32xf32>
    %509 = vector.extract_strided_slice %507 {offsets = [0, 0], sizes = [1, 32], strides = [1, 1]} : vector<1x96xf32> to vector<1x32xf32>
    %510 = arith.addf %508, %509 : vector<1x32xf32>
    %511 = arith.negf %510 : vector<1x32xf32>
    %512 = math.exp %511 : vector<1x32xf32>
    %cst_134 = arith.constant 1.000000e+00 : f32
    %513 = vector.broadcast %cst_134 : f32 to vector<1x32xf32>
    %514 = arith.addf %513, %512 : vector<1x32xf32>
    %515 = arith.divf %513, %514 : vector<1x32xf32>
    %516 = vector.extract_strided_slice %505 {offsets = [0, 32], sizes = [1, 32], strides = [1, 1]} : vector<1x96xf32> to vector<1x32xf32>
    %517 = vector.extract_strided_slice %507 {offsets = [0, 32], sizes = [1, 32], strides = [1, 1]} : vector<1x96xf32> to vector<1x32xf32>
    %518 = arith.addf %516, %517 : vector<1x32xf32>
    %519 = arith.negf %518 : vector<1x32xf32>
    %520 = math.exp %519 : vector<1x32xf32>
    %cst_135 = arith.constant 1.000000e+00 : f32
    %521 = vector.broadcast %cst_135 : f32 to vector<1x32xf32>
    %522 = arith.addf %521, %520 : vector<1x32xf32>
    %523 = arith.divf %521, %522 : vector<1x32xf32>
    %524 = vector.extract_strided_slice %505 {offsets = [0, 64], sizes = [1, 32], strides = [1, 1]} : vector<1x96xf32> to vector<1x32xf32>
    %525 = vector.extract_strided_slice %507 {offsets = [0, 64], sizes = [1, 32], strides = [1, 1]} : vector<1x96xf32> to vector<1x32xf32>
    %526 = arith.mulf %515, %525 : vector<1x32xf32>
    %527 = arith.addf %524, %526 : vector<1x32xf32>
    %528 = math.tanh %527 : vector<1x32xf32>
    %cst_136 = arith.constant 1.000000e+00 : f32
    %529 = vector.broadcast %cst_136 : f32 to vector<1x32xf32>
    %530 = arith.subf %529, %523 : vector<1x32xf32>
    %531 = arith.mulf %530, %528 : vector<1x32xf32>
    %532 = arith.mulf %523, %504 : vector<1x32xf32>
    %533 = arith.addf %531, %532 : vector<1x32xf32>
    %534 = tpu.concatenate %329, %358, %387, %416 in 0 : vector<1x32xf32>, vector<1x32xf32>, vector<1x32xf32>, vector<1x32xf32> -> vector<4x32xf32>
    %535 = tpu.concatenate %533, %504, %475, %446 in 0 : vector<1x32xf32>, vector<1x32xf32>, vector<1x32xf32>, vector<1x32xf32> -> vector<4x32xf32>
    %c0_137 = arith.constant 0 : index
    %c0_138 = arith.constant 0 : index
    %c0_139 = arith.constant 0 : index
    %536 = vector.load %arg16[%c0_137, %c0_138, %c0_139] : memref<2x64x96xf32, #tpu.memory_space<vmem>>, vector<1x64x96xf32>
    %537 = vector.shape_cast %536 : vector<1x64x96xf32> to vector<64x96xf32>
    %c1_140 = arith.constant 1 : index
    %c0_141 = arith.constant 0 : index
    %c0_142 = arith.constant 0 : index
    %538 = vector.load %arg16[%c1_140, %c0_141, %c0_142] : memref<2x64x96xf32, #tpu.memory_space<vmem>>, vector<1x64x96xf32>
    %539 = vector.shape_cast %538 : vector<1x64x96xf32> to vector<64x96xf32>
    %540 = vector.extract_strided_slice %537 {offsets = [0, 0], sizes = [32, 96], strides = [1, 1]} : vector<64x96xf32> to vector<32x96xf32>
    %cst_143 = arith.constant dense<0.000000e+00> : vector<4x96xf32>
    %541 = tpu.matmul %534, %540, %cst_143 {dimension_numbers = #tpu.dot_dimension_numbers<[1], [0], [0], [1], [0, 0, 1, 1], [], []>} : vector<4x32xf32>, vector<32x96xf32>, vector<4x96xf32> -> vector<4x96xf32>
    %542 = vector.extract_strided_slice %537 {offsets = [32, 0], sizes = [32, 96], strides = [1, 1]} : vector<64x96xf32> to vector<32x96xf32>
    %cst_144 = arith.constant dense<0.000000e+00> : vector<4x96xf32>
    %543 = tpu.matmul %535, %542, %cst_144 {dimension_numbers = #tpu.dot_dimension_numbers<[1], [0], [0], [1], [0, 0, 1, 1], [], []>} : vector<4x32xf32>, vector<32x96xf32>, vector<4x96xf32> -> vector<4x96xf32>
    %544 = arith.addf %541, %543 : vector<4x96xf32>
    %c0_145 = arith.constant 0 : index
    %c0_146 = arith.constant 0 : index
    %c0_147 = arith.constant 0 : index
    %545 = vector.load %arg18[%c0_145, %c0_146, %c0_147] : memref<2x1x96xf32, #tpu.memory_space<vmem>>, vector<1x1x96xf32>
    %546 = vector.shape_cast %545 : vector<1x1x96xf32> to vector<1x96xf32>
    %547 = vector.broadcast %546 : vector<1x96xf32> to vector<4x96xf32>
    %548 = arith.addf %544, %547 : vector<4x96xf32>
    %549 = vector.extract_strided_slice %539 {offsets = [0, 0], sizes = [32, 96], strides = [1, 1]} : vector<64x96xf32> to vector<32x96xf32>
    %cst_148 = arith.constant dense<0.000000e+00> : vector<4x96xf32>
    %550 = tpu.matmul %534, %549, %cst_148 {dimension_numbers = #tpu.dot_dimension_numbers<[1], [0], [0], [1], [0, 0, 1, 1], [], []>} : vector<4x32xf32>, vector<32x96xf32>, vector<4x96xf32> -> vector<4x96xf32>
    %551 = vector.extract_strided_slice %539 {offsets = [32, 0], sizes = [32, 96], strides = [1, 1]} : vector<64x96xf32> to vector<32x96xf32>
    %cst_149 = arith.constant dense<0.000000e+00> : vector<4x96xf32>
    %552 = tpu.matmul %535, %551, %cst_149 {dimension_numbers = #tpu.dot_dimension_numbers<[1], [0], [0], [1], [0, 0, 1, 1], [], []>} : vector<4x32xf32>, vector<32x96xf32>, vector<4x96xf32> -> vector<4x96xf32>
    %553 = arith.addf %550, %552 : vector<4x96xf32>
    %c1_150 = arith.constant 1 : index
    %c0_151 = arith.constant 0 : index
    %c0_152 = arith.constant 0 : index
    %554 = vector.load %arg18[%c1_150, %c0_151, %c0_152] : memref<2x1x96xf32, #tpu.memory_space<vmem>>, vector<1x1x96xf32>
    %555 = vector.shape_cast %554 : vector<1x1x96xf32> to vector<1x96xf32>
    %556 = vector.broadcast %555 : vector<1x96xf32> to vector<4x96xf32>
    %557 = arith.addf %553, %556 : vector<4x96xf32>
    %c0_153 = arith.constant 0 : index
    %c0_154 = arith.constant 0 : index
    %c0_155 = arith.constant 0 : index
    %558 = vector.load %arg17[%c0_153, %c0_154, %c0_155] : memref<2x32x96xf32, #tpu.memory_space<vmem>>, vector<1x32x96xf32>
    %559 = vector.shape_cast %558 : vector<1x32x96xf32> to vector<32x96xf32>
    %c0_156 = arith.constant 0 : index
    %c0_157 = arith.constant 0 : index
    %c0_158 = arith.constant 0 : index
    %560 = vector.load %arg19[%c0_156, %c0_157, %c0_158] : memref<2x1x96xf32, #tpu.memory_space<vmem>>, vector<1x1x96xf32>
    %561 = vector.shape_cast %560 : vector<1x1x96xf32> to vector<1x96xf32>
    %c1_159 = arith.constant 1 : index
    %c0_160 = arith.constant 0 : index
    %c0_161 = arith.constant 0 : index
    %562 = vector.load %arg17[%c1_159, %c0_160, %c0_161] : memref<2x32x96xf32, #tpu.memory_space<vmem>>, vector<1x32x96xf32>
    %563 = vector.shape_cast %562 : vector<1x32x96xf32> to vector<32x96xf32>
    %c1_162 = arith.constant 1 : index
    %c0_163 = arith.constant 0 : index
    %c0_164 = arith.constant 0 : index
    %564 = vector.load %arg19[%c1_162, %c0_163, %c0_164] : memref<2x1x96xf32, #tpu.memory_space<vmem>>, vector<1x1x96xf32>
    %565 = vector.shape_cast %564 : vector<1x1x96xf32> to vector<1x96xf32>
    %cst_165 = arith.constant 0.000000e+00 : f32
    %566 = vector.broadcast %cst_165 : f32 to vector<1x32xf32>
    %567 = vector.extract_strided_slice %548 {offsets = [0, 0], sizes = [1, 96], strides = [1, 1]} : vector<4x96xf32> to vector<1x96xf32>
    %cst_166 = arith.constant dense<0.000000e+00> : vector<1x96xf32>
    %568 = tpu.matmul %566, %559, %cst_166 {dimension_numbers = #tpu.dot_dimension_numbers<[1], [0], [0], [1], [0, 0, 1, 1], [], []>} : vector<1x32xf32>, vector<32x96xf32>, vector<1x96xf32> -> vector<1x96xf32>
    %569 = arith.addf %568, %561 : vector<1x96xf32>
    %570 = vector.extract_strided_slice %567 {offsets = [0, 0], sizes = [1, 32], strides = [1, 1]} : vector<1x96xf32> to vector<1x32xf32>
    %571 = vector.extract_strided_slice %569 {offsets = [0, 0], sizes = [1, 32], strides = [1, 1]} : vector<1x96xf32> to vector<1x32xf32>
    %572 = arith.addf %570, %571 : vector<1x32xf32>
    %573 = arith.negf %572 : vector<1x32xf32>
    %574 = math.exp %573 : vector<1x32xf32>
    %cst_167 = arith.constant 1.000000e+00 : f32
    %575 = vector.broadcast %cst_167 : f32 to vector<1x32xf32>
    %576 = arith.addf %575, %574 : vector<1x32xf32>
    %577 = arith.divf %575, %576 : vector<1x32xf32>
    %578 = vector.extract_strided_slice %567 {offsets = [0, 32], sizes = [1, 32], strides = [1, 1]} : vector<1x96xf32> to vector<1x32xf32>
    %579 = vector.extract_strided_slice %569 {offsets = [0, 32], sizes = [1, 32], strides = [1, 1]} : vector<1x96xf32> to vector<1x32xf32>
    %580 = arith.addf %578, %579 : vector<1x32xf32>
    %581 = arith.negf %580 : vector<1x32xf32>
    %582 = math.exp %581 : vector<1x32xf32>
    %cst_168 = arith.constant 1.000000e+00 : f32
    %583 = vector.broadcast %cst_168 : f32 to vector<1x32xf32>
    %584 = arith.addf %583, %582 : vector<1x32xf32>
    %585 = arith.divf %583, %584 : vector<1x32xf32>
    %586 = vector.extract_strided_slice %567 {offsets = [0, 64], sizes = [1, 32], strides = [1, 1]} : vector<1x96xf32> to vector<1x32xf32>
    %587 = vector.extract_strided_slice %569 {offsets = [0, 64], sizes = [1, 32], strides = [1, 1]} : vector<1x96xf32> to vector<1x32xf32>
    %588 = arith.mulf %577, %587 : vector<1x32xf32>
    %589 = arith.addf %586, %588 : vector<1x32xf32>
    %590 = math.tanh %589 : vector<1x32xf32>
    %cst_169 = arith.constant 1.000000e+00 : f32
    %591 = vector.broadcast %cst_169 : f32 to vector<1x32xf32>
    %592 = arith.subf %591, %585 : vector<1x32xf32>
    %593 = arith.mulf %592, %590 : vector<1x32xf32>
    %594 = arith.mulf %585, %566 : vector<1x32xf32>
    %595 = arith.addf %593, %594 : vector<1x32xf32>
    %596 = vector.extract_strided_slice %548 {offsets = [1, 0], sizes = [1, 96], strides = [1, 1]} : vector<4x96xf32> to vector<1x96xf32>
    %cst_170 = arith.constant dense<0.000000e+00> : vector<1x96xf32>
    %597 = tpu.matmul %595, %559, %cst_170 {dimension_numbers = #tpu.dot_dimension_numbers<[1], [0], [0], [1], [0, 0, 1, 1], [], []>} : vector<1x32xf32>, vector<32x96xf32>, vector<1x96xf32> -> vector<1x96xf32>
    %598 = arith.addf %597, %561 : vector<1x96xf32>
    %599 = vector.extract_strided_slice %596 {offsets = [0, 0], sizes = [1, 32], strides = [1, 1]} : vector<1x96xf32> to vector<1x32xf32>
    %600 = vector.extract_strided_slice %598 {offsets = [0, 0], sizes = [1, 32], strides = [1, 1]} : vector<1x96xf32> to vector<1x32xf32>
    %601 = arith.addf %599, %600 : vector<1x32xf32>
    %602 = arith.negf %601 : vector<1x32xf32>
    %603 = math.exp %602 : vector<1x32xf32>
    %cst_171 = arith.constant 1.000000e+00 : f32
    %604 = vector.broadcast %cst_171 : f32 to vector<1x32xf32>
    %605 = arith.addf %604, %603 : vector<1x32xf32>
    %606 = arith.divf %604, %605 : vector<1x32xf32>
    %607 = vector.extract_strided_slice %596 {offsets = [0, 32], sizes = [1, 32], strides = [1, 1]} : vector<1x96xf32> to vector<1x32xf32>
    %608 = vector.extract_strided_slice %598 {offsets = [0, 32], sizes = [1, 32], strides = [1, 1]} : vector<1x96xf32> to vector<1x32xf32>
    %609 = arith.addf %607, %608 : vector<1x32xf32>
    %610 = arith.negf %609 : vector<1x32xf32>
    %611 = math.exp %610 : vector<1x32xf32>
    %cst_172 = arith.constant 1.000000e+00 : f32
    %612 = vector.broadcast %cst_172 : f32 to vector<1x32xf32>
    %613 = arith.addf %612, %611 : vector<1x32xf32>
    %614 = arith.divf %612, %613 : vector<1x32xf32>
    %615 = vector.extract_strided_slice %596 {offsets = [0, 64], sizes = [1, 32], strides = [1, 1]} : vector<1x96xf32> to vector<1x32xf32>
    %616 = vector.extract_strided_slice %598 {offsets = [0, 64], sizes = [1, 32], strides = [1, 1]} : vector<1x96xf32> to vector<1x32xf32>
    %617 = arith.mulf %606, %616 : vector<1x32xf32>
    %618 = arith.addf %615, %617 : vector<1x32xf32>
    %619 = math.tanh %618 : vector<1x32xf32>
    %cst_173 = arith.constant 1.000000e+00 : f32
    %620 = vector.broadcast %cst_173 : f32 to vector<1x32xf32>
    %621 = arith.subf %620, %614 : vector<1x32xf32>
    %622 = arith.mulf %621, %619 : vector<1x32xf32>
    %623 = arith.mulf %614, %595 : vector<1x32xf32>
    %624 = arith.addf %622, %623 : vector<1x32xf32>
    %625 = vector.extract_strided_slice %548 {offsets = [2, 0], sizes = [1, 96], strides = [1, 1]} : vector<4x96xf32> to vector<1x96xf32>
    %cst_174 = arith.constant dense<0.000000e+00> : vector<1x96xf32>
    %626 = tpu.matmul %624, %559, %cst_174 {dimension_numbers = #tpu.dot_dimension_numbers<[1], [0], [0], [1], [0, 0, 1, 1], [], []>} : vector<1x32xf32>, vector<32x96xf32>, vector<1x96xf32> -> vector<1x96xf32>
    %627 = arith.addf %626, %561 : vector<1x96xf32>
    %628 = vector.extract_strided_slice %625 {offsets = [0, 0], sizes = [1, 32], strides = [1, 1]} : vector<1x96xf32> to vector<1x32xf32>
    %629 = vector.extract_strided_slice %627 {offsets = [0, 0], sizes = [1, 32], strides = [1, 1]} : vector<1x96xf32> to vector<1x32xf32>
    %630 = arith.addf %628, %629 : vector<1x32xf32>
    %631 = arith.negf %630 : vector<1x32xf32>
    %632 = math.exp %631 : vector<1x32xf32>
    %cst_175 = arith.constant 1.000000e+00 : f32
    %633 = vector.broadcast %cst_175 : f32 to vector<1x32xf32>
    %634 = arith.addf %633, %632 : vector<1x32xf32>
    %635 = arith.divf %633, %634 : vector<1x32xf32>
    %636 = vector.extract_strided_slice %625 {offsets = [0, 32], sizes = [1, 32], strides = [1, 1]} : vector<1x96xf32> to vector<1x32xf32>
    %637 = vector.extract_strided_slice %627 {offsets = [0, 32], sizes = [1, 32], strides = [1, 1]} : vector<1x96xf32> to vector<1x32xf32>
    %638 = arith.addf %636, %637 : vector<1x32xf32>
    %639 = arith.negf %638 : vector<1x32xf32>
    %640 = math.exp %639 : vector<1x32xf32>
    %cst_176 = arith.constant 1.000000e+00 : f32
    %641 = vector.broadcast %cst_176 : f32 to vector<1x32xf32>
    %642 = arith.addf %641, %640 : vector<1x32xf32>
    %643 = arith.divf %641, %642 : vector<1x32xf32>
    %644 = vector.extract_strided_slice %625 {offsets = [0, 64], sizes = [1, 32], strides = [1, 1]} : vector<1x96xf32> to vector<1x32xf32>
    %645 = vector.extract_strided_slice %627 {offsets = [0, 64], sizes = [1, 32], strides = [1, 1]} : vector<1x96xf32> to vector<1x32xf32>
    %646 = arith.mulf %635, %645 : vector<1x32xf32>
    %647 = arith.addf %644, %646 : vector<1x32xf32>
    %648 = math.tanh %647 : vector<1x32xf32>
    %cst_177 = arith.constant 1.000000e+00 : f32
    %649 = vector.broadcast %cst_177 : f32 to vector<1x32xf32>
    %650 = arith.subf %649, %643 : vector<1x32xf32>
    %651 = arith.mulf %650, %648 : vector<1x32xf32>
    %652 = arith.mulf %643, %624 : vector<1x32xf32>
    %653 = arith.addf %651, %652 : vector<1x32xf32>
    %654 = vector.extract_strided_slice %548 {offsets = [3, 0], sizes = [1, 96], strides = [1, 1]} : vector<4x96xf32> to vector<1x96xf32>
    %cst_178 = arith.constant dense<0.000000e+00> : vector<1x96xf32>
    %655 = tpu.matmul %653, %559, %cst_178 {dimension_numbers = #tpu.dot_dimension_numbers<[1], [0], [0], [1], [0, 0, 1, 1], [], []>} : vector<1x32xf32>, vector<32x96xf32>, vector<1x96xf32> -> vector<1x96xf32>
    %656 = arith.addf %655, %561 : vector<1x96xf32>
    %657 = vector.extract_strided_slice %654 {offsets = [0, 0], sizes = [1, 32], strides = [1, 1]} : vector<1x96xf32> to vector<1x32xf32>
    %658 = vector.extract_strided_slice %656 {offsets = [0, 0], sizes = [1, 32], strides = [1, 1]} : vector<1x96xf32> to vector<1x32xf32>
    %659 = arith.addf %657, %658 : vector<1x32xf32>
    %660 = arith.negf %659 : vector<1x32xf32>
    %661 = math.exp %660 : vector<1x32xf32>
    %cst_179 = arith.constant 1.000000e+00 : f32
    %662 = vector.broadcast %cst_179 : f32 to vector<1x32xf32>
    %663 = arith.addf %662, %661 : vector<1x32xf32>
    %664 = arith.divf %662, %663 : vector<1x32xf32>
    %665 = vector.extract_strided_slice %654 {offsets = [0, 32], sizes = [1, 32], strides = [1, 1]} : vector<1x96xf32> to vector<1x32xf32>
    %666 = vector.extract_strided_slice %656 {offsets = [0, 32], sizes = [1, 32], strides = [1, 1]} : vector<1x96xf32> to vector<1x32xf32>
    %667 = arith.addf %665, %666 : vector<1x32xf32>
    %668 = arith.negf %667 : vector<1x32xf32>
    %669 = math.exp %668 : vector<1x32xf32>
    %cst_180 = arith.constant 1.000000e+00 : f32
    %670 = vector.broadcast %cst_180 : f32 to vector<1x32xf32>
    %671 = arith.addf %670, %669 : vector<1x32xf32>
    %672 = arith.divf %670, %671 : vector<1x32xf32>
    %673 = vector.extract_strided_slice %654 {offsets = [0, 64], sizes = [1, 32], strides = [1, 1]} : vector<1x96xf32> to vector<1x32xf32>
    %674 = vector.extract_strided_slice %656 {offsets = [0, 64], sizes = [1, 32], strides = [1, 1]} : vector<1x96xf32> to vector<1x32xf32>
    %675 = arith.mulf %664, %674 : vector<1x32xf32>
    %676 = arith.addf %673, %675 : vector<1x32xf32>
    %677 = math.tanh %676 : vector<1x32xf32>
    %cst_181 = arith.constant 1.000000e+00 : f32
    %678 = vector.broadcast %cst_181 : f32 to vector<1x32xf32>
    %679 = arith.subf %678, %672 : vector<1x32xf32>
    %680 = arith.mulf %679, %677 : vector<1x32xf32>
    %681 = arith.mulf %672, %653 : vector<1x32xf32>
    %682 = arith.addf %680, %681 : vector<1x32xf32>
    %cst_182 = arith.constant 0.000000e+00 : f32
    %683 = vector.broadcast %cst_182 : f32 to vector<1x32xf32>
    %684 = vector.extract_strided_slice %557 {offsets = [3, 0], sizes = [1, 96], strides = [1, 1]} : vector<4x96xf32> to vector<1x96xf32>
    %cst_183 = arith.constant dense<0.000000e+00> : vector<1x96xf32>
    %685 = tpu.matmul %683, %563, %cst_183 {dimension_numbers = #tpu.dot_dimension_numbers<[1], [0], [0], [1], [0, 0, 1, 1], [], []>} : vector<1x32xf32>, vector<32x96xf32>, vector<1x96xf32> -> vector<1x96xf32>
    %686 = arith.addf %685, %565 : vector<1x96xf32>
    %687 = vector.extract_strided_slice %684 {offsets = [0, 0], sizes = [1, 32], strides = [1, 1]} : vector<1x96xf32> to vector<1x32xf32>
    %688 = vector.extract_strided_slice %686 {offsets = [0, 0], sizes = [1, 32], strides = [1, 1]} : vector<1x96xf32> to vector<1x32xf32>
    %689 = arith.addf %687, %688 : vector<1x32xf32>
    %690 = arith.negf %689 : vector<1x32xf32>
    %691 = math.exp %690 : vector<1x32xf32>
    %cst_184 = arith.constant 1.000000e+00 : f32
    %692 = vector.broadcast %cst_184 : f32 to vector<1x32xf32>
    %693 = arith.addf %692, %691 : vector<1x32xf32>
    %694 = arith.divf %692, %693 : vector<1x32xf32>
    %695 = vector.extract_strided_slice %684 {offsets = [0, 32], sizes = [1, 32], strides = [1, 1]} : vector<1x96xf32> to vector<1x32xf32>
    %696 = vector.extract_strided_slice %686 {offsets = [0, 32], sizes = [1, 32], strides = [1, 1]} : vector<1x96xf32> to vector<1x32xf32>
    %697 = arith.addf %695, %696 : vector<1x32xf32>
    %698 = arith.negf %697 : vector<1x32xf32>
    %699 = math.exp %698 : vector<1x32xf32>
    %cst_185 = arith.constant 1.000000e+00 : f32
    %700 = vector.broadcast %cst_185 : f32 to vector<1x32xf32>
    %701 = arith.addf %700, %699 : vector<1x32xf32>
    %702 = arith.divf %700, %701 : vector<1x32xf32>
    %703 = vector.extract_strided_slice %684 {offsets = [0, 64], sizes = [1, 32], strides = [1, 1]} : vector<1x96xf32> to vector<1x32xf32>
    %704 = vector.extract_strided_slice %686 {offsets = [0, 64], sizes = [1, 32], strides = [1, 1]} : vector<1x96xf32> to vector<1x32xf32>
    %705 = arith.mulf %694, %704 : vector<1x32xf32>
    %706 = arith.addf %703, %705 : vector<1x32xf32>
    %707 = math.tanh %706 : vector<1x32xf32>
    %cst_186 = arith.constant 1.000000e+00 : f32
    %708 = vector.broadcast %cst_186 : f32 to vector<1x32xf32>
    %709 = arith.subf %708, %702 : vector<1x32xf32>
    %710 = arith.mulf %709, %707 : vector<1x32xf32>
    %711 = arith.mulf %702, %683 : vector<1x32xf32>
    %712 = arith.addf %710, %711 : vector<1x32xf32>
    %713 = vector.extract_strided_slice %557 {offsets = [2, 0], sizes = [1, 96], strides = [1, 1]} : vector<4x96xf32> to vector<1x96xf32>
    %cst_187 = arith.constant dense<0.000000e+00> : vector<1x96xf32>
    %714 = tpu.matmul %712, %563, %cst_187 {dimension_numbers = #tpu.dot_dimension_numbers<[1], [0], [0], [1], [0, 0, 1, 1], [], []>} : vector<1x32xf32>, vector<32x96xf32>, vector<1x96xf32> -> vector<1x96xf32>
    %715 = arith.addf %714, %565 : vector<1x96xf32>
    %716 = vector.extract_strided_slice %713 {offsets = [0, 0], sizes = [1, 32], strides = [1, 1]} : vector<1x96xf32> to vector<1x32xf32>
    %717 = vector.extract_strided_slice %715 {offsets = [0, 0], sizes = [1, 32], strides = [1, 1]} : vector<1x96xf32> to vector<1x32xf32>
    %718 = arith.addf %716, %717 : vector<1x32xf32>
    %719 = arith.negf %718 : vector<1x32xf32>
    %720 = math.exp %719 : vector<1x32xf32>
    %cst_188 = arith.constant 1.000000e+00 : f32
    %721 = vector.broadcast %cst_188 : f32 to vector<1x32xf32>
    %722 = arith.addf %721, %720 : vector<1x32xf32>
    %723 = arith.divf %721, %722 : vector<1x32xf32>
    %724 = vector.extract_strided_slice %713 {offsets = [0, 32], sizes = [1, 32], strides = [1, 1]} : vector<1x96xf32> to vector<1x32xf32>
    %725 = vector.extract_strided_slice %715 {offsets = [0, 32], sizes = [1, 32], strides = [1, 1]} : vector<1x96xf32> to vector<1x32xf32>
    %726 = arith.addf %724, %725 : vector<1x32xf32>
    %727 = arith.negf %726 : vector<1x32xf32>
    %728 = math.exp %727 : vector<1x32xf32>
    %cst_189 = arith.constant 1.000000e+00 : f32
    %729 = vector.broadcast %cst_189 : f32 to vector<1x32xf32>
    %730 = arith.addf %729, %728 : vector<1x32xf32>
    %731 = arith.divf %729, %730 : vector<1x32xf32>
    %732 = vector.extract_strided_slice %713 {offsets = [0, 64], sizes = [1, 32], strides = [1, 1]} : vector<1x96xf32> to vector<1x32xf32>
    %733 = vector.extract_strided_slice %715 {offsets = [0, 64], sizes = [1, 32], strides = [1, 1]} : vector<1x96xf32> to vector<1x32xf32>
    %734 = arith.mulf %723, %733 : vector<1x32xf32>
    %735 = arith.addf %732, %734 : vector<1x32xf32>
    %736 = math.tanh %735 : vector<1x32xf32>
    %cst_190 = arith.constant 1.000000e+00 : f32
    %737 = vector.broadcast %cst_190 : f32 to vector<1x32xf32>
    %738 = arith.subf %737, %731 : vector<1x32xf32>
    %739 = arith.mulf %738, %736 : vector<1x32xf32>
    %740 = arith.mulf %731, %712 : vector<1x32xf32>
    %741 = arith.addf %739, %740 : vector<1x32xf32>
    %742 = vector.extract_strided_slice %557 {offsets = [1, 0], sizes = [1, 96], strides = [1, 1]} : vector<4x96xf32> to vector<1x96xf32>
    %cst_191 = arith.constant dense<0.000000e+00> : vector<1x96xf32>
    %743 = tpu.matmul %741, %563, %cst_191 {dimension_numbers = #tpu.dot_dimension_numbers<[1], [0], [0], [1], [0, 0, 1, 1], [], []>} : vector<1x32xf32>, vector<32x96xf32>, vector<1x96xf32> -> vector<1x96xf32>
    %744 = arith.addf %743, %565 : vector<1x96xf32>
    %745 = vector.extract_strided_slice %742 {offsets = [0, 0], sizes = [1, 32], strides = [1, 1]} : vector<1x96xf32> to vector<1x32xf32>
    %746 = vector.extract_strided_slice %744 {offsets = [0, 0], sizes = [1, 32], strides = [1, 1]} : vector<1x96xf32> to vector<1x32xf32>
    %747 = arith.addf %745, %746 : vector<1x32xf32>
    %748 = arith.negf %747 : vector<1x32xf32>
    %749 = math.exp %748 : vector<1x32xf32>
    %cst_192 = arith.constant 1.000000e+00 : f32
    %750 = vector.broadcast %cst_192 : f32 to vector<1x32xf32>
    %751 = arith.addf %750, %749 : vector<1x32xf32>
    %752 = arith.divf %750, %751 : vector<1x32xf32>
    %753 = vector.extract_strided_slice %742 {offsets = [0, 32], sizes = [1, 32], strides = [1, 1]} : vector<1x96xf32> to vector<1x32xf32>
    %754 = vector.extract_strided_slice %744 {offsets = [0, 32], sizes = [1, 32], strides = [1, 1]} : vector<1x96xf32> to vector<1x32xf32>
    %755 = arith.addf %753, %754 : vector<1x32xf32>
    %756 = arith.negf %755 : vector<1x32xf32>
    %757 = math.exp %756 : vector<1x32xf32>
    %cst_193 = arith.constant 1.000000e+00 : f32
    %758 = vector.broadcast %cst_193 : f32 to vector<1x32xf32>
    %759 = arith.addf %758, %757 : vector<1x32xf32>
    %760 = arith.divf %758, %759 : vector<1x32xf32>
    %761 = vector.extract_strided_slice %742 {offsets = [0, 64], sizes = [1, 32], strides = [1, 1]} : vector<1x96xf32> to vector<1x32xf32>
    %762 = vector.extract_strided_slice %744 {offsets = [0, 64], sizes = [1, 32], strides = [1, 1]} : vector<1x96xf32> to vector<1x32xf32>
    %763 = arith.mulf %752, %762 : vector<1x32xf32>
    %764 = arith.addf %761, %763 : vector<1x32xf32>
    %765 = math.tanh %764 : vector<1x32xf32>
    %cst_194 = arith.constant 1.000000e+00 : f32
    %766 = vector.broadcast %cst_194 : f32 to vector<1x32xf32>
    %767 = arith.subf %766, %760 : vector<1x32xf32>
    %768 = arith.mulf %767, %765 : vector<1x32xf32>
    %769 = arith.mulf %760, %741 : vector<1x32xf32>
    %770 = arith.addf %768, %769 : vector<1x32xf32>
    %771 = vector.extract_strided_slice %557 {offsets = [0, 0], sizes = [1, 96], strides = [1, 1]} : vector<4x96xf32> to vector<1x96xf32>
    %cst_195 = arith.constant dense<0.000000e+00> : vector<1x96xf32>
    %772 = tpu.matmul %770, %563, %cst_195 {dimension_numbers = #tpu.dot_dimension_numbers<[1], [0], [0], [1], [0, 0, 1, 1], [], []>} : vector<1x32xf32>, vector<32x96xf32>, vector<1x96xf32> -> vector<1x96xf32>
    %773 = arith.addf %772, %565 : vector<1x96xf32>
    %774 = vector.extract_strided_slice %771 {offsets = [0, 0], sizes = [1, 32], strides = [1, 1]} : vector<1x96xf32> to vector<1x32xf32>
    %775 = vector.extract_strided_slice %773 {offsets = [0, 0], sizes = [1, 32], strides = [1, 1]} : vector<1x96xf32> to vector<1x32xf32>
    %776 = arith.addf %774, %775 : vector<1x32xf32>
    %777 = arith.negf %776 : vector<1x32xf32>
    %778 = math.exp %777 : vector<1x32xf32>
    %cst_196 = arith.constant 1.000000e+00 : f32
    %779 = vector.broadcast %cst_196 : f32 to vector<1x32xf32>
    %780 = arith.addf %779, %778 : vector<1x32xf32>
    %781 = arith.divf %779, %780 : vector<1x32xf32>
    %782 = vector.extract_strided_slice %771 {offsets = [0, 32], sizes = [1, 32], strides = [1, 1]} : vector<1x96xf32> to vector<1x32xf32>
    %783 = vector.extract_strided_slice %773 {offsets = [0, 32], sizes = [1, 32], strides = [1, 1]} : vector<1x96xf32> to vector<1x32xf32>
    %784 = arith.addf %782, %783 : vector<1x32xf32>
    %785 = arith.negf %784 : vector<1x32xf32>
    %786 = math.exp %785 : vector<1x32xf32>
    %cst_197 = arith.constant 1.000000e+00 : f32
    %787 = vector.broadcast %cst_197 : f32 to vector<1x32xf32>
    %788 = arith.addf %787, %786 : vector<1x32xf32>
    %789 = arith.divf %787, %788 : vector<1x32xf32>
    %790 = vector.extract_strided_slice %771 {offsets = [0, 64], sizes = [1, 32], strides = [1, 1]} : vector<1x96xf32> to vector<1x32xf32>
    %791 = vector.extract_strided_slice %773 {offsets = [0, 64], sizes = [1, 32], strides = [1, 1]} : vector<1x96xf32> to vector<1x32xf32>
    %792 = arith.mulf %781, %791 : vector<1x32xf32>
    %793 = arith.addf %790, %792 : vector<1x32xf32>
    %794 = math.tanh %793 : vector<1x32xf32>
    %cst_198 = arith.constant 1.000000e+00 : f32
    %795 = vector.broadcast %cst_198 : f32 to vector<1x32xf32>
    %796 = arith.subf %795, %789 : vector<1x32xf32>
    %797 = arith.mulf %796, %794 : vector<1x32xf32>
    %798 = arith.mulf %789, %770 : vector<1x32xf32>
    %799 = arith.addf %797, %798 : vector<1x32xf32>
    %800 = tpu.concatenate %595, %624, %653, %682 in 0 : vector<1x32xf32>, vector<1x32xf32>, vector<1x32xf32>, vector<1x32xf32> -> vector<4x32xf32>
    %801 = tpu.concatenate %799, %770, %741, %712 in 0 : vector<1x32xf32>, vector<1x32xf32>, vector<1x32xf32>, vector<1x32xf32> -> vector<4x32xf32>
    %c0_199 = arith.constant 0 : index
    %c0_200 = arith.constant 0 : index
    %802 = vector.load %arg20[%c0_199, %c0_200] : memref<64x5xf32, #tpu.memory_space<vmem>>, vector<64x5xf32>
    %803 = vector.extract_strided_slice %802 {offsets = [0, 0], sizes = [32, 5], strides = [1, 1]} : vector<64x5xf32> to vector<32x5xf32>
    %cst_201 = arith.constant dense<0.000000e+00> : vector<4x5xf32>
    %804 = tpu.matmul %800, %803, %cst_201 {dimension_numbers = #tpu.dot_dimension_numbers<[1], [0], [0], [1], [0, 0, 1, 1], [], []>} : vector<4x32xf32>, vector<32x5xf32>, vector<4x5xf32> -> vector<4x5xf32>
    %805 = vector.extract_strided_slice %802 {offsets = [32, 0], sizes = [32, 5], strides = [1, 1]} : vector<64x5xf32> to vector<32x5xf32>
    %cst_202 = arith.constant dense<0.000000e+00> : vector<4x5xf32>
    %806 = tpu.matmul %801, %805, %cst_202 {dimension_numbers = #tpu.dot_dimension_numbers<[1], [0], [0], [1], [0, 0, 1, 1], [], []>} : vector<4x32xf32>, vector<32x5xf32>, vector<4x5xf32> -> vector<4x5xf32>
    %807 = arith.addf %804, %806 : vector<4x5xf32>
    %c0_203 = arith.constant 0 : index
    %c0_204 = arith.constant 0 : index
    %808 = vector.load %arg21[%c0_203, %c0_204] : memref<1x5xf32, #tpu.memory_space<vmem>>, vector<1x5xf32>
    %809 = vector.broadcast %808 : vector<1x5xf32> to vector<4x5xf32>
    %810 = arith.addf %807, %809 : vector<4x5xf32>
    %c0_205 = arith.constant 0 : index
    %c0_206 = arith.constant 0 : index
    %811 = vector.load %arg22[%c0_205, %c0_206] : memref<4x5xf32, #tpu.memory_space<vmem>>, vector<4x5xf32>
    tpu.vector_store %arg22[%c0_205, %c0_206], %810 {strides = array<i32>} : memref<4x5xf32, #tpu.memory_space<vmem>>, vector<4x5xf32>,
    return
  }
  func.func @transform_0(%arg0: i32) -> (i32, i32, i32) {
    %c0_i32 = arith.constant 0 : i32
    %c0_i32_0 = arith.constant 0 : i32
    %c0_i32_1 = arith.constant 0 : i32
    %c0_i32_2 = arith.constant 0 : i32
    return %c0_i32, %c0_i32_0, %c0_i32_1 : i32, i32, i32
  }
  func.func @transform_1(%arg0: i32) -> (i32, i32, i32) {
    %c0_i32 = arith.constant 0 : i32
    %c0_i32_0 = arith.constant 0 : i32
    %c0_i32_1 = arith.constant 0 : i32
    %c0_i32_2 = arith.constant 0 : i32
    return %c0_i32, %c0_i32_0, %c0_i32_1 : i32, i32, i32
  }
  func.func @transform_2(%arg0: i32) -> (i32, i32, i32) {
    %c0_i32 = arith.constant 0 : i32
    %c0_i32_0 = arith.constant 0 : i32
    %c0_i32_1 = arith.constant 0 : i32
    %c0_i32_2 = arith.constant 0 : i32
    return %c0_i32, %c0_i32_0, %c0_i32_1 : i32, i32, i32
  }
  func.func @transform_3(%arg0: i32) -> (i32, i32, i32) {
    %c0_i32 = arith.constant 0 : i32
    %c0_i32_0 = arith.constant 0 : i32
    %c0_i32_1 = arith.constant 0 : i32
    %c0_i32_2 = arith.constant 0 : i32
    return %c0_i32, %c0_i32_0, %c0_i32_1 : i32, i32, i32
  }
  func.func @transform_4(%arg0: i32) -> (i32, i32, i32) {
    %c0_i32 = arith.constant 0 : i32
    %c0_i32_0 = arith.constant 0 : i32
    %c0_i32_1 = arith.constant 0 : i32
    %c0_i32_2 = arith.constant 0 : i32
    return %c0_i32, %c0_i32_0, %c0_i32_1 : i32, i32, i32
  }
  func.func @transform_5(%arg0: i32) -> (i32, i32) {
    %c0_i32 = arith.constant 0 : i32
    %c0_i32_0 = arith.constant 0 : i32
    %c0_i32_1 = arith.constant 0 : i32
    return %c0_i32, %c0_i32_0 : i32, i32
  }
  func.func @transform_6(%arg0: i32) -> (i32, i32) {
    %c0_i32 = arith.constant 0 : i32
    %c0_i32_0 = arith.constant 0 : i32
    %c0_i32_1 = arith.constant 0 : i32
    return %c0_i32, %c0_i32_0 : i32, i32
  }
  func.func @transform_7(%arg0: i32) -> (i32, i32) {
    %c0_i32 = arith.constant 0 : i32
    %c0_i32_0 = arith.constant 0 : i32
    %c0_i32_1 = arith.constant 0 : i32
    return %c0_i32, %c0_i32_0 : i32, i32
  }
  func.func @transform_8(%arg0: i32) -> (i32, i32) {
    %c0_i32 = arith.constant 0 : i32
    %c0_i32_0 = arith.constant 0 : i32
    %c0_i32_1 = arith.constant 0 : i32
    return %c0_i32, %c0_i32_0 : i32, i32
  }
  func.func @transform_9(%arg0: i32) -> (i32, i32) {
    %c0_i32 = arith.constant 0 : i32
    %c0_i32_0 = arith.constant 0 : i32
    %c0_i32_1 = arith.constant 0 : i32
    return %c0_i32, %c0_i32_0 : i32, i32
  }
  func.func @transform_10(%arg0: i32) -> (i32, i32) {
    %c0_i32 = arith.constant 0 : i32
    %c0_i32_0 = arith.constant 0 : i32
    %c0_i32_1 = arith.constant 0 : i32
    return %c0_i32, %c0_i32_0 : i32, i32
  }
  func.func @transform_11(%arg0: i32) -> (i32, i32, i32) {
    %c0_i32 = arith.constant 0 : i32
    %c0_i32_0 = arith.constant 0 : i32
    %c0_i32_1 = arith.constant 0 : i32
    %c0_i32_2 = arith.constant 0 : i32
    return %c0_i32, %c0_i32_0, %c0_i32_1 : i32, i32, i32
  }
  func.func @transform_12(%arg0: i32) -> (i32, i32, i32) {
    %c0_i32 = arith.constant 0 : i32
    %c0_i32_0 = arith.constant 0 : i32
    %c0_i32_1 = arith.constant 0 : i32
    %c0_i32_2 = arith.constant 0 : i32
    return %c0_i32, %c0_i32_0, %c0_i32_1 : i32, i32, i32
  }
  func.func @transform_13(%arg0: i32) -> (i32, i32, i32) {
    %c0_i32 = arith.constant 0 : i32
    %c0_i32_0 = arith.constant 0 : i32
    %c0_i32_1 = arith.constant 0 : i32
    %c0_i32_2 = arith.constant 0 : i32
    return %c0_i32, %c0_i32_0, %c0_i32_1 : i32, i32, i32
  }
  func.func @transform_14(%arg0: i32) -> (i32, i32, i32) {
    %c0_i32 = arith.constant 0 : i32
    %c0_i32_0 = arith.constant 0 : i32
    %c0_i32_1 = arith.constant 0 : i32
    %c0_i32_2 = arith.constant 0 : i32
    return %c0_i32, %c0_i32_0, %c0_i32_1 : i32, i32, i32
  }
  func.func @transform_15(%arg0: i32) -> (i32, i32, i32) {
    %c0_i32 = arith.constant 0 : i32
    %c0_i32_0 = arith.constant 0 : i32
    %c0_i32_1 = arith.constant 0 : i32
    %c0_i32_2 = arith.constant 0 : i32
    return %c0_i32, %c0_i32_0, %c0_i32_1 : i32, i32, i32
  }
  func.func @transform_16(%arg0: i32) -> (i32, i32, i32) {
    %c0_i32 = arith.constant 0 : i32
    %c0_i32_0 = arith.constant 0 : i32
    %c0_i32_1 = arith.constant 0 : i32
    %c0_i32_2 = arith.constant 0 : i32
    return %c0_i32, %c0_i32_0, %c0_i32_1 : i32, i32, i32
  }
  func.func @transform_17(%arg0: i32) -> (i32, i32, i32) {
    %c0_i32 = arith.constant 0 : i32
    %c0_i32_0 = arith.constant 0 : i32
    %c0_i32_1 = arith.constant 0 : i32
    %c0_i32_2 = arith.constant 0 : i32
    return %c0_i32, %c0_i32_0, %c0_i32_1 : i32, i32, i32
  }
  func.func @transform_18(%arg0: i32) -> (i32, i32, i32) {
    %c0_i32 = arith.constant 0 : i32
    %c0_i32_0 = arith.constant 0 : i32
    %c0_i32_1 = arith.constant 0 : i32
    %c0_i32_2 = arith.constant 0 : i32
    return %c0_i32, %c0_i32_0, %c0_i32_1 : i32, i32, i32
  }
  func.func @transform_19(%arg0: i32) -> (i32, i32) {
    %c0_i32 = arith.constant 0 : i32
    %c0_i32_0 = arith.constant 0 : i32
    %c0_i32_1 = arith.constant 0 : i32
    return %c0_i32, %c0_i32_0 : i32, i32
  }
  func.func @transform_20(%arg0: i32) -> (i32, i32) {
    %c0_i32 = arith.constant 0 : i32
    %c0_i32_0 = arith.constant 0 : i32
    %c0_i32_1 = arith.constant 0 : i32
    return %c0_i32, %c0_i32_0 : i32, i32
  }
  func.func @transform_21(%arg0: i32) -> (i32, i32) {
    %c0_i32 = arith.constant 0 : i32
    %c0_i32_0 = arith.constant 0 : i32
    %c0_i32_1 = arith.constant 0 : i32
    return %c0_i32, %c0_i32_0 : i32, i32
  }
}

</mosaic_0001>

<llo_original>
// kernel: tpu_custom_call.1
$region0: #{tpu_custom_call.1}
  #allocation0 [shape = 'u32[]', space=smem, size = 0x4, offset = 0x4, fixed_abs, tag = 'smem constant byte address 0x4 - core index']
  #allocation1 [shape = 'u32[144,128]{1,0:T(1,128)}', space=vmem, size = 0x12000, scoped, tag = 'internal scratch']
  %s0 = inlined_call_operand.hbm [shape: f32[6,4,8], index: 0, kind: input, shape index: {}]
  %s1 = inlined_call_operand.hbm [shape: f32[2,8,48], index: 1, kind: input, shape index: {}]
  %s2 = inlined_call_operand.hbm [shape: f32[2,16,48], index: 2, kind: input, shape index: {}]
  %s3 = inlined_call_operand.vmem [shape: f32[2,1,48], index: 3, kind: input, shape index: {}]
  %s4 = inlined_call_operand.hbm [shape: f32[2,1,48], index: 4, kind: input, shape index: {}]
  %s5 = inlined_call_operand.hbm [shape: f32[4,4], index: 5, kind: input, shape index: {}]
  %s6 = inlined_call_operand.hbm [shape: f32[4,4], index: 6, kind: input, shape index: {}]
  %s7 = inlined_call_operand.vmem [shape: f32[4,1], index: 7, kind: input, shape index: {}]
  %s8 = inlined_call_operand.hbm [shape: f32[4,4], index: 8, kind: input, shape index: {}]
  %s9 = inlined_call_operand.hbm [shape: f32[4,4], index: 9, kind: input, shape index: {}]
  %s10 = inlined_call_operand.vmem [shape: f32[4,1], index: 10, kind: input, shape index: {}]
  %s11 = inlined_call_operand.vmem [shape: f32[2,30,96], index: 11, kind: input, shape index: {}]
  %s12 = inlined_call_operand.vmem [shape: f32[2,32,96], index: 12, kind: input, shape index: {}]
  %s13 = inlined_call_operand.hbm [shape: f32[2,1,96], index: 13, kind: input, shape index: {}]
  %s14 = inlined_call_operand.hbm [shape: f32[2,1,96], index: 14, kind: input, shape index: {}]
  %s15 = inlined_call_operand.vmem [shape: f32[2,64,96], index: 15, kind: input, shape index: {}]
  %s16 = inlined_call_operand.vmem [shape: f32[2,32,96], index: 16, kind: input, shape index: {}]
  %s17 = inlined_call_operand.vmem [shape: f32[2,1,96], index: 17, kind: input, shape index: {}]
  %s18 = inlined_call_operand.vmem [shape: f32[2,1,96], index: 18, kind: input, shape index: {}]
  %s19 = inlined_call_operand.vmem [shape: f32[64,5], index: 19, kind: input, shape index: {}]
  %s20 = inlined_call_operand.vmem [shape: f32[1,5], index: 20, kind: input, shape index: {}]
  %s21 = inlined_call_operand.hbm [shape: f32[4,5], index: 21, kind: output, shape index: {}]
  %s22 = sld [smem:[#allocation0]]
  $region134: #{tpu_custom_call.1} parent=0
    _
  %s24 = ssub.s32 1, %s22
  %s25 = scalar_select 0, %s24, %s22
  $region1: #{tpu_custom_call.1} parent=0
    #allocation2 [shape = 'u8[12288]{0}', space=vmem, size = 0x3000, scoped, tag = 'input window, operand 0, single buffered']
    #allocation3 [shape = 's32[1]{0}', space=sflag, size = 0x4, scoped, tag = 'scoped memory for tpu_custom_call.1']
    #allocation4 [shape = 's32[1]{0}', space=sflag, size = 0x4, scoped, tag = 'scoped memory for tpu_custom_call.1']
    #allocation5 [shape = 'u8[8192]{0}', space=vmem, size = 0x2000, scoped, tag = 'input window, operand 1, single buffered']
    #allocation6 [shape = 's32[1]{0}', space=sflag, size = 0x4, scoped, tag = 'scoped memory for tpu_custom_call.1']
    #allocation7 [shape = 'u8[16384]{0}', space=vmem, size = 0x4000, scoped, tag = 'input window, operand 2, single buffered']
    #allocation8 [shape = 'u8[1024]{0}', space=vmem, size = 0x400, scoped, tag = 'input window, operand 4, single buffered']
    #allocation9 [shape = 's32[1]{0}', space=sflag, size = 0x4, scoped, tag = 'scoped memory for tpu_custom_call.1']
    #allocation10 [shape = 'u8[2048]{0}', space=vmem, size = 0x800, scoped, tag = 'input window, operand 5, single buffered']
    #allocation11 [shape = 'u8[2048]{0}', space=vmem, size = 0x800, scoped, tag = 'input window, operand 6, single buffered']
    #allocation12 [shape = 's32[1]{0}', space=sflag, size = 0x4, scoped, tag = 'scoped memory for tpu_custom_call.1']
    #allocation13 [shape = 'u8[2048]{0}', space=vmem, size = 0x800, scoped, tag = 'input window, operand 8, single buffered']
    #allocation14 [shape = 'u8[2048]{0}', space=vmem, size = 0x800, scoped, tag = 'input window, operand 9, single buffered']
    #allocation15 [shape = 's32[1]{0}', space=sflag, size = 0x4, scoped, tag = 'scoped memory for tpu_custom_call.1']
    #allocation16 [shape = 'u8[1024]{0}', space=vmem, size = 0x400, scoped, tag = 'input window, operand 13, single buffered']
    #allocation17 [shape = 'u8[1024]{0}', space=vmem, size = 0x400, scoped, tag = 'input window, operand 14, single buffered']
    #allocation18 [shape = 's32[1]{0}', space=sflag, size = 0x4, scoped, tag = 'scoped memory for tpu_custom_call.1']
    #allocation19 [shape = 'u8[2048]{0}', space=vmem, size = 0x800, scoped, tag = 'output window, operand 0, single buffered']
    %26 = vsyncpa [#allocation3], 0
    %27 = vsyncpa [#allocation6], 0
    %28 = vsyncpa [#allocation9], 0
    %29 = vsyncpa [#allocation12], 0
    %30 = vsyncpa [#allocation15], 0
    %31 = vsyncpa [#allocation18], 0
    %32 = vsyncpa [#allocation4], 0
    // Predicated region
    $region2: #{tpu_custom_call.1} parent=1 // pred_check
      _
    $region3: #{tpu_custom_call.1} parent=1 // pred_check_branch
      %34 = sbr.rel (0) target = $region5
    $region4: #{tpu_custom_call.1} parent=1 // pred_region
      %s36 = ssub.s32 384, 384
      %37 = vsyncadd [#allocation3], %s36
      %s38 = sshll.u32 [#allocation2], 4
      %s39 = int_to_ptr.vmem [resolvable:$true] %s38
      %44 = dma.hbm_to_vmem [thread:$0]  %s0, 384, %s39, [#allocation3], 64, 64, 4
    $region5: #{tpu_custom_call.1} parent=1 // pred_fallthru
      _
    // Predicated region
    $region6: #{tpu_custom_call.1} parent=1 // pred_check
      _
    $region7: #{tpu_custom_call.1} parent=1 // pred_check_branch
      %46 = sbr.rel (0) target = $region9
    $region8: #{tpu_custom_call.1} parent=1 // pred_region
      %s48 = ssub.s32 256, 256
      %49 = vsyncadd [#allocation6], %s48
      %s50 = sshll.u32 [#allocation5], 4
      %s51 = int_to_ptr.vmem [resolvable:$true] %s50
      %56 = dma.hbm_to_vmem [thread:$0]  %s1, 256, %s51, [#allocation6], 128, 128, 8
    $region9: #{tpu_custom_call.1} parent=1 // pred_fallthru
      _
    // Predicated region
    $region10: #{tpu_custom_call.1} parent=1 // pred_check
      _
    $region11: #{tpu_custom_call.1} parent=1 // pred_check_branch
      %58 = sbr.rel (0) target = $region13
    $region12: #{tpu_custom_call.1} parent=1 // pred_region
      %s60 = ssub.s32 512, 512
      %61 = vsyncadd [#allocation6], %s60
      %s62 = sshll.u32 [#allocation7], 4
      %s63 = int_to_ptr.vmem [resolvable:$true] %s62
      %68 = dma.hbm_to_vmem [thread:$0]  %s2, 512, %s63, [#allocation6], 128, 128, 8
    $region13: #{tpu_custom_call.1} parent=1 // pred_fallthru
      _
    // Predicated region
    $region14: #{tpu_custom_call.1} parent=1 // pred_check
      _
    $region15: #{tpu_custom_call.1} parent=1 // pred_check_branch
      %70 = sbr.rel (0) target = $region17
    $region16: #{tpu_custom_call.1} parent=1 // pred_region
      _
    $region17: #{tpu_custom_call.1} parent=1 // pred_fallthru
      _
    // Predicated region
    $region18: #{tpu_custom_call.1} parent=1 // pred_check
      _
    $region19: #{tpu_custom_call.1} parent=1 // pred_check_branch
      %72 = sbr.rel (0) target = $region21
    $region20: #{tpu_custom_call.1} parent=1 // pred_region
      %s74 = ssub.s32 32, 32
      %75 = vsyncadd [#allocation9], %s74
      %s76 = sshll.u32 [#allocation8], 4
      %s77 = int_to_ptr.vmem [resolvable:$true] %s76
      %82 = dma.hbm_to_vmem [thread:$0]  %s4, 32, %s77, [#allocation9], 16, 16, 1
    $region21: #{tpu_custom_call.1} parent=1 // pred_fallthru
      _
    // Predicated region
    $region22: #{tpu_custom_call.1} parent=1 // pred_check
      _
    $region23: #{tpu_custom_call.1} parent=1 // pred_check_branch
      %84 = sbr.rel (0) target = $region25
    $region24: #{tpu_custom_call.1} parent=1 // pred_region
      %s86 = ssub.s32 64, 64
      %87 = vsyncadd [#allocation9], %s86
      %s89 = sshll.u32 [#allocation10], 4
      %s90 = int_to_ptr.vmem [resolvable:$true] %s89
      %92 = dma.hbm_to_vmem [thread:$0]  %s5, 64, %s90, [#allocation9]
    $region25: #{tpu_custom_call.1} parent=1 // pred_fallthru
      _
    // Predicated region
    $region26: #{tpu_custom_call.1} parent=1 // pred_check
      _
    $region27: #{tpu_custom_call.1} parent=1 // pred_check_branch
      %94 = sbr.rel (0) target = $region29
    $region28: #{tpu_custom_call.1} parent=1 // pred_region
      %s96 = ssub.s32 64, 64
      %97 = vsyncadd [#allocation12], %s96
      %s99 = sshll.u32 [#allocation11], 4
      %s100 = int_to_ptr.vmem [resolvable:$true] %s99
      %102 = dma.hbm_to_vmem [thread:$0]  %s6, 64, %s100, [#allocation12]
    $region29: #{tpu_custom_call.1} parent=1 // pred_fallthru
      _
    // Predicated region
    $region30: #{tpu_custom_call.1} parent=1 // pred_check
      _
    $region31: #{tpu_custom_call.1} parent=1 // pred_check_branch
      %104 = sbr.rel (0) target = $region33
    $region32: #{tpu_custom_call.1} parent=1 // pred_region
      _
    $region33: #{tpu_custom_call.1} parent=1 // pred_fallthru
      _
    // Predicated region
    $region34: #{tpu_custom_call.1} parent=1 // pred_check
      _
    $region35: #{tpu_custom_call.1} parent=1 // pred_check_branch
      %106 = sbr.rel (0) target = $region37
    $region36: #{tpu_custom_call.1} parent=1 // pred_region
      %s108 = ssub.s32 64, 64
      %109 = vsyncadd [#allocation12], %s108
      %s111 = sshll.u32 [#allocation13], 4
      %s112 = int_to_ptr.vmem [resolvable:$true] %s111
      %114 = dma.hbm_to_vmem [thread:$0]  %s8, 64, %s112, [#allocation12]
    $region37: #{tpu_custom_call.1} parent=1 // pred_fallthru
      _
    // Predicated region
    $region38: #{tpu_custom_call.1} parent=1 // pred_check
      _
    $region39: #{tpu_custom_call.1} parent=1 // pred_check_branch
      %116 = sbr.rel (0) target = $region41
    $region40: #{tpu_custom_call.1} parent=1 // pred_region
      %s118 = ssub.s32 64, 64
      %119 = vsyncadd [#allocation15], %s118
      %s121 = sshll.u32 [#allocation14], 4
      %s122 = int_to_ptr.vmem [resolvable:$true] %s121
      %124 = dma.hbm_to_vmem [thread:$0]  %s9, 64, %s122, [#allocation15]
    $region41: #{tpu_custom_call.1} parent=1 // pred_fallthru
      _
    // Predicated region
    $region42: #{tpu_custom_call.1} parent=1 // pred_check
      _
    $region43: #{tpu_custom_call.1} parent=1 // pred_check_branch
      %126 = sbr.rel (0) target = $region45
    $region44: #{tpu_custom_call.1} parent=1 // pred_region
      _
    $region45: #{tpu_custom_call.1} parent=1 // pred_fallthru
      _
    // Predicated region
    $region46: #{tpu_custom_call.1} parent=1 // pred_check
      _
    $region47: #{tpu_custom_call.1} parent=1 // pred_check_branch
      %128 = sbr.rel (0) target = $region49
    $region48: #{tpu_custom_call.1} parent=1 // pred_region
      _
    $region49: #{tpu_custom_call.1} parent=1 // pred_fallthru
      _
    // Predicated region
    $region50: #{tpu_custom_call.1} parent=1 // pred_check
      _
    $region51: #{tpu_custom_call.1} parent=1 // pred_check_branch
      %130 = sbr.rel (0) target = $region53
    $region52: #{tpu_custom_call.1} parent=1 // pred_region
      _
    $region53: #{tpu_custom_call.1} parent=1 // pred_fallthru
      _
    // Predicated region
    $region54: #{tpu_custom_call.1} parent=1 // pred_check
      _
    $region55: #{tpu_custom_call.1} parent=1 // pred_check_branch
      %132 = sbr.rel (0) target = $region57
    $region56: #{tpu_custom_call.1} parent=1 // pred_region
      %s134 = ssub.s32 32, 32
      %135 = vsyncadd [#allocation15], %s134
      %s136 = sshll.u32 [#allocation16], 4
      %s137 = int_to_ptr.vmem [resolvable:$true] %s136
      %142 = dma.hbm_to_vmem [thread:$0]  %s13, 32, %s137, [#allocation15], 16, 16, 1
    $region57: #{tpu_custom_call.1} parent=1 // pred_fallthru
      _
    // Predicated region
    $region58: #{tpu_custom_call.1} parent=1 // pred_check
      _
    $region59: #{tpu_custom_call.1} parent=1 // pred_check_branch
      %144 = sbr.rel (0) target = $region61
    $region60: #{tpu_custom_call.1} parent=1 // pred_region
      %s146 = ssub.s32 32, 32
      %147 = vsyncadd [#allocation18], %s146
      %s148 = sshll.u32 [#allocation17], 4
      %s149 = int_to_ptr.vmem [resolvable:$true] %s148
      %154 = dma.hbm_to_vmem [thread:$0]  %s14, 32, %s149, [#allocation18], 16, 16, 1
    $region61: #{tpu_custom_call.1} parent=1 // pred_fallthru
      _
    // Predicated region
    $region62: #{tpu_custom_call.1} parent=1 // pred_check
      _
    $region63: #{tpu_custom_call.1} parent=1 // pred_check_branch
      %156 = sbr.rel (0) target = $region65
    $region64: #{tpu_custom_call.1} parent=1 // pred_region
      _
    $region65: #{tpu_custom_call.1} parent=1 // pred_fallthru
      _
    // Predicated region
    $region66: #{tpu_custom_call.1} parent=1 // pred_check
      _
    $region67: #{tpu_custom_call.1} parent=1 // pred_check_branch
      %158 = sbr.rel (0) target = $region69
    $region68: #{tpu_custom_call.1} parent=1 // pred_region
      _
    $region69: #{tpu_custom_call.1} parent=1 // pred_fallthru
      _
    // Predicated region
    $region70: #{tpu_custom_call.1} parent=1 // pred_check
      _
    $region71: #{tpu_custom_call.1} parent=1 // pred_check_branch
      %160 = sbr.rel (0) target = $region73
    $region72: #{tpu_custom_call.1} parent=1 // pred_region
      _
    $region73: #{tpu_custom_call.1} parent=1 // pred_fallthru
      _
    // Predicated region
    $region74: #{tpu_custom_call.1} parent=1 // pred_check
      _
    $region75: #{tpu_custom_call.1} parent=1 // pred_check_branch
      %162 = sbr.rel (0) target = $region77
    $region76: #{tpu_custom_call.1} parent=1 // pred_region
      _
    $region77: #{tpu_custom_call.1} parent=1 // pred_fallthru
      _
    // Predicated region
    $region78: #{tpu_custom_call.1} parent=1 // pred_check
      _
    $region79: #{tpu_custom_call.1} parent=1 // pred_check_branch
      %164 = sbr.rel (0) target = $region81
    $region80: #{tpu_custom_call.1} parent=1 // pred_region
      _
    $region81: #{tpu_custom_call.1} parent=1 // pred_fallthru
      _
    // Predicated region
    $region82: #{tpu_custom_call.1} parent=1 // pred_check
      _
    $region83: #{tpu_custom_call.1} parent=1 // pred_check_branch
      %166 = sbr.rel (0) target = $region85
    $region84: #{tpu_custom_call.1} parent=1 // pred_region
      _
    $region85: #{tpu_custom_call.1} parent=1 // pred_fallthru
      _
    // Predicated region
    $region86: #{tpu_custom_call.1} parent=1 // pred_check
      _
    $region87: #{tpu_custom_call.1} parent=1 // pred_check_branch
      %168 = sbr.rel (0) target = $region89
    $region88: #{tpu_custom_call.1} parent=1 // pred_region
      %169 = dma.done [#allocation3], 384
    $region89: #{tpu_custom_call.1} parent=1 // pred_fallthru
      _
    // Predicated region
    $region90: #{tpu_custom_call.1} parent=1 // pred_check
      _
    $region91: #{tpu_custom_call.1} parent=1 // pred_check_branch
      %171 = sbr.rel (0) target = $region93
    $region92: #{tpu_custom_call.1} parent=1 // pred_region
      %172 = dma.done [#allocation6], 256
    $region93: #{tpu_custom_call.1} parent=1 // pred_fallthru
      _
    // Predicated region
    $region94: #{tpu_custom_call.1} parent=1 // pred_check
      _
    $region95: #{tpu_custom_call.1} parent=1 // pred_check_branch
      %174 = sbr.rel (0) target = $region97
    $region96: #{tpu_custom_call.1} parent=1 // pred_region
      %175 = dma.done [#allocation6], 512
    $region97: #{tpu_custom_call.1} parent=1 // pred_fallthru
      _
    // Predicated region
    $region98: #{tpu_custom_call.1} parent=1 // pred_check
      _
    $region99: #{tpu_custom_call.1} parent=1 // pred_check_branch
      %177 = sbr.rel (0) target = $region101
    $region100: #{tpu_custom_call.1} parent=1 // pred_region
      %178 = dma.done [#allocation9], 32
    $region101: #{tpu_custom_call.1} parent=1 // pred_fallthru
      _
    // Predicated region
    $region102: #{tpu_custom_call.1} parent=1 // pred_check
      _
    $region103: #{tpu_custom_call.1} parent=1 // pred_check_branch
      %180 = sbr.rel (0) target = $region105
    $region104: #{tpu_custom_call.1} parent=1 // pred_region
      %181 = dma.done [#allocation9], 64
    $region105: #{tpu_custom_call.1} parent=1 // pred_fallthru
      _
    // Predicated region
    $region106: #{tpu_custom_call.1} parent=1 // pred_check
      _
    $region107: #{tpu_custom_call.1} parent=1 // pred_check_branch
      %183 = sbr.rel (0) target = $region109
    $region108: #{tpu_custom_call.1} parent=1 // pred_region
      %184 = dma.done [#allocation12], 64
    $region109: #{tpu_custom_call.1} parent=1 // pred_fallthru
      _
    // Predicated region
    $region110: #{tpu_custom_call.1} parent=1 // pred_check
      _
    $region111: #{tpu_custom_call.1} parent=1 // pred_check_branch
      %186 = sbr.rel (0) target = $region113
    $region112: #{tpu_custom_call.1} parent=1 // pred_region
      %187 = dma.done [#allocation12], 64
    $region113: #{tpu_custom_call.1} parent=1 // pred_fallthru
      _
    // Predicated region
    $region114: #{tpu_custom_call.1} parent=1 // pred_check
      _
    $region115: #{tpu_custom_call.1} parent=1 // pred_check_branch
      %189 = sbr.rel (0) target = $region117
    $region116: #{tpu_custom_call.1} parent=1 // pred_region
      %190 = dma.done [#allocation15], 64
    $region117: #{tpu_custom_call.1} parent=1 // pred_fallthru
      _
    // Predicated region
    $region118: #{tpu_custom_call.1} parent=1 // pred_check
      _
    $region119: #{tpu_custom_call.1} parent=1 // pred_check_branch
      %192 = sbr.rel (0) target = $region121
    $region120: #{tpu_custom_call.1} parent=1 // pred_region
      %193 = dma.done [#allocation15], 32
    $region121: #{tpu_custom_call.1} parent=1 // pred_fallthru
      _
    // Predicated region
    $region122: #{tpu_custom_call.1} parent=1 // pred_check
      _
    $region123: #{tpu_custom_call.1} parent=1 // pred_check_branch
      %195 = sbr.rel (0) target = $region125
    $region124: #{tpu_custom_call.1} parent=1 // pred_region
      %196 = dma.done [#allocation18], 32
    $region125: #{tpu_custom_call.1} parent=1 // pred_fallthru
      _
    %v197 = vld [vmem:[#allocation2] sm:$0xf]
    %v198 = vld [vmem:[#allocation2 + $0x4] sm:$0xf]
    %v199 = vld [vmem:[#allocation2 + $0x8] sm:$0xf]
    %v200 = vld [vmem:[#allocation2 + $0xc] sm:$0xf]
    %v201 = vld [vmem:[#allocation2 + $0x10] sm:$0xf]
    %v202 = vld [vmem:[#allocation2 + $0x14] sm:$0xf]
    %v203 = vld [vmem:[#allocation5] sm:$0xff]
    %v204 = vld [vmem:[#allocation7] sm:$0xff]
    %v205 = vld [vmem:[#allocation7 + $0x8] sm:$0xff]
    %v206 = vld [vmem:[%s3] sm:$0x1]
    %v207 = vld [vmem:[#allocation8] sm:$0x1]
    %v209 = vlaneseq
    %v210 = vshrl.u32 %v209, 7
    %v211 = vsub.s32 0, %v210
    %v212 = vrot.slane %v206, %v211
    %vm214 = vcmask 64512
    %v216 = vsel %vm214, %v197, 0
    %218 = vmatprep.subr.mxu0 0.0
    %219 = vmatpush1.msra.mxu0 %v203
    %220 = vmatprep.subr.mxu0 0.0
    %221 = vmatpush1.msra.mxu0 0.0
    %222 = vmatprep.subr.mxu0 0.0
    %223 = vmatpush1.msra.mxu0 0.0
    %224 = vmatprep.subr.mxu0 0.0
    %225 = vmatpush1.msra.mxu0 0.0
    %226 = vmatprep.subr.mxu0 0.0
    %227 = vmatpush1.msra.mxu0 0.0
    %228 = vmatprep.subr.mxu0 0.0
    %229 = vmatpush1.msra.mxu0 0.0
    %230 = vmatprep.subr.mxu0 0.0
    %231 = vmatpush1.msra.mxu0 0.0
    %232 = vmatprep.subr.mxu0 0.0
    %233 = vmatpush1.msra.mxu0 0.0
    %234 = vmatprep.subr.mxu0 0.0
    %235 = vmatpush1.msra.mxu0 0.0
    %236 = vmatprep.subr.mxu0 0.0
    %237 = vmatpush1.msra.mxu0 0.0
    %238 = vmatprep.subr.mxu0 0.0
    %239 = vmatpush1.msra.mxu0 0.0
    %240 = vmatprep.subr.mxu0 0.0
    %241 = vmatpush1.msra.mxu0 0.0
    %242 = vmatprep.subr.mxu0 0.0
    %243 = vmatpush1.msra.mxu0 0.0
    %244 = vmatprep.subr.mxu0 0.0
    %245 = vmatpush1.msra.mxu0 0.0
    %246 = vmatprep.subr.mxu0 0.0
    %247 = vmatpush1.msra.mxu0 0.0
    %248 = vmatprep.subr.mxu0 0.0
    %249 = vmatpush1.msra.mxu0 0.0
    %250 = vmatprep.subr.mxu0 0.0
    %251 = vmatpush1.msra.mxu0 0.0
    %252 = vmatprep.subr.mxu0 0.0
    %253 = vmatpush1.msra.mxu0 0.0
    %254 = vmatprep.subr.mxu0 0.0
    %255 = vmatpush1.msra.mxu0 0.0
    %256 = vmatprep.subr.mxu0 0.0
    %257 = vmatpush1.msra.mxu0 0.0
    %258 = vmatprep.subr.mxu0 0.0
    %259 = vmatpush1.msra.mxu0 0.0
    %260 = vmatprep.subr.mxu0 0.0
    %261 = vmatpush1.msra.mxu0 0.0
    %262 = vmatprep.subr.mxu0 0.0
    %263 = vmatpush1.msra.mxu0 0.0
    %264 = vmatprep.subr.mxu0 0.0
    %265 = vmatpush1.msra.mxu0 0.0
    %266 = vmatprep.subr.mxu0 0.0
    %267 = vmatpush1.msra.mxu0 0.0
    %268 = vmatprep.subr.mxu0 0.0
    %269 = vmatpush1.msra.mxu0 0.0
    %270 = vmatprep.subr.mxu0 0.0
    %271 = vmatpush1.msra.mxu0 0.0
    %272 = vmatprep.subr.mxu0 0.0
    %273 = vmatpush1.msra.mxu0 0.0
    %274 = vmatprep.subr.mxu0 0.0
    %275 = vmatpush1.msra.mxu0 0.0
    %276 = vmatprep.subr.mxu0 0.0
    %277 = vmatpush1.msra.mxu0 0.0
    %278 = vmatprep.subr.mxu0 0.0
    %279 = vmatpush1.msra.mxu0 0.0
    %280 = vmatprep.subr.mxu0 0.0
    %281 = vmatpush1.msra.mxu0 0.0
    %282 = vmatprep.mubr.f32.mxu0 0.0
    %283 = vmatmul.mubr.f32.gmra.mrb[0].mxu0 %v216
    %v284 = vpop.f32.mrb[0].mxu0
    %v285 = vadd.f32 %v212, %v284
    %v286 = vpop.f32.mrb[0].mxu0
    %287 = vdwg.mxu0
    %v289 = vsel %vm214, %v198, 0
    %291 = vmatprep.subr.mxu0 0.0
    %292 = vmatpush1.msra.mxu0 %v203
    %293 = vmatprep.subr.mxu0 0.0
    %294 = vmatpush1.msra.mxu0 0.0
    %295 = vmatprep.subr.mxu0 0.0
    %296 = vmatpush1.msra.mxu0 0.0
    %297 = vmatprep.subr.mxu0 0.0
    %298 = vmatpush1.msra.mxu0 0.0
    %299 = vmatprep.subr.mxu0 0.0
    %300 = vmatpush1.msra.mxu0 0.0
    %301 = vmatprep.subr.mxu0 0.0
    %302 = vmatpush1.msra.mxu0 0.0
    %303 = vmatprep.subr.mxu0 0.0
    %304 = vmatpush1.msra.mxu0 0.0
    %305 = vmatprep.subr.mxu0 0.0
    %306 = vmatpush1.msra.mxu0 0.0
    %307 = vmatprep.subr.mxu0 0.0
    %308 = vmatpush1.msra.mxu0 0.0
    %309 = vmatprep.subr.mxu0 0.0
    %310 = vmatpush1.msra.mxu0 0.0
    %311 = vmatprep.subr.mxu0 0.0
    %312 = vmatpush1.msra.mxu0 0.0
    %313 = vmatprep.subr.mxu0 0.0
    %314 = vmatpush1.msra.mxu0 0.0
    %315 = vmatprep.subr.mxu0 0.0
    %316 = vmatpush1.msra.mxu0 0.0
    %317 = vmatprep.subr.mxu0 0.0
    %318 = vmatpush1.msra.mxu0 0.0
    %319 = vmatprep.subr.mxu0 0.0
    %320 = vmatpush1.msra.mxu0 0.0
    %321 = vmatprep.subr.mxu0 0.0
    %322 = vmatpush1.msra.mxu0 0.0
    %323 = vmatprep.subr.mxu0 0.0
    %324 = vmatpush1.msra.mxu0 0.0
    %325 = vmatprep.subr.mxu0 0.0
    %326 = vmatpush1.msra.mxu0 0.0
    %327 = vmatprep.subr.mxu0 0.0
    %328 = vmatpush1.msra.mxu0 0.0
    %329 = vmatprep.subr.mxu0 0.0
    %330 = vmatpush1.msra.mxu0 0.0
    %331 = vmatprep.subr.mxu0 0.0
    %332 = vmatpush1.msra.mxu0 0.0
    %333 = vmatprep.subr.mxu0 0.0
    %334 = vmatpush1.msra.mxu0 0.0
    %335 = vmatprep.subr.mxu0 0.0
    %336 = vmatpush1.msra.mxu0 0.0
    %337 = vmatprep.subr.mxu0 0.0
    %338 = vmatpush1.msra.mxu0 0.0
    %339 = vmatprep.subr.mxu0 0.0
    %340 = vmatpush1.msra.mxu0 0.0
    %341 = vmatprep.subr.mxu0 0.0
    %342 = vmatpush1.msra.mxu0 0.0
    %343 = vmatprep.subr.mxu0 0.0
    %344 = vmatpush1.msra.mxu0 0.0
    %345 = vmatprep.subr.mxu0 0.0
    %346 = vmatpush1.msra.mxu0 0.0
    %347 = vmatprep.subr.mxu0 0.0
    %348 = vmatpush1.msra.mxu0 0.0
    %349 = vmatprep.subr.mxu0 0.0
    %350 = vmatpush1.msra.mxu0 0.0
    %351 = vmatprep.subr.mxu0 0.0
    %352 = vmatpush1.msra.mxu0 0.0
    %353 = vmatprep.subr.mxu0 0.0
    %354 = vmatpush1.msra.mxu0 0.0
    %355 = vmatprep.mubr.f32.mxu0 0.0
    %356 = vmatmul.mubr.f32.gmra.mrb[0].mxu0 %v289
    %v357 = vpop.f32.mrb[0].mxu0
    %v358 = vadd.f32 %v212, %v357
    %v359 = vpop.f32.mrb[0].mxu0
    %360 = vdwg.mxu0
    %v362 = vsel %vm214, %v199, 0
    %364 = vmatprep.subr.mxu0 0.0
    %365 = vmatpush1.msra.mxu0 %v203
    %366 = vmatprep.subr.mxu0 0.0
    %367 = vmatpush1.msra.mxu0 0.0
    %368 = vmatprep.subr.mxu0 0.0
    %369 = vmatpush1.msra.mxu0 0.0
    %370 = vmatprep.subr.mxu0 0.0
    %371 = vmatpush1.msra.mxu0 0.0
    %372 = vmatprep.subr.mxu0 0.0
    %373 = vmatpush1.msra.mxu0 0.0
    %374 = vmatprep.subr.mxu0 0.0
    %375 = vmatpush1.msra.mxu0 0.0
    %376 = vmatprep.subr.mxu0 0.0
    %377 = vmatpush1.msra.mxu0 0.0
    %378 = vmatprep.subr.mxu0 0.0
    %379 = vmatpush1.msra.mxu0 0.0
    %380 = vmatprep.subr.mxu0 0.0
    %381 = vmatpush1.msra.mxu0 0.0
    %382 = vmatprep.subr.mxu0 0.0
    %383 = vmatpush1.msra.mxu0 0.0
    %384 = vmatprep.subr.mxu0 0.0
    %385 = vmatpush1.msra.mxu0 0.0
    %386 = vmatprep.subr.mxu0 0.0
    %387 = vmatpush1.msra.mxu0 0.0
    %388 = vmatprep.subr.mxu0 0.0
    %389 = vmatpush1.msra.mxu0 0.0
    %390 = vmatprep.subr.mxu0 0.0
    %391 = vmatpush1.msra.mxu0 0.0
    %392 = vmatprep.subr.mxu0 0.0
    %393 = vmatpush1.msra.mxu0 0.0
    %394 = vmatprep.subr.mxu0 0.0
    %395 = vmatpush1.msra.mxu0 0.0
    %396 = vmatprep.subr.mxu0 0.0
    %397 = vmatpush1.msra.mxu0 0.0
    %398 = vmatprep.subr.mxu0 0.0
    %399 = vmatpush1.msra.mxu0 0.0
    %400 = vmatprep.subr.mxu0 0.0
    %401 = vmatpush1.msra.mxu0 0.0
    %402 = vmatprep.subr.mxu0 0.0
    %403 = vmatpush1.msra.mxu0 0.0
    %404 = vmatprep.subr.mxu0 0.0
    %405 = vmatpush1.msra.mxu0 0.0
    %406 = vmatprep.subr.mxu0 0.0
    %407 = vmatpush1.msra.mxu0 0.0
    %408 = vmatprep.subr.mxu0 0.0
    %409 = vmatpush1.msra.mxu0 0.0
    %410 = vmatprep.subr.mxu0 0.0
    %411 = vmatpush1.msra.mxu0 0.0
    %412 = vmatprep.subr.mxu0 0.0
    %413 = vmatpush1.msra.mxu0 0.0
    %414 = vmatprep.subr.mxu0 0.0
    %415 = vmatpush1.msra.mxu0 0.0
    %416 = vmatprep.subr.mxu0 0.0
    %417 = vmatpush1.msra.mxu0 0.0
    %418 = vmatprep.subr.mxu0 0.0
    %419 = vmatpush1.msra.mxu0 0.0
    %420 = vmatprep.subr.mxu0 0.0
    %421 = vmatpush1.msra.mxu0 0.0
    %422 = vmatprep.subr.mxu0 0.0
    %423 = vmatpush1.msra.mxu0 0.0
    %424 = vmatprep.subr.mxu0 0.0
    %425 = vmatpush1.msra.mxu0 0.0
    %426 = vmatprep.subr.mxu0 0.0
    %427 = vmatpush1.msra.mxu0 0.0
    %428 = vmatprep.mubr.f32.mxu0 0.0
    %429 = vmatmul.mubr.f32.gmra.mrb[0].mxu0 %v362
    %v430 = vpop.f32.mrb[0].mxu0
    %v431 = vadd.f32 %v212, %v430
    %v432 = vpop.f32.mrb[0].mxu0
    %433 = vdwg.mxu0
    %v435 = vsel %vm214, %v200, 0
    %437 = vmatprep.subr.mxu0 0.0
    %438 = vmatpush1.msra.mxu0 %v203
    %439 = vmatprep.subr.mxu0 0.0
    %440 = vmatpush1.msra.mxu0 0.0
    %441 = vmatprep.subr.mxu0 0.0
    %442 = vmatpush1.msra.mxu0 0.0
    %443 = vmatprep.subr.mxu0 0.0
    %444 = vmatpush1.msra.mxu0 0.0
    %445 = vmatprep.subr.mxu0 0.0
    %446 = vmatpush1.msra.mxu0 0.0
    %447 = vmatprep.subr.mxu0 0.0
    %448 = vmatpush1.msra.mxu0 0.0
    %449 = vmatprep.subr.mxu0 0.0
    %450 = vmatpush1.msra.mxu0 0.0
    %451 = vmatprep.subr.mxu0 0.0
    %452 = vmatpush1.msra.mxu0 0.0
    %453 = vmatprep.subr.mxu0 0.0
    %454 = vmatpush1.msra.mxu0 0.0
    %455 = vmatprep.subr.mxu0 0.0
    %456 = vmatpush1.msra.mxu0 0.0
    %457 = vmatprep.subr.mxu0 0.0
    %458 = vmatpush1.msra.mxu0 0.0
    %459 = vmatprep.subr.mxu0 0.0
    %460 = vmatpush1.msra.mxu0 0.0
    %461 = vmatprep.subr.mxu0 0.0
    %462 = vmatpush1.msra.mxu0 0.0
    %463 = vmatprep.subr.mxu0 0.0
    %464 = vmatpush1.msra.mxu0 0.0
    %465 = vmatprep.subr.mxu0 0.0
    %466 = vmatpush1.msra.mxu0 0.0
    %467 = vmatprep.subr.mxu0 0.0
    %468 = vmatpush1.msra.mxu0 0.0
    %469 = vmatprep.subr.mxu0 0.0
    %470 = vmatpush1.msra.mxu0 0.0
    %471 = vmatprep.subr.mxu0 0.0
    %472 = vmatpush1.msra.mxu0 0.0
    %473 = vmatprep.subr.mxu0 0.0
    %474 = vmatpush1.msra.mxu0 0.0
    %475 = vmatprep.subr.mxu0 0.0
    %476 = vmatpush1.msra.mxu0 0.0
    %477 = vmatprep.subr.mxu0 0.0
    %478 = vmatpush1.msra.mxu0 0.0
    %479 = vmatprep.subr.mxu0 0.0
    %480 = vmatpush1.msra.mxu0 0.0
    %481 = vmatprep.subr.mxu0 0.0
    %482 = vmatpush1.msra.mxu0 0.0
    %483 = vmatprep.subr.mxu0 0.0
    %484 = vmatpush1.msra.mxu0 0.0
    %485 = vmatprep.subr.mxu0 0.0
    %486 = vmatpush1.msra.mxu0 0.0
    %487 = vmatprep.subr.mxu0 0.0
    %488 = vmatpush1.msra.mxu0 0.0
    %489 = vmatprep.subr.mxu0 0.0
    %490 = vmatpush1.msra.mxu0 0.0
    %491 = vmatprep.subr.mxu0 0.0
    %492 = vmatpush1.msra.mxu0 0.0
    %493 = vmatprep.subr.mxu0 0.0
    %494 = vmatpush1.msra.mxu0 0.0
    %495 = vmatprep.subr.mxu0 0.0
    %496 = vmatpush1.msra.mxu0 0.0
    %497 = vmatprep.subr.mxu0 0.0
    %498 = vmatpush1.msra.mxu0 0.0
    %499 = vmatprep.subr.mxu0 0.0
    %500 = vmatpush1.msra.mxu0 0.0
    %501 = vmatprep.mubr.f32.mxu0 0.0
    %502 = vmatmul.mubr.f32.gmra.mrb[0].mxu0 %v435
    %v503 = vpop.f32.mrb[0].mxu0
    %v504 = vadd.f32 %v212, %v503
    %v505 = vpop.f32.mrb[0].mxu0
    %506 = vdwg.mxu0
    %v508 = vsel %vm214, %v201, 0
    %510 = vmatprep.subr.mxu0 0.0
    %511 = vmatpush1.msra.mxu0 %v203
    %512 = vmatprep.subr.mxu0 0.0
    %513 = vmatpush1.msra.mxu0 0.0
    %514 = vmatprep.subr.mxu0 0.0
    %515 = vmatpush1.msra.mxu0 0.0
    %516 = vmatprep.subr.mxu0 0.0
    %517 = vmatpush1.msra.mxu0 0.0
    %518 = vmatprep.subr.mxu0 0.0
    %519 = vmatpush1.msra.mxu0 0.0
    %520 = vmatprep.subr.mxu0 0.0
    %521 = vmatpush1.msra.mxu0 0.0
    %522 = vmatprep.subr.mxu0 0.0
    %523 = vmatpush1.msra.mxu0 0.0
    %524 = vmatprep.subr.mxu0 0.0
    %525 = vmatpush1.msra.mxu0 0.0
    %526 = vmatprep.subr.mxu0 0.0
    %527 = vmatpush1.msra.mxu0 0.0
    %528 = vmatprep.subr.mxu0 0.0
    %529 = vmatpush1.msra.mxu0 0.0
    %530 = vmatprep.subr.mxu0 0.0
    %531 = vmatpush1.msra.mxu0 0.0
    %532 = vmatprep.subr.mxu0 0.0
    %533 = vmatpush1.msra.mxu0 0.0
    %534 = vmatprep.subr.mxu0 0.0
    %535 = vmatpush1.msra.mxu0 0.0
    %536 = vmatprep.subr.mxu0 0.0
    %537 = vmatpush1.msra.mxu0 0.0
    %538 = vmatprep.subr.mxu0 0.0
    %539 = vmatpush1.msra.mxu0 0.0
    %540 = vmatprep.subr.mxu0 0.0
    %541 = vmatpush1.msra.mxu0 0.0
    %542 = vmatprep.subr.mxu0 0.0
    %543 = vmatpush1.msra.mxu0 0.0
    %544 = vmatprep.subr.mxu0 0.0
    %545 = vmatpush1.msra.mxu0 0.0
    %546 = vmatprep.subr.mxu0 0.0
    %547 = vmatpush1.msra.mxu0 0.0
    %548 = vmatprep.subr.mxu0 0.0
    %549 = vmatpush1.msra.mxu0 0.0
    %550 = vmatprep.subr.mxu0 0.0
    %551 = vmatpush1.msra.mxu0 0.0
    %552 = vmatprep.subr.mxu0 0.0
    %553 = vmatpush1.msra.mxu0 0.0
    %554 = vmatprep.subr.mxu0 0.0
    %555 = vmatpush1.msra.mxu0 0.0
    %556 = vmatprep.subr.mxu0 0.0
    %557 = vmatpush1.msra.mxu0 0.0
    %558 = vmatprep.subr.mxu0 0.0
    %559 = vmatpush1.msra.mxu0 0.0
    %560 = vmatprep.subr.mxu0 0.0
    %561 = vmatpush1.msra.mxu0 0.0
    %562 = vmatprep.subr.mxu0 0.0
    %563 = vmatpush1.msra.mxu0 0.0
    %564 = vmatprep.subr.mxu0 0.0
    %565 = vmatpush1.msra.mxu0 0.0
    %566 = vmatprep.subr.mxu0 0.0
    %567 = vmatpush1.msra.mxu0 0.0
    %568 = vmatprep.subr.mxu0 0.0
    %569 = vmatpush1.msra.mxu0 0.0
    %570 = vmatprep.subr.mxu0 0.0
    %571 = vmatpush1.msra.mxu0 0.0
    %572 = vmatprep.subr.mxu0 0.0
    %573 = vmatpush1.msra.mxu0 0.0
    %574 = vmatprep.mubr.f32.mxu0 0.0
    %575 = vmatmul.mubr.f32.gmra.mrb[0].mxu0 %v508
    %v576 = vpop.f32.mrb[0].mxu0
    %v577 = vadd.f32 %v212, %v576
    %v578 = vpop.f32.mrb[0].mxu0
    %579 = vdwg.mxu0
    %v581 = vsel %vm214, %v202, 0
    %583 = vmatprep.subr.mxu0 0.0
    %584 = vmatpush1.msra.mxu0 %v203
    %585 = vmatprep.subr.mxu0 0.0
    %586 = vmatpush1.msra.mxu0 0.0
    %587 = vmatprep.subr.mxu0 0.0
    %588 = vmatpush1.msra.mxu0 0.0
    %589 = vmatprep.subr.mxu0 0.0
    %590 = vmatpush1.msra.mxu0 0.0
    %591 = vmatprep.subr.mxu0 0.0
    %592 = vmatpush1.msra.mxu0 0.0
    %593 = vmatprep.subr.mxu0 0.0
    %594 = vmatpush1.msra.mxu0 0.0
    %595 = vmatprep.subr.mxu0 0.0
    %596 = vmatpush1.msra.mxu0 0.0
    %597 = vmatprep.subr.mxu0 0.0
    %598 = vmatpush1.msra.mxu0 0.0
    %599 = vmatprep.subr.mxu0 0.0
    %600 = vmatpush1.msra.mxu0 0.0
    %601 = vmatprep.subr.mxu0 0.0
    %602 = vmatpush1.msra.mxu0 0.0
    %603 = vmatprep.subr.mxu0 0.0
    %604 = vmatpush1.msra.mxu0 0.0
    %605 = vmatprep.subr.mxu0 0.0
    %606 = vmatpush1.msra.mxu0 0.0
    %607 = vmatprep.subr.mxu0 0.0
    %608 = vmatpush1.msra.mxu0 0.0
    %609 = vmatprep.subr.mxu0 0.0
    %610 = vmatpush1.msra.mxu0 0.0
    %611 = vmatprep.subr.mxu0 0.0
    %612 = vmatpush1.msra.mxu0 0.0
    %613 = vmatprep.subr.mxu0 0.0
    %614 = vmatpush1.msra.mxu0 0.0
    %615 = vmatprep.subr.mxu0 0.0
    %616 = vmatpush1.msra.mxu0 0.0
    %617 = vmatprep.subr.mxu0 0.0
    %618 = vmatpush1.msra.mxu0 0.0
    %619 = vmatprep.subr.mxu0 0.0
    %620 = vmatpush1.msra.mxu0 0.0
    %621 = vmatprep.subr.mxu0 0.0
    %622 = vmatpush1.msra.mxu0 0.0
    %623 = vmatprep.subr.mxu0 0.0
    %624 = vmatpush1.msra.mxu0 0.0
    %625 = vmatprep.subr.mxu0 0.0
    %626 = vmatpush1.msra.mxu0 0.0
    %627 = vmatprep.subr.mxu0 0.0
    %628 = vmatpush1.msra.mxu0 0.0
    %629 = vmatprep.subr.mxu0 0.0
    %630 = vmatpush1.msra.mxu0 0.0
    %631 = vmatprep.subr.mxu0 0.0
    %632 = vmatpush1.msra.mxu0 0.0
    %633 = vmatprep.subr.mxu0 0.0
    %634 = vmatpush1.msra.mxu0 0.0
    %635 = vmatprep.subr.mxu0 0.0
    %636 = vmatpush1.msra.mxu0 0.0
    %637 = vmatprep.subr.mxu0 0.0
    %638 = vmatpush1.msra.mxu0 0.0
    %639 = vmatprep.subr.mxu0 0.0
    %640 = vmatpush1.msra.mxu0 0.0
    %641 = vmatprep.subr.mxu0 0.0
    %642 = vmatpush1.msra.mxu0 0.0
    %643 = vmatprep.subr.mxu0 0.0
    %644 = vmatpush1.msra.mxu0 0.0
    %645 = vmatprep.subr.mxu0 0.0
    %646 = vmatpush1.msra.mxu0 0.0
    %647 = vmatprep.mubr.f32.mxu0 0.0
    %648 = vmatmul.mubr.f32.gmra.mrb[0].mxu0 %v581
    %v649 = vpop.f32.mrb[0].mxu0
    %v650 = vadd.f32 %v212, %v649
    %v651 = vpop.f32.mrb[0].mxu0
    %652 = vdwg.mxu0
    %v654 = vlaneseq
    %v655 = vshrl.u32 %v654, 7
    %v656 = vsub.s32 0, %v655
    %v657 = vrot.slane %v207, %v656
    %vm659 = vcmask 130048
    %v661 = vsel %vm659, 0.0, 0
    %663 = vmatprep.subr.mxu0 0.0
    %664 = vmatpush1.msra.mxu0 %v204
    %665 = vmatprep.subr.mxu0 0.0
    %666 = vmatpush1.msra.mxu0 %v205
    %667 = vmatprep.subr.mxu0 0.0
    %668 = vmatpush1.msra.mxu0 0.0
    %669 = vmatprep.subr.mxu0 0.0
    %670 = vmatpush1.msra.mxu0 0.0
    %671 = vmatprep.subr.mxu0 0.0
    %672 = vmatpush1.msra.mxu0 0.0
    %673 = vmatprep.subr.mxu0 0.0
    %674 = vmatpush1.msra.mxu0 0.0
    %675 = vmatprep.subr.mxu0 0.0
    %676 = vmatpush1.msra.mxu0 0.0
    %677 = vmatprep.subr.mxu0 0.0
    %678 = vmatpush1.msra.mxu0 0.0
    %679 = vmatprep.subr.mxu0 0.0
    %680 = vmatpush1.msra.mxu0 0.0
    %681 = vmatprep.subr.mxu0 0.0
    %682 = vmatpush1.msra.mxu0 0.0
    %683 = vmatprep.subr.mxu0 0.0
    %684 = vmatpush1.msra.mxu0 0.0
    %685 = vmatprep.subr.mxu0 0.0
    %686 = vmatpush1.msra.mxu0 0.0
    %687 = vmatprep.subr.mxu0 0.0
    %688 = vmatpush1.msra.mxu0 0.0
    %689 = vmatprep.subr.mxu0 0.0
    %690 = vmatpush1.msra.mxu0 0.0
    %691 = vmatprep.subr.mxu0 0.0
    %692 = vmatpush1.msra.mxu0 0.0
    %693 = vmatprep.subr.mxu0 0.0
    %694 = vmatpush1.msra.mxu0 0.0
    %695 = vmatprep.subr.mxu0 0.0
    %696 = vmatpush1.msra.mxu0 0.0
    %697 = vmatprep.subr.mxu0 0.0
    %698 = vmatpush1.msra.mxu0 0.0
    %699 = vmatprep.subr.mxu0 0.0
    %700 = vmatpush1.msra.mxu0 0.0
    %701 = vmatprep.subr.mxu0 0.0
    %702 = vmatpush1.msra.mxu0 0.0
    %703 = vmatprep.subr.mxu0 0.0
    %704 = vmatpush1.msra.mxu0 0.0
    %705 = vmatprep.subr.mxu0 0.0
    %706 = vmatpush1.msra.mxu0 0.0
    %707 = vmatprep.subr.mxu0 0.0
    %708 = vmatpush1.msra.mxu0 0.0
    %709 = vmatprep.subr.mxu0 0.0
    %710 = vmatpush1.msra.mxu0 0.0
    %711 = vmatprep.subr.mxu0 0.0
    %712 = vmatpush1.msra.mxu0 0.0
    %713 = vmatprep.subr.mxu0 0.0
    %714 = vmatpush1.msra.mxu0 0.0
    %715 = vmatprep.subr.mxu0 0.0
    %716 = vmatpush1.msra.mxu0 0.0
    %717 = vmatprep.subr.mxu0 0.0
    %718 = vmatpush1.msra.mxu0 0.0
    %719 = vmatprep.subr.mxu0 0.0
    %720 = vmatpush1.msra.mxu0 0.0
    %721 = vmatprep.subr.mxu0 0.0
    %722 = vmatpush1.msra.mxu0 0.0
    %723 = vmatprep.subr.mxu0 0.0
    %724 = vmatpush1.msra.mxu0 0.0
    %725 = vmatprep.subr.mxu0 0.0
    %726 = vmatpush1.msra.mxu0 0.0
    %727 = vmatprep.mubr.f32.mxu0 0.0
    %728 = vmatmul.mubr.f32.gmra.mrb[0].mxu0 %v661
    %v729 = vpop.f32.mrb[0].mxu0
    %v730 = vadd.f32 %v657, %v729
    %v731 = vpop.f32.mrb[0].mxu0
    %732 = vdwg.mxu0
    %v733 = vadd.f32 %v285, %v730
    %v734 = vxor.u32 %v733, 2147483648
    %v735 = vmul.f32 %v734, 1.442695
    %v736 = vpow.pop %v735
    %v737 = vadd.f32 %v736, 1.0
    %v738 = vrcp.pop %v737
    %v739 = vmul.f32 1.0, %v738
    %741 = vrot.lane.b32.xlu0 %v730, 96
    %v742 = vpop.permute.xlu0 %741
    %v744 = vmul.f32 %v739, %v742
    %746 = vrot.lane.b32.xlu0 %v744, 32
    %v747 = vpop.permute.xlu0 %746
    %v749 = vadd.f32 %v285, %v747
    %v750 = vtanh.pop %v749
    %v751 = vsub.f32 1.0, %v739
    %753 = vrot.lane.b32.xlu0 %v750, 112
    %v754 = vpop.permute.xlu0 %753
    %v756 = vmul.f32 %v751, %v754
    %v757 = vmul.f32 %v739, 0.0
    %v758 = vadd.f32 %v756, %v757
    %760 = vrot.lane.b32.xlu0 %v758, 112
    %v761 = vpop.permute.xlu0 %760
    %v762 = vsel %vm659, %v761, 0
    %764 = vmatprep.subr.mxu0 0.0
    %765 = vmatpush1.msra.mxu0 %v204
    %766 = vmatprep.subr.mxu0 0.0
    %767 = vmatpush1.msra.mxu0 %v205
    %768 = vmatprep.subr.mxu0 0.0
    %769 = vmatpush1.msra.mxu0 0.0
    %770 = vmatprep.subr.mxu0 0.0
    %771 = vmatpush1.msra.mxu0 0.0
    %772 = vmatprep.subr.mxu0 0.0
    %773 = vmatpush1.msra.mxu0 0.0
    %774 = vmatprep.subr.mxu0 0.0
    %775 = vmatpush1.msra.mxu0 0.0
    %776 = vmatprep.subr.mxu0 0.0
    %777 = vmatpush1.msra.mxu0 0.0
    %778 = vmatprep.subr.mxu0 0.0
    %779 = vmatpush1.msra.mxu0 0.0
    %780 = vmatprep.subr.mxu0 0.0
    %781 = vmatpush1.msra.mxu0 0.0
    %782 = vmatprep.subr.mxu0 0.0
    %783 = vmatpush1.msra.mxu0 0.0
    %784 = vmatprep.subr.mxu0 0.0
    %785 = vmatpush1.msra.mxu0 0.0
    %786 = vmatprep.subr.mxu0 0.0
    %787 = vmatpush1.msra.mxu0 0.0
    %788 = vmatprep.subr.mxu0 0.0
    %789 = vmatpush1.msra.mxu0 0.0
    %790 = vmatprep.subr.mxu0 0.0
    %791 = vmatpush1.msra.mxu0 0.0
    %792 = vmatprep.subr.mxu0 0.0
    %793 = vmatpush1.msra.mxu0 0.0
    %794 = vmatprep.subr.mxu0 0.0
    %795 = vmatpush1.msra.mxu0 0.0
    %796 = vmatprep.subr.mxu0 0.0
    %797 = vmatpush1.msra.mxu0 0.0
    %798 = vmatprep.subr.mxu0 0.0
    %799 = vmatpush1.msra.mxu0 0.0
    %800 = vmatprep.subr.mxu0 0.0
    %801 = vmatpush1.msra.mxu0 0.0
    %802 = vmatprep.subr.mxu0 0.0
    %803 = vmatpush1.msra.mxu0 0.0
    %804 = vmatprep.subr.mxu0 0.0
    %805 = vmatpush1.msra.mxu0 0.0
    %806 = vmatprep.subr.mxu0 0.0
    %807 = vmatpush1.msra.mxu0 0.0
    %808 = vmatprep.subr.mxu0 0.0
    %809 = vmatpush1.msra.mxu0 0.0
    %810 = vmatprep.subr.mxu0 0.0
    %811 = vmatpush1.msra.mxu0 0.0
    %812 = vmatprep.subr.mxu0 0.0
    %813 = vmatpush1.msra.mxu0 0.0
    %814 = vmatprep.subr.mxu0 0.0
    %815 = vmatpush1.msra.mxu0 0.0
    %816 = vmatprep.subr.mxu0 0.0
    %817 = vmatpush1.msra.mxu0 0.0
    %818 = vmatprep.subr.mxu0 0.0
    %819 = vmatpush1.msra.mxu0 0.0
    %820 = vmatprep.subr.mxu0 0.0
    %821 = vmatpush1.msra.mxu0 0.0
    %822 = vmatprep.subr.mxu0 0.0
    %823 = vmatpush1.msra.mxu0 0.0
    %824 = vmatprep.subr.mxu0 0.0
    %825 = vmatpush1.msra.mxu0 0.0
    %826 = vmatprep.subr.mxu0 0.0
    %827 = vmatpush1.msra.mxu0 0.0
    %828 = vmatprep.mubr.f32.mxu0 0.0
    %829 = vmatmul.mubr.f32.gmra.mrb[0].mxu0 %v762
    %v830 = vpop.f32.mrb[0].mxu0
    %v831 = vadd.f32 %v657, %v830
    %v832 = vpop.f32.mrb[0].mxu0
    %833 = vdwg.mxu0
    %v834 = vadd.f32 %v358, %v831
    %v835 = vxor.u32 %v834, 2147483648
    %v836 = vmul.f32 %v835, 1.442695
    %v837 = vpow.pop %v836
    %v838 = vadd.f32 %v837, 1.0
    %v839 = vrcp.pop %v838
    %v840 = vmul.f32 1.0, %v839
    %842 = vrot.lane.b32.xlu0 %v831, 96
    %v843 = vpop.permute.xlu0 %842
    %v845 = vmul.f32 %v840, %v843
    %847 = vrot.lane.b32.xlu0 %v845, 32
    %v848 = vpop.permute.xlu0 %847
    %v850 = vadd.f32 %v358, %v848
    %v851 = vtanh.pop %v850
    %v852 = vsub.f32 1.0, %v840
    %854 = vrot.lane.b32.xlu0 %v851, 112
    %v855 = vpop.permute.xlu0 %854
    %v857 = vmul.f32 %v852, %v855
    %v858 = vmul.f32 %v840, %v758
    %v859 = vadd.f32 %v857, %v858
    %861 = vrot.lane.b32.xlu0 %v859, 112
    %v862 = vpop.permute.xlu0 %861
    %v863 = vsel %vm659, %v862, 0
    %865 = vmatprep.subr.mxu0 0.0
    %866 = vmatpush1.msra.mxu0 %v204
    %867 = vmatprep.subr.mxu0 0.0
    %868 = vmatpush1.msra.mxu0 %v205
    %869 = vmatprep.subr.mxu0 0.0
    %870 = vmatpush1.msra.mxu0 0.0
    %871 = vmatprep.subr.mxu0 0.0
    %872 = vmatpush1.msra.mxu0 0.0
    %873 = vmatprep.subr.mxu0 0.0
    %874 = vmatpush1.msra.mxu0 0.0
    %875 = vmatprep.subr.mxu0 0.0
    %876 = vmatpush1.msra.mxu0 0.0
    %877 = vmatprep.subr.mxu0 0.0
    %878 = vmatpush1.msra.mxu0 0.0
    %879 = vmatprep.subr.mxu0 0.0
    %880 = vmatpush1.msra.mxu0 0.0
    %881 = vmatprep.subr.mxu0 0.0
    %882 = vmatpush1.msra.mxu0 0.0
    %883 = vmatprep.subr.mxu0 0.0
    %884 = vmatpush1.msra.mxu0 0.0
    %885 = vmatprep.subr.mxu0 0.0
    %886 = vmatpush1.msra.mxu0 0.0
    %887 = vmatprep.subr.mxu0 0.0
    %888 = vmatpush1.msra.mxu0 0.0
    %889 = vmatprep.subr.mxu0 0.0
    %890 = vmatpush1.msra.mxu0 0.0
    %891 = vmatprep.subr.mxu0 0.0
    %892 = vmatpush1.msra.mxu0 0.0
    %893 = vmatprep.subr.mxu0 0.0
    %894 = vmatpush1.msra.mxu0 0.0
    %895 = vmatprep.subr.mxu0 0.0
    %896 = vmatpush1.msra.mxu0 0.0
    %897 = vmatprep.subr.mxu0 0.0
    %898 = vmatpush1.msra.mxu0 0.0
    %899 = vmatprep.subr.mxu0 0.0
    %900 = vmatpush1.msra.mxu0 0.0
    %901 = vmatprep.subr.mxu0 0.0
    %902 = vmatpush1.msra.mxu0 0.0
    %903 = vmatprep.subr.mxu0 0.0
    %904 = vmatpush1.msra.mxu0 0.0
    %905 = vmatprep.subr.mxu0 0.0
    %906 = vmatpush1.msra.mxu0 0.0
    %907 = vmatprep.subr.mxu0 0.0
    %908 = vmatpush1.msra.mxu0 0.0
    %909 = vmatprep.subr.mxu0 0.0
    %910 = vmatpush1.msra.mxu0 0.0
    %911 = vmatprep.subr.mxu0 0.0
    %912 = vmatpush1.msra.mxu0 0.0
    %913 = vmatprep.subr.mxu0 0.0
    %914 = vmatpush1.msra.mxu0 0.0
    %915 = vmatprep.subr.mxu0 0.0
    %916 = vmatpush1.msra.mxu0 0.0
    %917 = vmatprep.subr.mxu0 0.0
    %918 = vmatpush1.msra.mxu0 0.0
    %919 = vmatprep.subr.mxu0 0.0
    %920 = vmatpush1.msra.mxu0 0.0
    %921 = vmatprep.subr.mxu0 0.0
    %922 = vmatpush1.msra.mxu0 0.0
    %923 = vmatprep.subr.mxu0 0.0
    %924 = vmatpush1.msra.mxu0 0.0
    %925 = vmatprep.subr.mxu0 0.0
    %926 = vmatpush1.msra.mxu0 0.0
    %927 = vmatprep.subr.mxu0 0.0
    %928 = vmatpush1.msra.mxu0 0.0
    %929 = vmatprep.mubr.f32.mxu0 0.0
    %930 = vmatmul.mubr.f32.gmra.mrb[0].mxu0 %v863
    %v931 = vpop.f32.mrb[0].mxu0
    %v932 = vadd.f32 %v657, %v931
    %v933 = vpop.f32.mrb[0].mxu0
    %934 = vdwg.mxu0
    %v935 = vadd.f32 %v431, %v932
    %v936 = vxor.u32 %v935, 2147483648
    %v937 = vmul.f32 %v936, 1.442695
    %v938 = vpow.pop %v937
    %v939 = vadd.f32 %v938, 1.0
    %v940 = vrcp.pop %v939
    %v941 = vmul.f32 1.0, %v940
    %943 = vrot.lane.b32.xlu0 %v932, 96
    %v944 = vpop.permute.xlu0 %943
    %v946 = vmul.f32 %v941, %v944
    %948 = vrot.lane.b32.xlu0 %v946, 32
    %v949 = vpop.permute.xlu0 %948
    %v951 = vadd.f32 %v431, %v949
    %v952 = vtanh.pop %v951
    %v953 = vsub.f32 1.0, %v941
    %955 = vrot.lane.b32.xlu0 %v952, 112
    %v956 = vpop.permute.xlu0 %955
    %v958 = vmul.f32 %v953, %v956
    %v959 = vmul.f32 %v941, %v859
    %v960 = vadd.f32 %v958, %v959
    %962 = vrot.lane.b32.xlu0 %v960, 112
    %v963 = vpop.permute.xlu0 %962
    %v964 = vsel %vm659, %v963, 0
    %966 = vmatprep.subr.mxu0 0.0
    %967 = vmatpush1.msra.mxu0 %v204
    %968 = vmatprep.subr.mxu0 0.0
    %969 = vmatpush1.msra.mxu0 %v205
    %970 = vmatprep.subr.mxu0 0.0
    %971 = vmatpush1.msra.mxu0 0.0
    %972 = vmatprep.subr.mxu0 0.0
    %973 = vmatpush1.msra.mxu0 0.0
    %974 = vmatprep.subr.mxu0 0.0
    %975 = vmatpush1.msra.mxu0 0.0
    %976 = vmatprep.subr.mxu0 0.0
    %977 = vmatpush1.msra.mxu0 0.0
    %978 = vmatprep.subr.mxu0 0.0
    %979 = vmatpush1.msra.mxu0 0.0
    %980 = vmatprep.subr.mxu0 0.0
    %981 = vmatpush1.msra.mxu0 0.0
    %982 = vmatprep.subr.mxu0 0.0
    %983 = vmatpush1.msra.mxu0 0.0
    %984 = vmatprep.subr.mxu0 0.0
    %985 = vmatpush1.msra.mxu0 0.0
    %986 = vmatprep.subr.mxu0 0.0
    %987 = vmatpush1.msra.mxu0 0.0
    %988 = vmatprep.subr.mxu0 0.0
    %989 = vmatpush1.msra.mxu0 0.0
    %990 = vmatprep.subr.mxu0 0.0
    %991 = vmatpush1.msra.mxu0 0.0
    %992 = vmatprep.subr.mxu0 0.0
    %993 = vmatpush1.msra.mxu0 0.0
    %994 = vmatprep.subr.mxu0 0.0
    %995 = vmatpush1.msra.mxu0 0.0
    %996 = vmatprep.subr.mxu0 0.0
    %997 = vmatpush1.msra.mxu0 0.0
    %998 = vmatprep.subr.mxu0 0.0
    %999 = vmatpush1.msra.mxu0 0.0
    %1000 = vmatprep.subr.mxu0 0.0
    %1001 = vmatpush1.msra.mxu0 0.0
    %1002 = vmatprep.subr.mxu0 0.0
    %1003 = vmatpush1.msra.mxu0 0.0
    %1004 = vmatprep.subr.mxu0 0.0
    %1005 = vmatpush1.msra.mxu0 0.0
    %1006 = vmatprep.subr.mxu0 0.0
    %1007 = vmatpush1.msra.mxu0 0.0
    %1008 = vmatprep.subr.mxu0 0.0
    %1009 = vmatpush1.msra.mxu0 0.0
    %1010 = vmatprep.subr.mxu0 0.0
    %1011 = vmatpush1.msra.mxu0 0.0
    %1012 = vmatprep.subr.mxu0 0.0
    %1013 = vmatpush1.msra.mxu0 0.0
    %1014 = vmatprep.subr.mxu0 0.0
    %1015 = vmatpush1.msra.mxu0 0.0
    %1016 = vmatprep.subr.mxu0 0.0
    %1017 = vmatpush1.msra.mxu0 0.0
    %1018 = vmatprep.subr.mxu0 0.0
    %1019 = vmatpush1.msra.mxu0 0.0
    %1020 = vmatprep.subr.mxu0 0.0
    %1021 = vmatpush1.msra.mxu0 0.0
    %1022 = vmatprep.subr.mxu0 0.0
    %1023 = vmatpush1.msra.mxu0 0.0
    %1024 = vmatprep.subr.mxu0 0.0
    %1025 = vmatpush1.msra.mxu0 0.0
    %1026 = vmatprep.subr.mxu0 0.0
    %1027 = vmatpush1.msra.mxu0 0.0
    %1028 = vmatprep.subr.mxu0 0.0
    %1029 = vmatpush1.msra.mxu0 0.0
    %1030 = vmatprep.mubr.f32.mxu0 0.0
    %1031 = vmatmul.mubr.f32.gmra.mrb[0].mxu0 %v964
    %v1032 = vpop.f32.mrb[0].mxu0
    %v1033 = vadd.f32 %v657, %v1032
    %v1034 = vpop.f32.mrb[0].mxu0
    %1035 = vdwg.mxu0
    %v1036 = vadd.f32 %v504, %v1033
    %v1037 = vxor.u32 %v1036, 2147483648
    %v1038 = vmul.f32 %v1037, 1.442695
    %v1039 = vpow.pop %v1038
    %v1040 = vadd.f32 %v1039, 1.0
    %v1041 = vrcp.pop %v1040
    %v1042 = vmul.f32 1.0, %v1041
    %1044 = vrot.lane.b32.xlu0 %v1033, 96
    %v1045 = vpop.permute.xlu0 %1044
    %v1047 = vmul.f32 %v1042, %v1045
    %1049 = vrot.lane.b32.xlu0 %v1047, 32
    %v1050 = vpop.permute.xlu0 %1049
    %v1052 = vadd.f32 %v504, %v1050
    %v1053 = vtanh.pop %v1052
    %v1054 = vsub.f32 1.0, %v1042
    %1056 = vrot.lane.b32.xlu0 %v1053, 112
    %v1057 = vpop.permute.xlu0 %1056
    %v1059 = vmul.f32 %v1054, %v1057
    %v1060 = vmul.f32 %v1042, %v960
    %v1061 = vadd.f32 %v1059, %v1060
    %1063 = vrot.lane.b32.xlu0 %v1061, 112
    %v1064 = vpop.permute.xlu0 %1063
    %v1065 = vsel %vm659, %v1064, 0
    %1067 = vmatprep.subr.mxu0 0.0
    %1068 = vmatpush1.msra.mxu0 %v204
    %1069 = vmatprep.subr.mxu0 0.0
    %1070 = vmatpush1.msra.mxu0 %v205
    %1071 = vmatprep.subr.mxu0 0.0
    %1072 = vmatpush1.msra.mxu0 0.0
    %1073 = vmatprep.subr.mxu0 0.0
    %1074 = vmatpush1.msra.mxu0 0.0
    %1075 = vmatprep.subr.mxu0 0.0
    %1076 = vmatpush1.msra.mxu0 0.0
    %1077 = vmatprep.subr.mxu0 0.0
    %1078 = vmatpush1.msra.mxu0 0.0
    %1079 = vmatprep.subr.mxu0 0.0
    %1080 = vmatpush1.msra.mxu0 0.0
    %1081 = vmatprep.subr.mxu0 0.0
    %1082 = vmatpush1.msra.mxu0 0.0
    %1083 = vmatprep.subr.mxu0 0.0
    %1084 = vmatpush1.msra.mxu0 0.0
    %1085 = vmatprep.subr.mxu0 0.0
    %1086 = vmatpush1.msra.mxu0 0.0
    %1087 = vmatprep.subr.mxu0 0.0
    %1088 = vmatpush1.msra.mxu0 0.0
    %1089 = vmatprep.subr.mxu0 0.0
    %1090 = vmatpush1.msra.mxu0 0.0
    %1091 = vmatprep.subr.mxu0 0.0
    %1092 = vmatpush1.msra.mxu0 0.0
    %1093 = vmatprep.subr.mxu0 0.0
    %1094 = vmatpush1.msra.mxu0 0.0
    %1095 = vmatprep.subr.mxu0 0.0
    %1096 = vmatpush1.msra.mxu0 0.0
    %1097 = vmatprep.subr.mxu0 0.0
    %1098 = vmatpush1.msra.mxu0 0.0
    %1099 = vmatprep.subr.mxu0 0.0
    %1100 = vmatpush1.msra.mxu0 0.0
    %1101 = vmatprep.subr.mxu0 0.0
    %1102 = vmatpush1.msra.mxu0 0.0
    %1103 = vmatprep.subr.mxu0 0.0
    %1104 = vmatpush1.msra.mxu0 0.0
    %1105 = vmatprep.subr.mxu0 0.0
    %1106 = vmatpush1.msra.mxu0 0.0
    %1107 = vmatprep.subr.mxu0 0.0
    %1108 = vmatpush1.msra.mxu0 0.0
    %1109 = vmatprep.subr.mxu0 0.0
    %1110 = vmatpush1.msra.mxu0 0.0
    %1111 = vmatprep.subr.mxu0 0.0
    %1112 = vmatpush1.msra.mxu0 0.0
    %1113 = vmatprep.subr.mxu0 0.0
    %1114 = vmatpush1.msra.mxu0 0.0
    %1115 = vmatprep.subr.mxu0 0.0
    %1116 = vmatpush1.msra.mxu0 0.0
    %1117 = vmatprep.subr.mxu0 0.0
    %1118 = vmatpush1.msra.mxu0 0.0
    %1119 = vmatprep.subr.mxu0 0.0
    %1120 = vmatpush1.msra.mxu0 0.0
    %1121 = vmatprep.subr.mxu0 0.0
    %1122 = vmatpush1.msra.mxu0 0.0
    %1123 = vmatprep.subr.mxu0 0.0
    %1124 = vmatpush1.msra.mxu0 0.0
    %1125 = vmatprep.subr.mxu0 0.0
    %1126 = vmatpush1.msra.mxu0 0.0
    %1127 = vmatprep.subr.mxu0 0.0
    %1128 = vmatpush1.msra.mxu0 0.0
    %1129 = vmatprep.subr.mxu0 0.0
    %1130 = vmatpush1.msra.mxu0 0.0
    %1131 = vmatprep.mubr.f32.mxu0 0.0
    %1132 = vmatmul.mubr.f32.gmra.mrb[0].mxu0 %v1065
    %v1133 = vpop.f32.mrb[0].mxu0
    %v1134 = vadd.f32 %v657, %v1133
    %v1135 = vpop.f32.mrb[0].mxu0
    %1136 = vdwg.mxu0
    %v1137 = vadd.f32 %v577, %v1134
    %v1138 = vxor.u32 %v1137, 2147483648
    %v1139 = vmul.f32 %v1138, 1.442695
    %v1140 = vpow.pop %v1139
    %v1141 = vadd.f32 %v1140, 1.0
    %v1142 = vrcp.pop %v1141
    %v1143 = vmul.f32 1.0, %v1142
    %1145 = vrot.lane.b32.xlu0 %v1134, 96
    %v1146 = vpop.permute.xlu0 %1145
    %v1148 = vmul.f32 %v1143, %v1146
    %1150 = vrot.lane.b32.xlu0 %v1148, 32
    %v1151 = vpop.permute.xlu0 %1150
    %v1153 = vadd.f32 %v577, %v1151
    %v1154 = vtanh.pop %v1153
    %v1155 = vsub.f32 1.0, %v1143
    %1157 = vrot.lane.b32.xlu0 %v1154, 112
    %v1158 = vpop.permute.xlu0 %1157
    %v1160 = vmul.f32 %v1155, %v1158
    %v1161 = vmul.f32 %v1143, %v1061
    %v1162 = vadd.f32 %v1160, %v1161
    %1164 = vrot.lane.b32.xlu0 %v1162, 112
    %v1165 = vpop.permute.xlu0 %1164
    %v1166 = vsel %vm659, %v1165, 0
    %1168 = vmatprep.subr.mxu0 0.0
    %1169 = vmatpush1.msra.mxu0 %v204
    %1170 = vmatprep.subr.mxu0 0.0
    %1171 = vmatpush1.msra.mxu0 %v205
    %1172 = vmatprep.subr.mxu0 0.0
    %1173 = vmatpush1.msra.mxu0 0.0
    %1174 = vmatprep.subr.mxu0 0.0
    %1175 = vmatpush1.msra.mxu0 0.0
    %1176 = vmatprep.subr.mxu0 0.0
    %1177 = vmatpush1.msra.mxu0 0.0
    %1178 = vmatprep.subr.mxu0 0.0
    %1179 = vmatpush1.msra.mxu0 0.0
    %1180 = vmatprep.subr.mxu0 0.0
    %1181 = vmatpush1.msra.mxu0 0.0
    %1182 = vmatprep.subr.mxu0 0.0
    %1183 = vmatpush1.msra.mxu0 0.0
    %1184 = vmatprep.subr.mxu0 0.0
    %1185 = vmatpush1.msra.mxu0 0.0
    %1186 = vmatprep.subr.mxu0 0.0
    %1187 = vmatpush1.msra.mxu0 0.0
    %1188 = vmatprep.subr.mxu0 0.0
    %1189 = vmatpush1.msra.mxu0 0.0
    %1190 = vmatprep.subr.mxu0 0.0
    %1191 = vmatpush1.msra.mxu0 0.0
    %1192 = vmatprep.subr.mxu0 0.0
    %1193 = vmatpush1.msra.mxu0 0.0
    %1194 = vmatprep.subr.mxu0 0.0
    %1195 = vmatpush1.msra.mxu0 0.0
    %1196 = vmatprep.subr.mxu0 0.0
    %1197 = vmatpush1.msra.mxu0 0.0
    %1198 = vmatprep.subr.mxu0 0.0
    %1199 = vmatpush1.msra.mxu0 0.0
    %1200 = vmatprep.subr.mxu0 0.0
    %1201 = vmatpush1.msra.mxu0 0.0
    %1202 = vmatprep.subr.mxu0 0.0
    %1203 = vmatpush1.msra.mxu0 0.0
    %1204 = vmatprep.subr.mxu0 0.0
    %1205 = vmatpush1.msra.mxu0 0.0
    %1206 = vmatprep.subr.mxu0 0.0
    %1207 = vmatpush1.msra.mxu0 0.0
    %1208 = vmatprep.subr.mxu0 0.0
    %1209 = vmatpush1.msra.mxu0 0.0
    %1210 = vmatprep.subr.mxu0 0.0
    %1211 = vmatpush1.msra.mxu0 0.0
    %1212 = vmatprep.subr.mxu0 0.0
    %1213 = vmatpush1.msra.mxu0 0.0
    %1214 = vmatprep.subr.mxu0 0.0
    %1215 = vmatpush1.msra.mxu0 0.0
    %1216 = vmatprep.subr.mxu0 0.0
    %1217 = vmatpush1.msra.mxu0 0.0
    %1218 = vmatprep.subr.mxu0 0.0
    %1219 = vmatpush1.msra.mxu0 0.0
    %1220 = vmatprep.subr.mxu0 0.0
    %1221 = vmatpush1.msra.mxu0 0.0
    %1222 = vmatprep.subr.mxu0 0.0
    %1223 = vmatpush1.msra.mxu0 0.0
    %1224 = vmatprep.subr.mxu0 0.0
    %1225 = vmatpush1.msra.mxu0 0.0
    %1226 = vmatprep.subr.mxu0 0.0
    %1227 = vmatpush1.msra.mxu0 0.0
    %1228 = vmatprep.subr.mxu0 0.0
    %1229 = vmatpush1.msra.mxu0 0.0
    %1230 = vmatprep.subr.mxu0 0.0
    %1231 = vmatpush1.msra.mxu0 0.0
    %1232 = vmatprep.mubr.f32.mxu0 0.0
    %1233 = vmatmul.mubr.f32.gmra.mrb[0].mxu0 %v1166
    %v1234 = vpop.f32.mrb[0].mxu0
    %v1235 = vadd.f32 %v657, %v1234
    %v1236 = vpop.f32.mrb[0].mxu0
    %1237 = vdwg.mxu0
    %v1238 = vadd.f32 %v650, %v1235
    %v1239 = vxor.u32 %v1238, 2147483648
    %v1240 = vmul.f32 %v1239, 1.442695
    %v1241 = vpow.pop %v1240
    %v1242 = vadd.f32 %v1241, 1.0
    %v1243 = vrcp.pop %v1242
    %v1244 = vmul.f32 1.0, %v1243
    %1246 = vrot.lane.b32.xlu0 %v1235, 96
    %v1247 = vpop.permute.xlu0 %1246
    %v1249 = vmul.f32 %v1244, %v1247
    %1251 = vrot.lane.b32.xlu0 %v1249, 32
    %v1252 = vpop.permute.xlu0 %1251
    %v1254 = vadd.f32 %v650, %v1252
    %v1255 = vtanh.pop %v1254
    %v1256 = vsub.f32 1.0, %v1244
    %1258 = vrot.lane.b32.xlu0 %v1255, 112
    %v1259 = vpop.permute.xlu0 %1258
    %v1261 = vmul.f32 %v1256, %v1259
    %v1262 = vmul.f32 %v1244, %v1162
    %v1263 = vadd.f32 %v1261, %v1262
    %s1264 = scalar_lea.vmem [#allocation5], 8
    %v1265 = vld [vmem:[%s1264] sm:$0xff]
    %s1266 = scalar_lea.vmem %s3, 1
    %v1267 = vld [vmem:[%s1266] sm:$0x1]
    %v1269 = vlaneseq
    %v1270 = vshrl.u32 %v1269, 7
    %v1271 = vsub.s32 0, %v1270
    %v1272 = vrot.slane %v1267, %v1271
    %1274 = vmatprep.subr.mxu0 0.0
    %1275 = vmatpush1.msra.mxu0 %v1265
    %1276 = vmatprep.subr.mxu0 0.0
    %1277 = vmatpush1.msra.mxu0 0.0
    %1278 = vmatprep.subr.mxu0 0.0
    %1279 = vmatpush1.msra.mxu0 0.0
    %1280 = vmatprep.subr.mxu0 0.0
    %1281 = vmatpush1.msra.mxu0 0.0
    %1282 = vmatprep.subr.mxu0 0.0
    %1283 = vmatpush1.msra.mxu0 0.0
    %1284 = vmatprep.subr.mxu0 0.0
    %1285 = vmatpush1.msra.mxu0 0.0
    %1286 = vmatprep.subr.mxu0 0.0
    %1287 = vmatpush1.msra.mxu0 0.0
    %1288 = vmatprep.subr.mxu0 0.0
    %1289 = vmatpush1.msra.mxu0 0.0
    %1290 = vmatprep.subr.mxu0 0.0
    %1291 = vmatpush1.msra.mxu0 0.0
    %1292 = vmatprep.subr.mxu0 0.0
    %1293 = vmatpush1.msra.mxu0 0.0
    %1294 = vmatprep.subr.mxu0 0.0
    %1295 = vmatpush1.msra.mxu0 0.0
    %1296 = vmatprep.subr.mxu0 0.0
    %1297 = vmatpush1.msra.mxu0 0.0
    %1298 = vmatprep.subr.mxu0 0.0
    %1299 = vmatpush1.msra.mxu0 0.0
    %1300 = vmatprep.subr.mxu0 0.0
    %1301 = vmatpush1.msra.mxu0 0.0
    %1302 = vmatprep.subr.mxu0 0.0
    %1303 = vmatpush1.msra.mxu0 0.0
    %1304 = vmatprep.subr.mxu0 0.0
    %1305 = vmatpush1.msra.mxu0 0.0
    %1306 = vmatprep.subr.mxu0 0.0
    %1307 = vmatpush1.msra.mxu0 0.0
    %1308 = vmatprep.subr.mxu0 0.0
    %1309 = vmatpush1.msra.mxu0 0.0
    %1310 = vmatprep.subr.mxu0 0.0
    %1311 = vmatpush1.msra.mxu0 0.0
    %1312 = vmatprep.subr.mxu0 0.0
    %1313 = vmatpush1.msra.mxu0 0.0
    %1314 = vmatprep.subr.mxu0 0.0
    %1315 = vmatpush1.msra.mxu0 0.0
    %1316 = vmatprep.subr.mxu0 0.0
    %1317 = vmatpush1.msra.mxu0 0.0
    %1318 = vmatprep.subr.mxu0 0.0
    %1319 = vmatpush1.msra.mxu0 0.0
    %1320 = vmatprep.subr.mxu0 0.0
    %1321 = vmatpush1.msra.mxu0 0.0
    %1322 = vmatprep.subr.mxu0 0.0
    %1323 = vmatpush1.msra.mxu0 0.0
    %1324 = vmatprep.subr.mxu0 0.0
    %1325 = vmatpush1.msra.mxu0 0.0
    %1326 = vmatprep.subr.mxu0 0.0
    %1327 = vmatpush1.msra.mxu0 0.0
    %1328 = vmatprep.subr.mxu0 0.0
    %1329 = vmatpush1.msra.mxu0 0.0
    %1330 = vmatprep.subr.mxu0 0.0
    %1331 = vmatpush1.msra.mxu0 0.0
    %1332 = vmatprep.subr.mxu0 0.0
    %1333 = vmatpush1.msra.mxu0 0.0
    %1334 = vmatprep.subr.mxu0 0.0
    %1335 = vmatpush1.msra.mxu0 0.0
    %1336 = vmatprep.subr.mxu0 0.0
    %1337 = vmatpush1.msra.mxu0 0.0
    %1338 = vmatprep.mubr.f32.mxu0 0.0
    %1339 = vmatmul.mubr.f32.gmra.mrb[0].mxu0 %v581
    %v1340 = vpop.f32.mrb[0].mxu0
    %v1341 = vadd.f32 %v1272, %v1340
    %v1342 = vpop.f32.mrb[0].mxu0
    %1343 = vdwg.mxu0
    %s1344 = scalar_lea.vmem [#allocation7], 16
    %v1345 = vld [vmem:[%s1344] sm:$0xff]
    %v1346 = vld [vmem:[%s1344 + $0x8] sm:$0xff]
    %s1347 = scalar_lea.vmem [#allocation8], 1
    %v1348 = vld [vmem:[%s1347] sm:$0x1]
    %v1350 = vlaneseq
    %v1351 = vshrl.u32 %v1350, 7
    %v1352 = vsub.s32 0, %v1351
    %v1353 = vrot.slane %v1348, %v1352
    %1355 = vmatprep.subr.mxu0 0.0
    %1356 = vmatpush1.msra.mxu0 %v1345
    %1357 = vmatprep.subr.mxu0 0.0
    %1358 = vmatpush1.msra.mxu0 %v1346
    %1359 = vmatprep.subr.mxu0 0.0
    %1360 = vmatpush1.msra.mxu0 0.0
    %1361 = vmatprep.subr.mxu0 0.0
    %1362 = vmatpush1.msra.mxu0 0.0
    %1363 = vmatprep.subr.mxu0 0.0
    %1364 = vmatpush1.msra.mxu0 0.0
    %1365 = vmatprep.subr.mxu0 0.0
    %1366 = vmatpush1.msra.mxu0 0.0
    %1367 = vmatprep.subr.mxu0 0.0
    %1368 = vmatpush1.msra.mxu0 0.0
    %1369 = vmatprep.subr.mxu0 0.0
    %1370 = vmatpush1.msra.mxu0 0.0
    %1371 = vmatprep.subr.mxu0 0.0
    %1372 = vmatpush1.msra.mxu0 0.0
    %1373 = vmatprep.subr.mxu0 0.0
    %1374 = vmatpush1.msra.mxu0 0.0
    %1375 = vmatprep.subr.mxu0 0.0
    %1376 = vmatpush1.msra.mxu0 0.0
    %1377 = vmatprep.subr.mxu0 0.0
    %1378 = vmatpush1.msra.mxu0 0.0
    %1379 = vmatprep.subr.mxu0 0.0
    %1380 = vmatpush1.msra.mxu0 0.0
    %1381 = vmatprep.subr.mxu0 0.0
    %1382 = vmatpush1.msra.mxu0 0.0
    %1383 = vmatprep.subr.mxu0 0.0
    %1384 = vmatpush1.msra.mxu0 0.0
    %1385 = vmatprep.subr.mxu0 0.0
    %1386 = vmatpush1.msra.mxu0 0.0
    %1387 = vmatprep.subr.mxu0 0.0
    %1388 = vmatpush1.msra.mxu0 0.0
    %1389 = vmatprep.subr.mxu0 0.0
    %1390 = vmatpush1.msra.mxu0 0.0
    %1391 = vmatprep.subr.mxu0 0.0
    %1392 = vmatpush1.msra.mxu0 0.0
    %1393 = vmatprep.subr.mxu0 0.0
    %1394 = vmatpush1.msra.mxu0 0.0
    %1395 = vmatprep.subr.mxu0 0.0
    %1396 = vmatpush1.msra.mxu0 0.0
    %1397 = vmatprep.subr.mxu0 0.0
    %1398 = vmatpush1.msra.mxu0 0.0
    %1399 = vmatprep.subr.mxu0 0.0
    %1400 = vmatpush1.msra.mxu0 0.0
    %1401 = vmatprep.subr.mxu0 0.0
    %1402 = vmatpush1.msra.mxu0 0.0
    %1403 = vmatprep.subr.mxu0 0.0
    %1404 = vmatpush1.msra.mxu0 0.0
    %1405 = vmatprep.subr.mxu0 0.0
    %1406 = vmatpush1.msra.mxu0 0.0
    %1407 = vmatprep.subr.mxu0 0.0
    %1408 = vmatpush1.msra.mxu0 0.0
    %1409 = vmatprep.subr.mxu0 0.0
    %1410 = vmatpush1.msra.mxu0 0.0
    %1411 = vmatprep.subr.mxu0 0.0
    %1412 = vmatpush1.msra.mxu0 0.0
    %1413 = vmatprep.subr.mxu0 0.0
    %1414 = vmatpush1.msra.mxu0 0.0
    %1415 = vmatprep.subr.mxu0 0.0
    %1416 = vmatpush1.msra.mxu0 0.0
    %1417 = vmatprep.subr.mxu0 0.0
    %1418 = vmatpush1.msra.mxu0 0.0
    %1419 = vmatprep.mubr.f32.mxu0 0.0
    %1420 = vmatmul.mubr.f32.gmra.mrb[0].mxu0 %v661
    %v1421 = vpop.f32.mrb[0].mxu0
    %v1422 = vadd.f32 %v1353, %v1421
    %v1423 = vpop.f32.mrb[0].mxu0
    %1424 = vdwg.mxu0
    %v1425 = vadd.f32 %v1341, %v1422
    %v1426 = vxor.u32 %v1425, 2147483648
    %v1427 = vmul.f32 %v1426, 1.442695
    %v1428 = vpow.pop %v1427
    %v1429 = vadd.f32 %v1428, 1.0
    %v1430 = vrcp.pop %v1429
    %v1431 = vmul.f32 1.0, %v1430
    %1433 = vrot.lane.b32.xlu0 %v1422, 96
    %v1434 = vpop.permute.xlu0 %1433
    %v1436 = vmul.f32 %v1431, %v1434
    %1438 = vrot.lane.b32.xlu0 %v1436, 32
    %v1439 = vpop.permute.xlu0 %1438
    %v1441 = vadd.f32 %v1341, %v1439
    %v1442 = vtanh.pop %v1441
    %v1443 = vsub.f32 1.0, %v1431
    %1445 = vrot.lane.b32.xlu0 %v1442, 112
    %v1446 = vpop.permute.xlu0 %1445
    %v1448 = vmul.f32 %v1443, %v1446
    %v1449 = vmul.f32 %v1431, 0.0
    %v1450 = vadd.f32 %v1448, %v1449
    %1452 = vrot.lane.b32.xlu0 %v1263, 112
    %v1453 = vpop.permute.xlu0 %1452
    %v1455 = vsel %vm659, %v1453, %v1450
    %v1456 = vld [vmem:[#allocation10] sm:$0xf]
    %vm1457 = vcmask 31744
    %v1459 = vsel %vm1457, %v1456, 0
    %vm1461 = vcmask 1043456
    %v1463 = vsel %vm1461, %v1455, 0
    %1465 = vmatprep.subr.mxu0 0.0
    %1466 = vmatpush1.msra.mxu0 %v1463
    %1467 = vmatprep.subr.mxu0 0.0
    %1468 = vmatpush1.msra.mxu0 0.0
    %1469 = vmatprep.subr.mxu0 0.0
    %1470 = vmatpush1.msra.mxu0 0.0
    %1471 = vmatprep.subr.mxu0 0.0
    %1472 = vmatpush1.msra.mxu0 0.0
    %1473 = vmatprep.subr.mxu0 0.0
    %1474 = vmatpush1.msra.mxu0 0.0
    %1475 = vmatprep.subr.mxu0 0.0
    %1476 = vmatpush1.msra.mxu0 0.0
    %1477 = vmatprep.subr.mxu0 0.0
    %1478 = vmatpush1.msra.mxu0 0.0
    %1479 = vmatprep.subr.mxu0 0.0
    %1480 = vmatpush1.msra.mxu0 0.0
    %1481 = vmatprep.subr.mxu0 0.0
    %1482 = vmatpush1.msra.mxu0 0.0
    %1483 = vmatprep.subr.mxu0 0.0
    %1484 = vmatpush1.msra.mxu0 0.0
    %1485 = vmatprep.subr.mxu0 0.0
    %1486 = vmatpush1.msra.mxu0 0.0
    %1487 = vmatprep.subr.mxu0 0.0
    %1488 = vmatpush1.msra.mxu0 0.0
    %1489 = vmatprep.subr.mxu0 0.0
    %1490 = vmatpush1.msra.mxu0 0.0
    %1491 = vmatprep.subr.mxu0 0.0
    %1492 = vmatpush1.msra.mxu0 0.0
    %1493 = vmatprep.subr.mxu0 0.0
    %1494 = vmatpush1.msra.mxu0 0.0
    %1495 = vmatprep.subr.mxu0 0.0
    %1496 = vmatpush1.msra.mxu0 0.0
    %1497 = vmatprep.subr.mxu0 0.0
    %1498 = vmatpush1.msra.mxu0 0.0
    %1499 = vmatprep.subr.mxu0 0.0
    %1500 = vmatpush1.msra.mxu0 0.0
    %1501 = vmatprep.subr.mxu0 0.0
    %1502 = vmatpush1.msra.mxu0 0.0
    %1503 = vmatprep.subr.mxu0 0.0
    %1504 = vmatpush1.msra.mxu0 0.0
    %1505 = vmatprep.subr.mxu0 0.0
    %1506 = vmatpush1.msra.mxu0 0.0
    %1507 = vmatprep.subr.mxu0 0.0
    %1508 = vmatpush1.msra.mxu0 0.0
    %1509 = vmatprep.subr.mxu0 0.0
    %1510 = vmatpush1.msra.mxu0 0.0
    %1511 = vmatprep.subr.mxu0 0.0
    %1512 = vmatpush1.msra.mxu0 0.0
    %1513 = vmatprep.subr.mxu0 0.0
    %1514 = vmatpush1.msra.mxu0 0.0
    %1515 = vmatprep.subr.mxu0 0.0
    %1516 = vmatpush1.msra.mxu0 0.0
    %1517 = vmatprep.subr.mxu0 0.0
    %1518 = vmatpush1.msra.mxu0 0.0
    %1519 = vmatprep.subr.mxu0 0.0
    %1520 = vmatpush1.msra.mxu0 0.0
    %1521 = vmatprep.subr.mxu0 0.0
    %1522 = vmatpush1.msra.mxu0 0.0
    %1523 = vmatprep.subr.mxu0 0.0
    %1524 = vmatpush1.msra.mxu0 0.0
    %1525 = vmatprep.subr.mxu0 0.0
    %1526 = vmatpush1.msra.mxu0 0.0
    %1527 = vmatprep.subr.mxu0 0.0
    %1528 = vmatpush1.msra.mxu0 0.0
    %1529 = vmatprep.mubr.f32.mxu0 0.0
    %1530 = vmatmul.mubr.f32.gmra.mrb[0].mxu0 %v1459
    %v1531 = vpop.f32.mrb[0].mxu0
    %v1532 = vadd.f32 0.0, %v1531
    %v1533 = vpop.f32.mrb[0].mxu0
    %1534 = vdwg.mxu0
    %v1535 = vld [vmem:[#allocation11] sm:$0xf]
    %v1537 = vsel %vm1457, %v1535, 0
    %1539 = vmatprep.subr.mxu0 0.0
    %1540 = vmatpush1.msra.mxu0 %v1463
    %1541 = vmatprep.subr.mxu0 0.0
    %1542 = vmatpush1.msra.mxu0 0.0
    %1543 = vmatprep.subr.mxu0 0.0
    %1544 = vmatpush1.msra.mxu0 0.0
    %1545 = vmatprep.subr.mxu0 0.0
    %1546 = vmatpush1.msra.mxu0 0.0
    %1547 = vmatprep.subr.mxu0 0.0
    %1548 = vmatpush1.msra.mxu0 0.0
    %1549 = vmatprep.subr.mxu0 0.0
    %1550 = vmatpush1.msra.mxu0 0.0
    %1551 = vmatprep.subr.mxu0 0.0
    %1552 = vmatpush1.msra.mxu0 0.0
    %1553 = vmatprep.subr.mxu0 0.0
    %1554 = vmatpush1.msra.mxu0 0.0
    %1555 = vmatprep.subr.mxu0 0.0
    %1556 = vmatpush1.msra.mxu0 0.0
    %1557 = vmatprep.subr.mxu0 0.0
    %1558 = vmatpush1.msra.mxu0 0.0
    %1559 = vmatprep.subr.mxu0 0.0
    %1560 = vmatpush1.msra.mxu0 0.0
    %1561 = vmatprep.subr.mxu0 0.0
    %1562 = vmatpush1.msra.mxu0 0.0
    %1563 = vmatprep.subr.mxu0 0.0
    %1564 = vmatpush1.msra.mxu0 0.0
    %1565 = vmatprep.subr.mxu0 0.0
    %1566 = vmatpush1.msra.mxu0 0.0
    %1567 = vmatprep.subr.mxu0 0.0
    %1568 = vmatpush1.msra.mxu0 0.0
    %1569 = vmatprep.subr.mxu0 0.0
    %1570 = vmatpush1.msra.mxu0 0.0
    %1571 = vmatprep.subr.mxu0 0.0
    %1572 = vmatpush1.msra.mxu0 0.0
    %1573 = vmatprep.subr.mxu0 0.0
    %1574 = vmatpush1.msra.mxu0 0.0
    %1575 = vmatprep.subr.mxu0 0.0
    %1576 = vmatpush1.msra.mxu0 0.0
    %1577 = vmatprep.subr.mxu0 0.0
    %1578 = vmatpush1.msra.mxu0 0.0
    %1579 = vmatprep.subr.mxu0 0.0
    %1580 = vmatpush1.msra.mxu0 0.0
    %1581 = vmatprep.subr.mxu0 0.0
    %1582 = vmatpush1.msra.mxu0 0.0
    %1583 = vmatprep.subr.mxu0 0.0
    %1584 = vmatpush1.msra.mxu0 0.0
    %1585 = vmatprep.subr.mxu0 0.0
    %1586 = vmatpush1.msra.mxu0 0.0
    %1587 = vmatprep.subr.mxu0 0.0
    %1588 = vmatpush1.msra.mxu0 0.0
    %1589 = vmatprep.subr.mxu0 0.0
    %1590 = vmatpush1.msra.mxu0 0.0
    %1591 = vmatprep.subr.mxu0 0.0
    %1592 = vmatpush1.msra.mxu0 0.0
    %1593 = vmatprep.subr.mxu0 0.0
    %1594 = vmatpush1.msra.mxu0 0.0
    %1595 = vmatprep.subr.mxu0 0.0
    %1596 = vmatpush1.msra.mxu0 0.0
    %1597 = vmatprep.subr.mxu0 0.0
    %1598 = vmatpush1.msra.mxu0 0.0
    %1599 = vmatprep.subr.mxu0 0.0
    %1600 = vmatpush1.msra.mxu0 0.0
    %1601 = vmatprep.subr.mxu0 0.0
    %1602 = vmatpush1.msra.mxu0 0.0
    %1603 = vmatprep.mubr.f32.mxu0 0.0
    %1604 = vmatmul.mubr.f32.gmra.mrb[0].mxu0 %v1537
    %v1605 = vpop.f32.mrb[0].mxu0
    %v1606 = vadd.f32 0.0, %v1605
    %v1607 = vpop.f32.mrb[0].mxu0
    %1608 = vdwg.mxu0
    %1610 = vrot.lane.b32.xlu0 %v1606, 127
    %v1611 = vpop.permute.xlu0 %1610
    %v1613 = vadd.f32 %v1532, %v1611
    %v1614 = vld [vmem:[%s7] sm:$0xf]
    %1616 = vset.pattern.permute.xlu0 0
    %1617 = vperm.xlu0 %1616, %v1614
    %v1618 = vpop.permute.xlu0 %1617
    %v1620 = vadd.f32 %v1613, %v1618
    %v1621 = vld [vmem:[#allocation13] sm:$0xf]
    %v1623 = vsel %vm1457, %v1621, 0
    %v1626 = vsel %vm1461, %v1620, 0
    %1628 = vmatprep.subr.mxu0 0.0
    %1629 = vmatpush1.msra.mxu0 %v1626
    %1630 = vmatprep.subr.mxu0 0.0
    %1631 = vmatpush1.msra.mxu0 0.0
    %1632 = vmatprep.subr.mxu0 0.0
    %1633 = vmatpush1.msra.mxu0 0.0
    %1634 = vmatprep.subr.mxu0 0.0
    %1635 = vmatpush1.msra.mxu0 0.0
    %1636 = vmatprep.subr.mxu0 0.0
    %1637 = vmatpush1.msra.mxu0 0.0
    %1638 = vmatprep.subr.mxu0 0.0
    %1639 = vmatpush1.msra.mxu0 0.0
    %1640 = vmatprep.subr.mxu0 0.0
    %1641 = vmatpush1.msra.mxu0 0.0
    %1642 = vmatprep.subr.mxu0 0.0
    %1643 = vmatpush1.msra.mxu0 0.0
    %1644 = vmatprep.subr.mxu0 0.0
    %1645 = vmatpush1.msra.mxu0 0.0
    %1646 = vmatprep.subr.mxu0 0.0
    %1647 = vmatpush1.msra.mxu0 0.0
    %1648 = vmatprep.subr.mxu0 0.0
    %1649 = vmatpush1.msra.mxu0 0.0
    %1650 = vmatprep.subr.mxu0 0.0
    %1651 = vmatpush1.msra.mxu0 0.0
    %1652 = vmatprep.subr.mxu0 0.0
    %1653 = vmatpush1.msra.mxu0 0.0
    %1654 = vmatprep.subr.mxu0 0.0
    %1655 = vmatpush1.msra.mxu0 0.0
    %1656 = vmatprep.subr.mxu0 0.0
    %1657 = vmatpush1.msra.mxu0 0.0
    %1658 = vmatprep.subr.mxu0 0.0
    %1659 = vmatpush1.msra.mxu0 0.0
    %1660 = vmatprep.subr.mxu0 0.0
    %1661 = vmatpush1.msra.mxu0 0.0
    %1662 = vmatprep.subr.mxu0 0.0
    %1663 = vmatpush1.msra.mxu0 0.0
    %1664 = vmatprep.subr.mxu0 0.0
    %1665 = vmatpush1.msra.mxu0 0.0
    %1666 = vmatprep.subr.mxu0 0.0
    %1667 = vmatpush1.msra.mxu0 0.0
    %1668 = vmatprep.subr.mxu0 0.0
    %1669 = vmatpush1.msra.mxu0 0.0
    %1670 = vmatprep.subr.mxu0 0.0
    %1671 = vmatpush1.msra.mxu0 0.0
    %1672 = vmatprep.subr.mxu0 0.0
    %1673 = vmatpush1.msra.mxu0 0.0
    %1674 = vmatprep.subr.mxu0 0.0
    %1675 = vmatpush1.msra.mxu0 0.0
    %1676 = vmatprep.subr.mxu0 0.0
    %1677 = vmatpush1.msra.mxu0 0.0
    %1678 = vmatprep.subr.mxu0 0.0
    %1679 = vmatpush1.msra.mxu0 0.0
    %1680 = vmatprep.subr.mxu0 0.0
    %1681 = vmatpush1.msra.mxu0 0.0
    %1682 = vmatprep.subr.mxu0 0.0
    %1683 = vmatpush1.msra.mxu0 0.0
    %1684 = vmatprep.subr.mxu0 0.0
    %1685 = vmatpush1.msra.mxu0 0.0
    %1686 = vmatprep.subr.mxu0 0.0
    %1687 = vmatpush1.msra.mxu0 0.0
    %1688 = vmatprep.subr.mxu0 0.0
    %1689 = vmatpush1.msra.mxu0 0.0
    %1690 = vmatprep.subr.mxu0 0.0
    %1691 = vmatpush1.msra.mxu0 0.0
    %1692 = vmatprep.mubr.f32.mxu0 0.0
    %1693 = vmatmul.mubr.f32.gmra.mrb[0].mxu0 %v1623
    %v1694 = vpop.f32.mrb[0].mxu0
    %v1695 = vadd.f32 0.0, %v1694
    %v1696 = vpop.f32.mrb[0].mxu0
    %1697 = vdwg.mxu0
    %v1698 = vld [vmem:[#allocation14] sm:$0xf]
    %v1700 = vsel %vm1457, %v1698, 0
    %1702 = vmatprep.subr.mxu0 0.0
    %1703 = vmatpush1.msra.mxu0 %v1626
    %1704 = vmatprep.subr.mxu0 0.0
    %1705 = vmatpush1.msra.mxu0 0.0
    %1706 = vmatprep.subr.mxu0 0.0
    %1707 = vmatpush1.msra.mxu0 0.0
    %1708 = vmatprep.subr.mxu0 0.0
    %1709 = vmatpush1.msra.mxu0 0.0
    %1710 = vmatprep.subr.mxu0 0.0
    %1711 = vmatpush1.msra.mxu0 0.0
    %1712 = vmatprep.subr.mxu0 0.0
    %1713 = vmatpush1.msra.mxu0 0.0
    %1714 = vmatprep.subr.mxu0 0.0
    %1715 = vmatpush1.msra.mxu0 0.0
    %1716 = vmatprep.subr.mxu0 0.0
    %1717 = vmatpush1.msra.mxu0 0.0
    %1718 = vmatprep.subr.mxu0 0.0
    %1719 = vmatpush1.msra.mxu0 0.0
    %1720 = vmatprep.subr.mxu0 0.0
    %1721 = vmatpush1.msra.mxu0 0.0
    %1722 = vmatprep.subr.mxu0 0.0
    %1723 = vmatpush1.msra.mxu0 0.0
    %1724 = vmatprep.subr.mxu0 0.0
    %1725 = vmatpush1.msra.mxu0 0.0
    %1726 = vmatprep.subr.mxu0 0.0
    %1727 = vmatpush1.msra.mxu0 0.0
    %1728 = vmatprep.subr.mxu0 0.0
    %1729 = vmatpush1.msra.mxu0 0.0
    %1730 = vmatprep.subr.mxu0 0.0
    %1731 = vmatpush1.msra.mxu0 0.0
    %1732 = vmatprep.subr.mxu0 0.0
    %1733 = vmatpush1.msra.mxu0 0.0
    %1734 = vmatprep.subr.mxu0 0.0
    %1735 = vmatpush1.msra.mxu0 0.0
    %1736 = vmatprep.subr.mxu0 0.0
    %1737 = vmatpush1.msra.mxu0 0.0
    %1738 = vmatprep.subr.mxu0 0.0
    %1739 = vmatpush1.msra.mxu0 0.0
    %1740 = vmatprep.subr.mxu0 0.0
    %1741 = vmatpush1.msra.mxu0 0.0
    %1742 = vmatprep.subr.mxu0 0.0
    %1743 = vmatpush1.msra.mxu0 0.0
    %1744 = vmatprep.subr.mxu0 0.0
    %1745 = vmatpush1.msra.mxu0 0.0
    %1746 = vmatprep.subr.mxu0 0.0
    %1747 = vmatpush1.msra.mxu0 0.0
    %1748 = vmatprep.subr.mxu0 0.0
    %1749 = vmatpush1.msra.mxu0 0.0
    %1750 = vmatprep.subr.mxu0 0.0
    %1751 = vmatpush1.msra.mxu0 0.0
    %1752 = vmatprep.subr.mxu0 0.0
    %1753 = vmatpush1.msra.mxu0 0.0
    %1754 = vmatprep.subr.mxu0 0.0
    %1755 = vmatpush1.msra.mxu0 0.0
    %1756 = vmatprep.subr.mxu0 0.0
    %1757 = vmatpush1.msra.mxu0 0.0
    %1758 = vmatprep.subr.mxu0 0.0
    %1759 = vmatpush1.msra.mxu0 0.0
    %1760 = vmatprep.subr.mxu0 0.0
    %1761 = vmatpush1.msra.mxu0 0.0
    %1762 = vmatprep.subr.mxu0 0.0
    %1763 = vmatpush1.msra.mxu0 0.0
    %1764 = vmatprep.subr.mxu0 0.0
    %1765 = vmatpush1.msra.mxu0 0.0
    %1766 = vmatprep.mubr.f32.mxu0 0.0
    %1767 = vmatmul.mubr.f32.gmra.mrb[0].mxu0 %v1700
    %v1768 = vpop.f32.mrb[0].mxu0
    %v1769 = vadd.f32 0.0, %v1768
    %v1770 = vpop.f32.mrb[0].mxu0
    %1771 = vdwg.mxu0
    %1773 = vrot.lane.b32.xlu0 %v1769, 127
    %v1774 = vpop.permute.xlu0 %1773
    %v1776 = vadd.f32 %v1695, %v1774
    %v1777 = vld [vmem:[%s10] sm:$0xf]
    %1779 = vset.pattern.permute.xlu0 0
    %1780 = vperm.xlu0 %1779, %v1777
    %v1781 = vpop.permute.xlu0 %1780
    %v1783 = vadd.f32 %v1776, %v1781
    %v1784 = vld [vmem:[%s11] sm:$0xff]
    %v1785 = vld [vmem:[%s11 + $0x8] sm:$0xff]
    %v1786 = vld [vmem:[%s11 + $0x10] sm:$0xff]
    %v1787 = vld [vmem:[%s11 + $0x18] sm:$0x3f]
    %v1788 = vld [vmem:[#allocation16] sm:$0x1]
    %v1790 = vlaneseq
    %v1791 = vshrl.u32 %v1790, 7
    %v1792 = vsub.s32 0, %v1791
    %v1793 = vrot.slane %v1788, %v1792
    %vm1795 = vcmask 244736
    %v1797 = vsel %vm1795, %v1783, 0
    %vm1799 = vcmask 1045504
    %v1801 = vsel %vm1799, %v1787, 0
    %1803 = vmatprep.subr.mxu0 0.0
    %1804 = vmatpush1.msra.mxu0 %v1784
    %1805 = vmatprep.subr.mxu0 0.0
    %1806 = vmatpush1.msra.mxu0 %v1785
    %1807 = vmatprep.subr.mxu0 0.0
    %1808 = vmatpush1.msra.mxu0 %v1786
    %1809 = vmatprep.subr.mxu0 0.0
    %1810 = vmatpush1.msra.mxu0 %v1801
    %1811 = vmatprep.subr.mxu0 0.0
    %1812 = vmatpush1.msra.mxu0 0.0
    %1813 = vmatprep.subr.mxu0 0.0
    %1814 = vmatpush1.msra.mxu0 0.0
    %1815 = vmatprep.subr.mxu0 0.0
    %1816 = vmatpush1.msra.mxu0 0.0
    %1817 = vmatprep.subr.mxu0 0.0
    %1818 = vmatpush1.msra.mxu0 0.0
    %1819 = vmatprep.subr.mxu0 0.0
    %1820 = vmatpush1.msra.mxu0 0.0
    %1821 = vmatprep.subr.mxu0 0.0
    %1822 = vmatpush1.msra.mxu0 0.0
    %1823 = vmatprep.subr.mxu0 0.0
    %1824 = vmatpush1.msra.mxu0 0.0
    %1825 = vmatprep.subr.mxu0 0.0
    %1826 = vmatpush1.msra.mxu0 0.0
    %1827 = vmatprep.subr.mxu0 0.0
    %1828 = vmatpush1.msra.mxu0 0.0
    %1829 = vmatprep.subr.mxu0 0.0
    %1830 = vmatpush1.msra.mxu0 0.0
    %1831 = vmatprep.subr.mxu0 0.0
    %1832 = vmatpush1.msra.mxu0 0.0
    %1833 = vmatprep.subr.mxu0 0.0
    %1834 = vmatpush1.msra.mxu0 0.0
    %1835 = vmatprep.subr.mxu0 0.0
    %1836 = vmatpush1.msra.mxu0 0.0
    %1837 = vmatprep.subr.mxu0 0.0
    %1838 = vmatpush1.msra.mxu0 0.0
    %1839 = vmatprep.subr.mxu0 0.0
    %1840 = vmatpush1.msra.mxu0 0.0
    %1841 = vmatprep.subr.mxu0 0.0
    %1842 = vmatpush1.msra.mxu0 0.0
    %1843 = vmatprep.subr.mxu0 0.0
    %1844 = vmatpush1.msra.mxu0 0.0
    %1845 = vmatprep.subr.mxu0 0.0
    %1846 = vmatpush1.msra.mxu0 0.0
    %1847 = vmatprep.subr.mxu0 0.0
    %1848 = vmatpush1.msra.mxu0 0.0
    %1849 = vmatprep.subr.mxu0 0.0
    %1850 = vmatpush1.msra.mxu0 0.0
    %1851 = vmatprep.subr.mxu0 0.0
    %1852 = vmatpush1.msra.mxu0 0.0
    %1853 = vmatprep.subr.mxu0 0.0
    %1854 = vmatpush1.msra.mxu0 0.0
    %1855 = vmatprep.subr.mxu0 0.0
    %1856 = vmatpush1.msra.mxu0 0.0
    %1857 = vmatprep.subr.mxu0 0.0
    %1858 = vmatpush1.msra.mxu0 0.0
    %1859 = vmatprep.subr.mxu0 0.0
    %1860 = vmatpush1.msra.mxu0 0.0
    %1861 = vmatprep.subr.mxu0 0.0
    %1862 = vmatpush1.msra.mxu0 0.0
    %1863 = vmatprep.subr.mxu0 0.0
    %1864 = vmatpush1.msra.mxu0 0.0
    %1865 = vmatprep.subr.mxu0 0.0
    %1866 = vmatpush1.msra.mxu0 0.0
    %1867 = vmatprep.mubr.f32.mxu0 0.0
    %1868 = vmatmul.mubr.f32.gmra.mrb[0].mxu0 %v1797
    %v1869 = vpop.f32.mrb[0].mxu0
    %v1870 = vadd.f32 %v1793, %v1869
    %v1871 = vpop.f32.mrb[0].mxu0
    %1872 = vdwg.mxu0
    %s1873 = scalar_lea.vmem %s11, 32
    %v1874 = vld [vmem:[%s1873] sm:$0xff]
    %v1875 = vld [vmem:[%s1873 + $0x8] sm:$0xff]
    %v1876 = vld [vmem:[%s1873 + $0x10] sm:$0xff]
    %v1877 = vld [vmem:[%s1873 + $0x18] sm:$0x3f]
    %s1878 = scalar_lea.vmem [#allocation16], 1
    %v1879 = vld [vmem:[%s1878] sm:$0x1]
    %v1881 = vlaneseq
    %v1882 = vshrl.u32 %v1881, 7
    %v1883 = vsub.s32 0, %v1882
    %v1884 = vrot.slane %v1879, %v1883
    %v1887 = vsel %vm1799, %v1877, 0
    %1889 = vmatprep.subr.mxu0 0.0
    %1890 = vmatpush1.msra.mxu0 %v1874
    %1891 = vmatprep.subr.mxu0 0.0
    %1892 = vmatpush1.msra.mxu0 %v1875
    %1893 = vmatprep.subr.mxu0 0.0
    %1894 = vmatpush1.msra.mxu0 %v1876
    %1895 = vmatprep.subr.mxu0 0.0
    %1896 = vmatpush1.msra.mxu0 %v1887
    %1897 = vmatprep.subr.mxu0 0.0
    %1898 = vmatpush1.msra.mxu0 0.0
    %1899 = vmatprep.subr.mxu0 0.0
    %1900 = vmatpush1.msra.mxu0 0.0
    %1901 = vmatprep.subr.mxu0 0.0
    %1902 = vmatpush1.msra.mxu0 0.0
    %1903 = vmatprep.subr.mxu0 0.0
    %1904 = vmatpush1.msra.mxu0 0.0
    %1905 = vmatprep.subr.mxu0 0.0
    %1906 = vmatpush1.msra.mxu0 0.0
    %1907 = vmatprep.subr.mxu0 0.0
    %1908 = vmatpush1.msra.mxu0 0.0
    %1909 = vmatprep.subr.mxu0 0.0
    %1910 = vmatpush1.msra.mxu0 0.0
    %1911 = vmatprep.subr.mxu0 0.0
    %1912 = vmatpush1.msra.mxu0 0.0
    %1913 = vmatprep.subr.mxu0 0.0
    %1914 = vmatpush1.msra.mxu0 0.0
    %1915 = vmatprep.subr.mxu0 0.0
    %1916 = vmatpush1.msra.mxu0 0.0
    %1917 = vmatprep.subr.mxu0 0.0
    %1918 = vmatpush1.msra.mxu0 0.0
    %1919 = vmatprep.subr.mxu0 0.0
    %1920 = vmatpush1.msra.mxu0 0.0
    %1921 = vmatprep.subr.mxu0 0.0
    %1922 = vmatpush1.msra.mxu0 0.0
    %1923 = vmatprep.subr.mxu0 0.0
    %1924 = vmatpush1.msra.mxu0 0.0
    %1925 = vmatprep.subr.mxu0 0.0
    %1926 = vmatpush1.msra.mxu0 0.0
    %1927 = vmatprep.subr.mxu0 0.0
    %1928 = vmatpush1.msra.mxu0 0.0
    %1929 = vmatprep.subr.mxu0 0.0
    %1930 = vmatpush1.msra.mxu0 0.0
    %1931 = vmatprep.subr.mxu0 0.0
    %1932 = vmatpush1.msra.mxu0 0.0
    %1933 = vmatprep.subr.mxu0 0.0
    %1934 = vmatpush1.msra.mxu0 0.0
    %1935 = vmatprep.subr.mxu0 0.0
    %1936 = vmatpush1.msra.mxu0 0.0
    %1937 = vmatprep.subr.mxu0 0.0
    %1938 = vmatpush1.msra.mxu0 0.0
    %1939 = vmatprep.subr.mxu0 0.0
    %1940 = vmatpush1.msra.mxu0 0.0
    %1941 = vmatprep.subr.mxu0 0.0
    %1942 = vmatpush1.msra.mxu0 0.0
    %1943 = vmatprep.subr.mxu0 0.0
    %1944 = vmatpush1.msra.mxu0 0.0
    %1945 = vmatprep.subr.mxu0 0.0
    %1946 = vmatpush1.msra.mxu0 0.0
    %1947 = vmatprep.subr.mxu0 0.0
    %1948 = vmatpush1.msra.mxu0 0.0
    %1949 = vmatprep.subr.mxu0 0.0
    %1950 = vmatpush1.msra.mxu0 0.0
    %1951 = vmatprep.subr.mxu0 0.0
    %1952 = vmatpush1.msra.mxu0 0.0
    %1953 = vmatprep.mubr.f32.mxu0 0.0
    %1954 = vmatmul.mubr.f32.gmra.mrb[0].mxu0 %v1797
    %v1955 = vpop.f32.mrb[0].mxu0
    %v1956 = vadd.f32 %v1884, %v1955
    %v1957 = vpop.f32.mrb[0].mxu0
    %1958 = vdwg.mxu0
    %v1959 = vld [vmem:[%s12] sm:$0xff]
    %v1960 = vld [vmem:[%s12 + $0x8] sm:$0xff]
    %v1961 = vld [vmem:[%s12 + $0x10] sm:$0xff]
    %v1962 = vld [vmem:[%s12 + $0x18] sm:$0xff]
    %v1963 = vld [vmem:[#allocation17] sm:$0x1]
    %s1964 = scalar_lea.vmem %s12, 32
    %v1965 = vld [vmem:[%s1964] sm:$0xff]
    %v1966 = vld [vmem:[%s1964 + $0x8] sm:$0xff]
    %v1967 = vld [vmem:[%s1964 + $0x10] sm:$0xff]
    %v1968 = vld [vmem:[%s1964 + $0x18] sm:$0xff]
    %s1969 = scalar_lea.vmem [#allocation17], 1
    %v1970 = vld [vmem:[%s1969] sm:$0x1]
    %vm1971 = vcmask 261120
    %v1972 = vsel %vm1971, 0.0, 0
    %1974 = vmatprep.subr.mxu0 0.0
    %1975 = vmatpush1.msra.mxu0 %v1959
    %1976 = vmatprep.subr.mxu0 0.0
    %1977 = vmatpush1.msra.mxu0 %v1960
    %1978 = vmatprep.subr.mxu0 0.0
    %1979 = vmatpush1.msra.mxu0 %v1961
    %1980 = vmatprep.subr.mxu0 0.0
    %1981 = vmatpush1.msra.mxu0 %v1962
    %1982 = vmatprep.subr.mxu0 0.0
    %1983 = vmatpush1.msra.mxu0 0.0
    %1984 = vmatprep.subr.mxu0 0.0
    %1985 = vmatpush1.msra.mxu0 0.0
    %1986 = vmatprep.subr.mxu0 0.0
    %1987 = vmatpush1.msra.mxu0 0.0
    %1988 = vmatprep.subr.mxu0 0.0
    %1989 = vmatpush1.msra.mxu0 0.0
    %1990 = vmatprep.subr.mxu0 0.0
    %1991 = vmatpush1.msra.mxu0 0.0
    %1992 = vmatprep.subr.mxu0 0.0
    %1993 = vmatpush1.msra.mxu0 0.0
    %1994 = vmatprep.subr.mxu0 0.0
    %1995 = vmatpush1.msra.mxu0 0.0
    %1996 = vmatprep.subr.mxu0 0.0
    %1997 = vmatpush1.msra.mxu0 0.0
    %1998 = vmatprep.subr.mxu0 0.0
    %1999 = vmatpush1.msra.mxu0 0.0
    %2000 = vmatprep.subr.mxu0 0.0
    %2001 = vmatpush1.msra.mxu0 0.0
    %2002 = vmatprep.subr.mxu0 0.0
    %2003 = vmatpush1.msra.mxu0 0.0
    %2004 = vmatprep.subr.mxu0 0.0
    %2005 = vmatpush1.msra.mxu0 0.0
    %2006 = vmatprep.subr.mxu0 0.0
    %2007 = vmatpush1.msra.mxu0 0.0
    %2008 = vmatprep.subr.mxu0 0.0
    %2009 = vmatpush1.msra.mxu0 0.0
    %2010 = vmatprep.subr.mxu0 0.0
    %2011 = vmatpush1.msra.mxu0 0.0
    %2012 = vmatprep.subr.mxu0 0.0
    %2013 = vmatpush1.msra.mxu0 0.0
    %2014 = vmatprep.subr.mxu0 0.0
    %2015 = vmatpush1.msra.mxu0 0.0
    %2016 = vmatprep.subr.mxu0 0.0
    %2017 = vmatpush1.msra.mxu0 0.0
    %2018 = vmatprep.subr.mxu0 0.0
    %2019 = vmatpush1.msra.mxu0 0.0
    %2020 = vmatprep.subr.mxu0 0.0
    %2021 = vmatpush1.msra.mxu0 0.0
    %2022 = vmatprep.subr.mxu0 0.0
    %2023 = vmatpush1.msra.mxu0 0.0
    %2024 = vmatprep.subr.mxu0 0.0
    %2025 = vmatpush1.msra.mxu0 0.0
    %2026 = vmatprep.subr.mxu0 0.0
    %2027 = vmatpush1.msra.mxu0 0.0
    %2028 = vmatprep.subr.mxu0 0.0
    %2029 = vmatpush1.msra.mxu0 0.0
    %2030 = vmatprep.subr.mxu0 0.0
    %2031 = vmatpush1.msra.mxu0 0.0
    %2032 = vmatprep.subr.mxu0 0.0
    %2033 = vmatpush1.msra.mxu0 0.0
    %2034 = vmatprep.subr.mxu0 0.0
    %2035 = vmatpush1.msra.mxu0 0.0
    %2036 = vmatprep.subr.mxu0 0.0
    %2037 = vmatpush1.msra.mxu0 0.0
    %2038 = vmatprep.mubr.f32.mxu0 0.0
    %2039 = vmatmul.mubr.f32.gmra.mrb[0].mxu0 %v1972
    %v2040 = vpop.f32.mrb[0].mxu0
    %v2041 = vadd.f32 %v1963, %v2040
    %v2042 = vpop.f32.mrb[0].mxu0
    %2043 = vdwg.mxu0
    %v2044 = vadd.f32 %v1870, %v2041
    %v2045 = vxor.u32 %v2044, 2147483648
    %v2046 = vmul.f32 %v2045, 1.442695
    %v2047 = vpow.pop %v2046
    %v2048 = vadd.f32 %v2047, 1.0
    %v2049 = vrcp.pop %v2048
    %v2050 = vmul.f32 1.0, %v2049
    %2052 = vrot.lane.b32.xlu0 %v2041, 64
    %v2053 = vpop.permute.xlu0 %2052
    %v2055 = vmul.f32 %v2050, %v2053
    %2057 = vrot.lane.b32.xlu0 %v2055, 64
    %v2058 = vpop.permute.xlu0 %2057
    %v2060 = vadd.f32 %v1870, %v2058
    %v2061 = vtanh.pop %v2060
    %v2062 = vsub.f32 1.0, %v2050
    %2064 = vrot.lane.b32.xlu0 %v2061, 96
    %v2065 = vpop.permute.xlu0 %2064
    %v2067 = vmul.f32 %v2062, %v2065
    %v2068 = vmul.f32 %v2050, 0.0
    %v2069 = vadd.f32 %v2067, %v2068
    %2071 = vrot.lane.b32.xlu0 %v2069, 96
    %v2072 = vpop.permute.xlu0 %2071
    %v2073 = vsel %vm1971, %v2072, 0
    %2075 = vmatprep.subr.mxu0 0.0
    %2076 = vmatpush1.msra.mxu0 %v1959
    %2077 = vmatprep.subr.mxu0 0.0
    %2078 = vmatpush1.msra.mxu0 %v1960
    %2079 = vmatprep.subr.mxu0 0.0
    %2080 = vmatpush1.msra.mxu0 %v1961
    %2081 = vmatprep.subr.mxu0 0.0
    %2082 = vmatpush1.msra.mxu0 %v1962
    %2083 = vmatprep.subr.mxu0 0.0
    %2084 = vmatpush1.msra.mxu0 0.0
    %2085 = vmatprep.subr.mxu0 0.0
    %2086 = vmatpush1.msra.mxu0 0.0
    %2087 = vmatprep.subr.mxu0 0.0
    %2088 = vmatpush1.msra.mxu0 0.0
    %2089 = vmatprep.subr.mxu0 0.0
    %2090 = vmatpush1.msra.mxu0 0.0
    %2091 = vmatprep.subr.mxu0 0.0
    %2092 = vmatpush1.msra.mxu0 0.0
    %2093 = vmatprep.subr.mxu0 0.0
    %2094 = vmatpush1.msra.mxu0 0.0
    %2095 = vmatprep.subr.mxu0 0.0
    %2096 = vmatpush1.msra.mxu0 0.0
    %2097 = vmatprep.subr.mxu0 0.0
    %2098 = vmatpush1.msra.mxu0 0.0
    %2099 = vmatprep.subr.mxu0 0.0
    %2100 = vmatpush1.msra.mxu0 0.0
    %2101 = vmatprep.subr.mxu0 0.0
    %2102 = vmatpush1.msra.mxu0 0.0
    %2103 = vmatprep.subr.mxu0 0.0
    %2104 = vmatpush1.msra.mxu0 0.0
    %2105 = vmatprep.subr.mxu0 0.0
    %2106 = vmatpush1.msra.mxu0 0.0
    %2107 = vmatprep.subr.mxu0 0.0
    %2108 = vmatpush1.msra.mxu0 0.0
    %2109 = vmatprep.subr.mxu0 0.0
    %2110 = vmatpush1.msra.mxu0 0.0
    %2111 = vmatprep.subr.mxu0 0.0
    %2112 = vmatpush1.msra.mxu0 0.0
    %2113 = vmatprep.subr.mxu0 0.0
    %2114 = vmatpush1.msra.mxu0 0.0
    %2115 = vmatprep.subr.mxu0 0.0
    %2116 = vmatpush1.msra.mxu0 0.0
    %2117 = vmatprep.subr.mxu0 0.0
    %2118 = vmatpush1.msra.mxu0 0.0
    %2119 = vmatprep.subr.mxu0 0.0
    %2120 = vmatpush1.msra.mxu0 0.0
    %2121 = vmatprep.subr.mxu0 0.0
    %2122 = vmatpush1.msra.mxu0 0.0
    %2123 = vmatprep.subr.mxu0 0.0
    %2124 = vmatpush1.msra.mxu0 0.0
    %2125 = vmatprep.subr.mxu0 0.0
    %2126 = vmatpush1.msra.mxu0 0.0
    %2127 = vmatprep.subr.mxu0 0.0
    %2128 = vmatpush1.msra.mxu0 0.0
    %2129 = vmatprep.subr.mxu0 0.0
    %2130 = vmatpush1.msra.mxu0 0.0
    %2131 = vmatprep.subr.mxu0 0.0
    %2132 = vmatpush1.msra.mxu0 0.0
    %2133 = vmatprep.subr.mxu0 0.0
    %2134 = vmatpush1.msra.mxu0 0.0
    %2135 = vmatprep.subr.mxu0 0.0
    %2136 = vmatpush1.msra.mxu0 0.0
    %2137 = vmatprep.subr.mxu0 0.0
    %2138 = vmatpush1.msra.mxu0 0.0
    %2139 = vmatprep.mubr.f32.mxu0 0.0
    %2140 = vmatmul.mubr.f32.gmra.mrb[0].mxu0 %v2073
    %v2141 = vpop.f32.mrb[0].mxu0
    %v2142 = vadd.f32 %v1963, %v2141
    %v2143 = vpop.f32.mrb[0].mxu0
    %2144 = vdwg.mxu0
    %v2146 = vrot.slane %v2142, 7
    %v2148 = vadd.f32 %v1870, %v2146
    %v2149 = vxor.u32 %v2148, 2147483648
    %v2150 = vmul.f32 %v2149, 1.442695
    %v2151 = vpow.pop %v2150
    %v2152 = vadd.f32 %v2151, 1.0
    %v2153 = vrcp.pop %v2152
    %v2154 = vmul.f32 1.0, %v2153
    %2155 = vrot.lane.b32.xlu0 %v2146, 64
    %v2156 = vpop.permute.xlu0 %2155
    %v2158 = vmul.f32 %v2154, %v2156
    %2160 = vrot.lane.b32.xlu0 %v2158, 64
    %v2161 = vpop.permute.xlu0 %2160
    %v2163 = vadd.f32 %v1870, %v2161
    %v2164 = vtanh.pop %v2163
    %v2165 = vsub.f32 1.0, %v2154
    %2167 = vrot.lane.b32.xlu0 %v2164, 96
    %v2168 = vpop.permute.xlu0 %2167
    %v2170 = vmul.f32 %v2165, %v2168
    %v2171 = vrot.slane %v2069, 7
    %v2173 = vmul.f32 %v2154, %v2171
    %v2174 = vadd.f32 %v2170, %v2173
    %v2176 = vrot.slane %v2174, 1
    %2177 = vrot.lane.b32.xlu0 %v2176, 96
    %v2178 = vpop.permute.xlu0 %2177
    %v2179 = vsel %vm1971, %v2178, 0
    %2181 = vmatprep.subr.mxu0 0.0
    %2182 = vmatpush1.msra.mxu0 %v1959
    %2183 = vmatprep.subr.mxu0 0.0
    %2184 = vmatpush1.msra.mxu0 %v1960
    %2185 = vmatprep.subr.mxu0 0.0
    %2186 = vmatpush1.msra.mxu0 %v1961
    %2187 = vmatprep.subr.mxu0 0.0
    %2188 = vmatpush1.msra.mxu0 %v1962
    %2189 = vmatprep.subr.mxu0 0.0
    %2190 = vmatpush1.msra.mxu0 0.0
    %2191 = vmatprep.subr.mxu0 0.0
    %2192 = vmatpush1.msra.mxu0 0.0
    %2193 = vmatprep.subr.mxu0 0.0
    %2194 = vmatpush1.msra.mxu0 0.0
    %2195 = vmatprep.subr.mxu0 0.0
    %2196 = vmatpush1.msra.mxu0 0.0
    %2197 = vmatprep.subr.mxu0 0.0
    %2198 = vmatpush1.msra.mxu0 0.0
    %2199 = vmatprep.subr.mxu0 0.0
    %2200 = vmatpush1.msra.mxu0 0.0
    %2201 = vmatprep.subr.mxu0 0.0
    %2202 = vmatpush1.msra.mxu0 0.0
    %2203 = vmatprep.subr.mxu0 0.0
    %2204 = vmatpush1.msra.mxu0 0.0
    %2205 = vmatprep.subr.mxu0 0.0
    %2206 = vmatpush1.msra.mxu0 0.0
    %2207 = vmatprep.subr.mxu0 0.0
    %2208 = vmatpush1.msra.mxu0 0.0
    %2209 = vmatprep.subr.mxu0 0.0
    %2210 = vmatpush1.msra.mxu0 0.0
    %2211 = vmatprep.subr.mxu0 0.0
    %2212 = vmatpush1.msra.mxu0 0.0
    %2213 = vmatprep.subr.mxu0 0.0
    %2214 = vmatpush1.msra.mxu0 0.0
    %2215 = vmatprep.subr.mxu0 0.0
    %2216 = vmatpush1.msra.mxu0 0.0
    %2217 = vmatprep.subr.mxu0 0.0
    %2218 = vmatpush1.msra.mxu0 0.0
    %2219 = vmatprep.subr.mxu0 0.0
    %2220 = vmatpush1.msra.mxu0 0.0
    %2221 = vmatprep.subr.mxu0 0.0
    %2222 = vmatpush1.msra.mxu0 0.0
    %2223 = vmatprep.subr.mxu0 0.0
    %2224 = vmatpush1.msra.mxu0 0.0
    %2225 = vmatprep.subr.mxu0 0.0
    %2226 = vmatpush1.msra.mxu0 0.0
    %2227 = vmatprep.subr.mxu0 0.0
    %2228 = vmatpush1.msra.mxu0 0.0
    %2229 = vmatprep.subr.mxu0 0.0
    %2230 = vmatpush1.msra.mxu0 0.0
    %2231 = vmatprep.subr.mxu0 0.0
    %2232 = vmatpush1.msra.mxu0 0.0
    %2233 = vmatprep.subr.mxu0 0.0
    %2234 = vmatpush1.msra.mxu0 0.0
    %2235 = vmatprep.subr.mxu0 0.0
    %2236 = vmatpush1.msra.mxu0 0.0
    %2237 = vmatprep.subr.mxu0 0.0
    %2238 = vmatpush1.msra.mxu0 0.0
    %2239 = vmatprep.subr.mxu0 0.0
    %2240 = vmatpush1.msra.mxu0 0.0
    %2241 = vmatprep.subr.mxu0 0.0
    %2242 = vmatpush1.msra.mxu0 0.0
    %2243 = vmatprep.subr.mxu0 0.0
    %2244 = vmatpush1.msra.mxu0 0.0
    %2245 = vmatprep.mubr.f32.mxu0 0.0
    %2246 = vmatmul.mubr.f32.gmra.mrb[0].mxu0 %v2179
    %v2247 = vpop.f32.mrb[0].mxu0
    %v2248 = vadd.f32 %v1963, %v2247
    %v2249 = vpop.f32.mrb[0].mxu0
    %2250 = vdwg.mxu0
    %v2252 = vrot.slane %v2248, 6
    %v2254 = vadd.f32 %v1870, %v2252
    %v2255 = vxor.u32 %v2254, 2147483648
    %v2256 = vmul.f32 %v2255, 1.442695
    %v2257 = vpow.pop %v2256
    %v2258 = vadd.f32 %v2257, 1.0
    %v2259 = vrcp.pop %v2258
    %v2260 = vmul.f32 1.0, %v2259
    %2261 = vrot.lane.b32.xlu0 %v2252, 64
    %v2262 = vpop.permute.xlu0 %2261
    %v2264 = vmul.f32 %v2260, %v2262
    %2266 = vrot.lane.b32.xlu0 %v2264, 64
    %v2267 = vpop.permute.xlu0 %2266
    %v2269 = vadd.f32 %v1870, %v2267
    %v2270 = vtanh.pop %v2269
    %v2271 = vsub.f32 1.0, %v2260
    %2273 = vrot.lane.b32.xlu0 %v2270, 96
    %v2274 = vpop.permute.xlu0 %2273
    %v2276 = vmul.f32 %v2271, %v2274
    %v2277 = vrot.slane %v2174, 7
    %v2279 = vmul.f32 %v2260, %v2277
    %v2280 = vadd.f32 %v2276, %v2279
    %v2282 = vrot.slane %v2280, 2
    %2283 = vrot.lane.b32.xlu0 %v2282, 96
    %v2284 = vpop.permute.xlu0 %2283
    %v2285 = vsel %vm1971, %v2284, 0
    %2287 = vmatprep.subr.mxu0 0.0
    %2288 = vmatpush1.msra.mxu0 %v1959
    %2289 = vmatprep.subr.mxu0 0.0
    %2290 = vmatpush1.msra.mxu0 %v1960
    %2291 = vmatprep.subr.mxu0 0.0
    %2292 = vmatpush1.msra.mxu0 %v1961
    %2293 = vmatprep.subr.mxu0 0.0
    %2294 = vmatpush1.msra.mxu0 %v1962
    %2295 = vmatprep.subr.mxu0 0.0
    %2296 = vmatpush1.msra.mxu0 0.0
    %2297 = vmatprep.subr.mxu0 0.0
    %2298 = vmatpush1.msra.mxu0 0.0
    %2299 = vmatprep.subr.mxu0 0.0
    %2300 = vmatpush1.msra.mxu0 0.0
    %2301 = vmatprep.subr.mxu0 0.0
    %2302 = vmatpush1.msra.mxu0 0.0
    %2303 = vmatprep.subr.mxu0 0.0
    %2304 = vmatpush1.msra.mxu0 0.0
    %2305 = vmatprep.subr.mxu0 0.0
    %2306 = vmatpush1.msra.mxu0 0.0
    %2307 = vmatprep.subr.mxu0 0.0
    %2308 = vmatpush1.msra.mxu0 0.0
    %2309 = vmatprep.subr.mxu0 0.0
    %2310 = vmatpush1.msra.mxu0 0.0
    %2311 = vmatprep.subr.mxu0 0.0
    %2312 = vmatpush1.msra.mxu0 0.0
    %2313 = vmatprep.subr.mxu0 0.0
    %2314 = vmatpush1.msra.mxu0 0.0
    %2315 = vmatprep.subr.mxu0 0.0
    %2316 = vmatpush1.msra.mxu0 0.0
    %2317 = vmatprep.subr.mxu0 0.0
    %2318 = vmatpush1.msra.mxu0 0.0
    %2319 = vmatprep.subr.mxu0 0.0
    %2320 = vmatpush1.msra.mxu0 0.0
    %2321 = vmatprep.subr.mxu0 0.0
    %2322 = vmatpush1.msra.mxu0 0.0
    %2323 = vmatprep.subr.mxu0 0.0
    %2324 = vmatpush1.msra.mxu0 0.0
    %2325 = vmatprep.subr.mxu0 0.0
    %2326 = vmatpush1.msra.mxu0 0.0
    %2327 = vmatprep.subr.mxu0 0.0
    %2328 = vmatpush1.msra.mxu0 0.0
    %2329 = vmatprep.subr.mxu0 0.0
    %2330 = vmatpush1.msra.mxu0 0.0
    %2331 = vmatprep.subr.mxu0 0.0
    %2332 = vmatpush1.msra.mxu0 0.0
    %2333 = vmatprep.subr.mxu0 0.0
    %2334 = vmatpush1.msra.mxu0 0.0
    %2335 = vmatprep.subr.mxu0 0.0
    %2336 = vmatpush1.msra.mxu0 0.0
    %2337 = vmatprep.subr.mxu0 0.0
    %2338 = vmatpush1.msra.mxu0 0.0
    %2339 = vmatprep.subr.mxu0 0.0
    %2340 = vmatpush1.msra.mxu0 0.0
    %2341 = vmatprep.subr.mxu0 0.0
    %2342 = vmatpush1.msra.mxu0 0.0
    %2343 = vmatprep.subr.mxu0 0.0
    %2344 = vmatpush1.msra.mxu0 0.0
    %2345 = vmatprep.subr.mxu0 0.0
    %2346 = vmatpush1.msra.mxu0 0.0
    %2347 = vmatprep.subr.mxu0 0.0
    %2348 = vmatpush1.msra.mxu0 0.0
    %2349 = vmatprep.subr.mxu0 0.0
    %2350 = vmatpush1.msra.mxu0 0.0
    %2351 = vmatprep.mubr.f32.mxu0 0.0
    %2352 = vmatmul.mubr.f32.gmra.mrb[0].mxu0 %v2285
    %v2353 = vpop.f32.mrb[0].mxu0
    %v2354 = vadd.f32 %v1963, %v2353
    %v2355 = vpop.f32.mrb[0].mxu0
    %2356 = vdwg.mxu0
    %v2358 = vrot.slane %v2354, 5
    %v2360 = vadd.f32 %v1870, %v2358
    %v2361 = vxor.u32 %v2360, 2147483648
    %v2362 = vmul.f32 %v2361, 1.442695
    %v2363 = vpow.pop %v2362
    %v2364 = vadd.f32 %v2363, 1.0
    %v2365 = vrcp.pop %v2364
    %v2366 = vmul.f32 1.0, %v2365
    %2367 = vrot.lane.b32.xlu0 %v2358, 64
    %v2368 = vpop.permute.xlu0 %2367
    %v2370 = vmul.f32 %v2366, %v2368
    %2372 = vrot.lane.b32.xlu0 %v2370, 64
    %v2373 = vpop.permute.xlu0 %2372
    %v2375 = vadd.f32 %v1870, %v2373
    %v2376 = vtanh.pop %v2375
    %v2377 = vsub.f32 1.0, %v2366
    %2379 = vrot.lane.b32.xlu0 %v2376, 96
    %v2380 = vpop.permute.xlu0 %2379
    %v2382 = vmul.f32 %v2377, %v2380
    %v2383 = vrot.slane %v2280, 7
    %v2385 = vmul.f32 %v2366, %v2383
    %v2386 = vadd.f32 %v2382, %v2385
    %2387 = vmatprep.subr.mxu0 0.0
    %2388 = vmatpush1.msra.mxu0 %v1965
    %2389 = vmatprep.subr.mxu0 0.0
    %2390 = vmatpush1.msra.mxu0 %v1966
    %2391 = vmatprep.subr.mxu0 0.0
    %2392 = vmatpush1.msra.mxu0 %v1967
    %2393 = vmatprep.subr.mxu0 0.0
    %2394 = vmatpush1.msra.mxu0 %v1968
    %2395 = vmatprep.subr.mxu0 0.0
    %2396 = vmatpush1.msra.mxu0 0.0
    %2397 = vmatprep.subr.mxu0 0.0
    %2398 = vmatpush1.msra.mxu0 0.0
    %2399 = vmatprep.subr.mxu0 0.0
    %2400 = vmatpush1.msra.mxu0 0.0
    %2401 = vmatprep.subr.mxu0 0.0
    %2402 = vmatpush1.msra.mxu0 0.0
    %2403 = vmatprep.subr.mxu0 0.0
    %2404 = vmatpush1.msra.mxu0 0.0
    %2405 = vmatprep.subr.mxu0 0.0
    %2406 = vmatpush1.msra.mxu0 0.0
    %2407 = vmatprep.subr.mxu0 0.0
    %2408 = vmatpush1.msra.mxu0 0.0
    %2409 = vmatprep.subr.mxu0 0.0
    %2410 = vmatpush1.msra.mxu0 0.0
    %2411 = vmatprep.subr.mxu0 0.0
    %2412 = vmatpush1.msra.mxu0 0.0
    %2413 = vmatprep.subr.mxu0 0.0
    %2414 = vmatpush1.msra.mxu0 0.0
    %2415 = vmatprep.subr.mxu0 0.0
    %2416 = vmatpush1.msra.mxu0 0.0
    %2417 = vmatprep.subr.mxu0 0.0
    %2418 = vmatpush1.msra.mxu0 0.0
    %2419 = vmatprep.subr.mxu0 0.0
    %2420 = vmatpush1.msra.mxu0 0.0
    %2421 = vmatprep.subr.mxu0 0.0
    %2422 = vmatpush1.msra.mxu0 0.0
    %2423 = vmatprep.subr.mxu0 0.0
    %2424 = vmatpush1.msra.mxu0 0.0
    %2425 = vmatprep.subr.mxu0 0.0
    %2426 = vmatpush1.msra.mxu0 0.0
    %2427 = vmatprep.subr.mxu0 0.0
    %2428 = vmatpush1.msra.mxu0 0.0
    %2429 = vmatprep.subr.mxu0 0.0
    %2430 = vmatpush1.msra.mxu0 0.0
    %2431 = vmatprep.subr.mxu0 0.0
    %2432 = vmatpush1.msra.mxu0 0.0
    %2433 = vmatprep.subr.mxu0 0.0
    %2434 = vmatpush1.msra.mxu0 0.0
    %2435 = vmatprep.subr.mxu0 0.0
    %2436 = vmatpush1.msra.mxu0 0.0
    %2437 = vmatprep.subr.mxu0 0.0
    %2438 = vmatpush1.msra.mxu0 0.0
    %2439 = vmatprep.subr.mxu0 0.0
    %2440 = vmatpush1.msra.mxu0 0.0
    %2441 = vmatprep.subr.mxu0 0.0
    %2442 = vmatpush1.msra.mxu0 0.0
    %2443 = vmatprep.subr.mxu0 0.0
    %2444 = vmatpush1.msra.mxu0 0.0
    %2445 = vmatprep.subr.mxu0 0.0
    %2446 = vmatpush1.msra.mxu0 0.0
    %2447 = vmatprep.subr.mxu0 0.0
    %2448 = vmatpush1.msra.mxu0 0.0
    %2449 = vmatprep.subr.mxu0 0.0
    %2450 = vmatpush1.msra.mxu0 0.0
    %2451 = vmatprep.mubr.f32.mxu0 0.0
    %2452 = vmatmul.mubr.f32.gmra.mrb[0].mxu0 %v1972
    %v2453 = vpop.f32.mrb[0].mxu0
    %v2454 = vadd.f32 %v1970, %v2453
    %v2455 = vpop.f32.mrb[0].mxu0
    %2456 = vdwg.mxu0
    %v2458 = vrot.slane %v2454, 5
    %v2460 = vadd.f32 %v1956, %v2458
    %v2461 = vxor.u32 %v2460, 2147483648
    %v2462 = vmul.f32 %v2461, 1.442695
    %v2463 = vpow.pop %v2462
    %v2464 = vadd.f32 %v2463, 1.0
    %v2465 = vrcp.pop %v2464
    %v2466 = vmul.f32 1.0, %v2465
    %2467 = vrot.lane.b32.xlu0 %v2458, 64
    %v2468 = vpop.permute.xlu0 %2467
    %v2470 = vmul.f32 %v2466, %v2468
    %2472 = vrot.lane.b32.xlu0 %v2470, 64
    %v2473 = vpop.permute.xlu0 %2472
    %v2475 = vadd.f32 %v1956, %v2473
    %v2476 = vtanh.pop %v2475
    %v2477 = vsub.f32 1.0, %v2466
    %2479 = vrot.lane.b32.xlu0 %v2476, 96
    %v2480 = vpop.permute.xlu0 %2479
    %v2482 = vmul.f32 %v2477, %v2480
    %v2483 = vmul.f32 %v2466, 0.0
    %v2484 = vadd.f32 %v2482, %v2483
    %v2486 = vrot.slane %v2484, 3
    %2487 = vrot.lane.b32.xlu0 %v2486, 96
    %v2488 = vpop.permute.xlu0 %2487
    %v2489 = vsel %vm1971, %v2488, 0
    %2491 = vmatprep.subr.mxu0 0.0
    %2492 = vmatpush1.msra.mxu0 %v1965
    %2493 = vmatprep.subr.mxu0 0.0
    %2494 = vmatpush1.msra.mxu0 %v1966
    %2495 = vmatprep.subr.mxu0 0.0
    %2496 = vmatpush1.msra.mxu0 %v1967
    %2497 = vmatprep.subr.mxu0 0.0
    %2498 = vmatpush1.msra.mxu0 %v1968
    %2499 = vmatprep.subr.mxu0 0.0
    %2500 = vmatpush1.msra.mxu0 0.0
    %2501 = vmatprep.subr.mxu0 0.0
    %2502 = vmatpush1.msra.mxu0 0.0
    %2503 = vmatprep.subr.mxu0 0.0
    %2504 = vmatpush1.msra.mxu0 0.0
    %2505 = vmatprep.subr.mxu0 0.0
    %2506 = vmatpush1.msra.mxu0 0.0
    %2507 = vmatprep.subr.mxu0 0.0
    %2508 = vmatpush1.msra.mxu0 0.0
    %2509 = vmatprep.subr.mxu0 0.0
    %2510 = vmatpush1.msra.mxu0 0.0
    %2511 = vmatprep.subr.mxu0 0.0
    %2512 = vmatpush1.msra.mxu0 0.0
    %2513 = vmatprep.subr.mxu0 0.0
    %2514 = vmatpush1.msra.mxu0 0.0
    %2515 = vmatprep.subr.mxu0 0.0
    %2516 = vmatpush1.msra.mxu0 0.0
    %2517 = vmatprep.subr.mxu0 0.0
    %2518 = vmatpush1.msra.mxu0 0.0
    %2519 = vmatprep.subr.mxu0 0.0
    %2520 = vmatpush1.msra.mxu0 0.0
    %2521 = vmatprep.subr.mxu0 0.0
    %2522 = vmatpush1.msra.mxu0 0.0
    %2523 = vmatprep.subr.mxu0 0.0
    %2524 = vmatpush1.msra.mxu0 0.0
    %2525 = vmatprep.subr.mxu0 0.0
    %2526 = vmatpush1.msra.mxu0 0.0
    %2527 = vmatprep.subr.mxu0 0.0
    %2528 = vmatpush1.msra.mxu0 0.0
    %2529 = vmatprep.subr.mxu0 0.0
    %2530 = vmatpush1.msra.mxu0 0.0
    %2531 = vmatprep.subr.mxu0 0.0
    %2532 = vmatpush1.msra.mxu0 0.0
    %2533 = vmatprep.subr.mxu0 0.0
    %2534 = vmatpush1.msra.mxu0 0.0
    %2535 = vmatprep.subr.mxu0 0.0
    %2536 = vmatpush1.msra.mxu0 0.0
    %2537 = vmatprep.subr.mxu0 0.0
    %2538 = vmatpush1.msra.mxu0 0.0
    %2539 = vmatprep.subr.mxu0 0.0
    %2540 = vmatpush1.msra.mxu0 0.0
    %2541 = vmatprep.subr.mxu0 0.0
    %2542 = vmatpush1.msra.mxu0 0.0
    %2543 = vmatprep.subr.mxu0 0.0
    %2544 = vmatpush1.msra.mxu0 0.0
    %2545 = vmatprep.subr.mxu0 0.0
    %2546 = vmatpush1.msra.mxu0 0.0
    %2547 = vmatprep.subr.mxu0 0.0
    %2548 = vmatpush1.msra.mxu0 0.0
    %2549 = vmatprep.subr.mxu0 0.0
    %2550 = vmatpush1.msra.mxu0 0.0
    %2551 = vmatprep.subr.mxu0 0.0
    %2552 = vmatpush1.msra.mxu0 0.0
    %2553 = vmatprep.subr.mxu0 0.0
    %2554 = vmatpush1.msra.mxu0 0.0
    %2555 = vmatprep.mubr.f32.mxu0 0.0
    %2556 = vmatmul.mubr.f32.gmra.mrb[0].mxu0 %v2489
    %v2557 = vpop.f32.mrb[0].mxu0
    %v2558 = vadd.f32 %v1970, %v2557
    %v2559 = vpop.f32.mrb[0].mxu0
    %2560 = vdwg.mxu0
    %v2562 = vrot.slane %v2558, 6
    %v2564 = vadd.f32 %v1956, %v2562
    %v2565 = vxor.u32 %v2564, 2147483648
    %v2566 = vmul.f32 %v2565, 1.442695
    %v2567 = vpow.pop %v2566
    %v2568 = vadd.f32 %v2567, 1.0
    %v2569 = vrcp.pop %v2568
    %v2570 = vmul.f32 1.0, %v2569
    %2571 = vrot.lane.b32.xlu0 %v2562, 64
    %v2572 = vpop.permute.xlu0 %2571
    %v2574 = vmul.f32 %v2570, %v2572
    %2576 = vrot.lane.b32.xlu0 %v2574, 64
    %v2577 = vpop.permute.xlu0 %2576
    %v2579 = vadd.f32 %v1956, %v2577
    %v2580 = vtanh.pop %v2579
    %v2581 = vsub.f32 1.0, %v2570
    %2583 = vrot.lane.b32.xlu0 %v2580, 96
    %v2584 = vpop.permute.xlu0 %2583
    %v2586 = vmul.f32 %v2581, %v2584
    %v2587 = vrot.slane %v2484, 1
    %v2589 = vmul.f32 %v2570, %v2587
    %v2590 = vadd.f32 %v2586, %v2589
    %v2592 = vrot.slane %v2590, 2
    %2593 = vrot.lane.b32.xlu0 %v2592, 96
    %v2594 = vpop.permute.xlu0 %2593
    %v2595 = vsel %vm1971, %v2594, 0
    %2597 = vmatprep.subr.mxu0 0.0
    %2598 = vmatpush1.msra.mxu0 %v1965
    %2599 = vmatprep.subr.mxu0 0.0
    %2600 = vmatpush1.msra.mxu0 %v1966
    %2601 = vmatprep.subr.mxu0 0.0
    %2602 = vmatpush1.msra.mxu0 %v1967
    %2603 = vmatprep.subr.mxu0 0.0
    %2604 = vmatpush1.msra.mxu0 %v1968
    %2605 = vmatprep.subr.mxu0 0.0
    %2606 = vmatpush1.msra.mxu0 0.0
    %2607 = vmatprep.subr.mxu0 0.0
    %2608 = vmatpush1.msra.mxu0 0.0
    %2609 = vmatprep.subr.mxu0 0.0
    %2610 = vmatpush1.msra.mxu0 0.0
    %2611 = vmatprep.subr.mxu0 0.0
    %2612 = vmatpush1.msra.mxu0 0.0
    %2613 = vmatprep.subr.mxu0 0.0
    %2614 = vmatpush1.msra.mxu0 0.0
    %2615 = vmatprep.subr.mxu0 0.0
    %2616 = vmatpush1.msra.mxu0 0.0
    %2617 = vmatprep.subr.mxu0 0.0
    %2618 = vmatpush1.msra.mxu0 0.0
    %2619 = vmatprep.subr.mxu0 0.0
    %2620 = vmatpush1.msra.mxu0 0.0
    %2621 = vmatprep.subr.mxu0 0.0
    %2622 = vmatpush1.msra.mxu0 0.0
    %2623 = vmatprep.subr.mxu0 0.0
    %2624 = vmatpush1.msra.mxu0 0.0
    %2625 = vmatprep.subr.mxu0 0.0
    %2626 = vmatpush1.msra.mxu0 0.0
    %2627 = vmatprep.subr.mxu0 0.0
    %2628 = vmatpush1.msra.mxu0 0.0
    %2629 = vmatprep.subr.mxu0 0.0
    %2630 = vmatpush1.msra.mxu0 0.0
    %2631 = vmatprep.subr.mxu0 0.0
    %2632 = vmatpush1.msra.mxu0 0.0
    %2633 = vmatprep.subr.mxu0 0.0
    %2634 = vmatpush1.msra.mxu0 0.0
    %2635 = vmatprep.subr.mxu0 0.0
    %2636 = vmatpush1.msra.mxu0 0.0
    %2637 = vmatprep.subr.mxu0 0.0
    %2638 = vmatpush1.msra.mxu0 0.0
    %2639 = vmatprep.subr.mxu0 0.0
    %2640 = vmatpush1.msra.mxu0 0.0
    %2641 = vmatprep.subr.mxu0 0.0
    %2642 = vmatpush1.msra.mxu0 0.0
    %2643 = vmatprep.subr.mxu0 0.0
    %2644 = vmatpush1.msra.mxu0 0.0
    %2645 = vmatprep.subr.mxu0 0.0
    %2646 = vmatpush1.msra.mxu0 0.0
    %2647 = vmatprep.subr.mxu0 0.0
    %2648 = vmatpush1.msra.mxu0 0.0
    %2649 = vmatprep.subr.mxu0 0.0
    %2650 = vmatpush1.msra.mxu0 0.0
    %2651 = vmatprep.subr.mxu0 0.0
    %2652 = vmatpush1.msra.mxu0 0.0
    %2653 = vmatprep.subr.mxu0 0.0
    %2654 = vmatpush1.msra.mxu0 0.0
    %2655 = vmatprep.subr.mxu0 0.0
    %2656 = vmatpush1.msra.mxu0 0.0
    %2657 = vmatprep.subr.mxu0 0.0
    %2658 = vmatpush1.msra.mxu0 0.0
    %2659 = vmatprep.subr.mxu0 0.0
    %2660 = vmatpush1.msra.mxu0 0.0
    %2661 = vmatprep.mubr.f32.mxu0 0.0
    %2662 = vmatmul.mubr.f32.gmra.mrb[0].mxu0 %v2595
    %v2663 = vpop.f32.mrb[0].mxu0
    %v2664 = vadd.f32 %v1970, %v2663
    %v2665 = vpop.f32.mrb[0].mxu0
    %2666 = vdwg.mxu0
    %v2668 = vrot.slane %v2664, 7
    %v2670 = vadd.f32 %v1956, %v2668
    %v2671 = vxor.u32 %v2670, 2147483648
    %v2672 = vmul.f32 %v2671, 1.442695
    %v2673 = vpow.pop %v2672
    %v2674 = vadd.f32 %v2673, 1.0
    %v2675 = vrcp.pop %v2674
    %v2676 = vmul.f32 1.0, %v2675
    %2677 = vrot.lane.b32.xlu0 %v2668, 64
    %v2678 = vpop.permute.xlu0 %2677
    %v2680 = vmul.f32 %v2676, %v2678
    %2682 = vrot.lane.b32.xlu0 %v2680, 64
    %v2683 = vpop.permute.xlu0 %2682
    %v2685 = vadd.f32 %v1956, %v2683
    %v2686 = vtanh.pop %v2685
    %v2687 = vsub.f32 1.0, %v2676
    %2689 = vrot.lane.b32.xlu0 %v2686, 96
    %v2690 = vpop.permute.xlu0 %2689
    %v2692 = vmul.f32 %v2687, %v2690
    %v2693 = vrot.slane %v2590, 1
    %v2695 = vmul.f32 %v2676, %v2693
    %v2696 = vadd.f32 %v2692, %v2695
    %v2698 = vrot.slane %v2696, 1
    %2699 = vrot.lane.b32.xlu0 %v2698, 96
    %v2700 = vpop.permute.xlu0 %2699
    %v2701 = vsel %vm1971, %v2700, 0
    %2703 = vmatprep.subr.mxu0 0.0
    %2704 = vmatpush1.msra.mxu0 %v1965
    %2705 = vmatprep.subr.mxu0 0.0
    %2706 = vmatpush1.msra.mxu0 %v1966
    %2707 = vmatprep.subr.mxu0 0.0
    %2708 = vmatpush1.msra.mxu0 %v1967
    %2709 = vmatprep.subr.mxu0 0.0
    %2710 = vmatpush1.msra.mxu0 %v1968
    %2711 = vmatprep.subr.mxu0 0.0
    %2712 = vmatpush1.msra.mxu0 0.0
    %2713 = vmatprep.subr.mxu0 0.0
    %2714 = vmatpush1.msra.mxu0 0.0
    %2715 = vmatprep.subr.mxu0 0.0
    %2716 = vmatpush1.msra.mxu0 0.0
    %2717 = vmatprep.subr.mxu0 0.0
    %2718 = vmatpush1.msra.mxu0 0.0
    %2719 = vmatprep.subr.mxu0 0.0
    %2720 = vmatpush1.msra.mxu0 0.0
    %2721 = vmatprep.subr.mxu0 0.0
    %2722 = vmatpush1.msra.mxu0 0.0
    %2723 = vmatprep.subr.mxu0 0.0
    %2724 = vmatpush1.msra.mxu0 0.0
    %2725 = vmatprep.subr.mxu0 0.0
    %2726 = vmatpush1.msra.mxu0 0.0
    %2727 = vmatprep.subr.mxu0 0.0
    %2728 = vmatpush1.msra.mxu0 0.0
    %2729 = vmatprep.subr.mxu0 0.0
    %2730 = vmatpush1.msra.mxu0 0.0
    %2731 = vmatprep.subr.mxu0 0.0
    %2732 = vmatpush1.msra.mxu0 0.0
    %2733 = vmatprep.subr.mxu0 0.0
    %2734 = vmatpush1.msra.mxu0 0.0
    %2735 = vmatprep.subr.mxu0 0.0
    %2736 = vmatpush1.msra.mxu0 0.0
    %2737 = vmatprep.subr.mxu0 0.0
    %2738 = vmatpush1.msra.mxu0 0.0
    %2739 = vmatprep.subr.mxu0 0.0
    %2740 = vmatpush1.msra.mxu0 0.0
    %2741 = vmatprep.subr.mxu0 0.0
    %2742 = vmatpush1.msra.mxu0 0.0
    %2743 = vmatprep.subr.mxu0 0.0
    %2744 = vmatpush1.msra.mxu0 0.0
    %2745 = vmatprep.subr.mxu0 0.0
    %2746 = vmatpush1.msra.mxu0 0.0
    %2747 = vmatprep.subr.mxu0 0.0
    %2748 = vmatpush1.msra.mxu0 0.0
    %2749 = vmatprep.subr.mxu0 0.0
    %2750 = vmatpush1.msra.mxu0 0.0
    %2751 = vmatprep.subr.mxu0 0.0
    %2752 = vmatpush1.msra.mxu0 0.0
    %2753 = vmatprep.subr.mxu0 0.0
    %2754 = vmatpush1.msra.mxu0 0.0
    %2755 = vmatprep.subr.mxu0 0.0
    %2756 = vmatpush1.msra.mxu0 0.0
    %2757 = vmatprep.subr.mxu0 0.0
    %2758 = vmatpush1.msra.mxu0 0.0
    %2759 = vmatprep.subr.mxu0 0.0
    %2760 = vmatpush1.msra.mxu0 0.0
    %2761 = vmatprep.subr.mxu0 0.0
    %2762 = vmatpush1.msra.mxu0 0.0
    %2763 = vmatprep.subr.mxu0 0.0
    %2764 = vmatpush1.msra.mxu0 0.0
    %2765 = vmatprep.subr.mxu0 0.0
    %2766 = vmatpush1.msra.mxu0 0.0
    %2767 = vmatprep.mubr.f32.mxu0 0.0
    %2768 = vmatmul.mubr.f32.gmra.mrb[0].mxu0 %v2701
    %v2769 = vpop.f32.mrb[0].mxu0
    %v2770 = vadd.f32 %v1970, %v2769
    %v2771 = vpop.f32.mrb[0].mxu0
    %2772 = vdwg.mxu0
    %v2773 = vadd.f32 %v1956, %v2770
    %v2774 = vxor.u32 %v2773, 2147483648
    %v2775 = vmul.f32 %v2774, 1.442695
    %v2776 = vpow.pop %v2775
    %v2777 = vadd.f32 %v2776, 1.0
    %v2778 = vrcp.pop %v2777
    %v2779 = vmul.f32 1.0, %v2778
    %2781 = vrot.lane.b32.xlu0 %v2770, 64
    %v2782 = vpop.permute.xlu0 %2781
    %v2784 = vmul.f32 %v2779, %v2782
    %2786 = vrot.lane.b32.xlu0 %v2784, 64
    %v2787 = vpop.permute.xlu0 %2786
    %v2789 = vadd.f32 %v1956, %v2787
    %v2790 = vtanh.pop %v2789
    %v2791 = vsub.f32 1.0, %v2779
    %2793 = vrot.lane.b32.xlu0 %v2790, 96
    %v2794 = vpop.permute.xlu0 %2793
    %v2796 = vmul.f32 %v2791, %v2794
    %v2798 = vmul.f32 %v2779, %v2698
    %v2799 = vadd.f32 %v2796, %v2798
    %vm2800 = vcmask 1040384
    %v2801 = vsel %vm2800, %v2069, %v2174
    %vm2802 = vcmask 1041408
    %v2803 = vsel %vm2802, %v2801, %v2280
    %vm2804 = vcmask 1042432
    %v2805 = vsel %vm2804, %v2803, %v2386
    %v2806 = vsel %vm2800, %v2799, %v2696
    %v2807 = vsel %vm2802, %v2806, %v2590
    %v2808 = vsel %vm2804, %v2807, %v2484
    %v2809 = vld [vmem:[%s15] sm:$0xff]
    %v2810 = vld [vmem:[%s15 + $0x8] sm:$0xff]
    %v2811 = vld [vmem:[%s15 + $0x10] sm:$0xff]
    %v2812 = vld [vmem:[%s15 + $0x18] sm:$0xff]
    %v2813 = vld [vmem:[%s15 + $0x20] sm:$0xff]
    %v2814 = vld [vmem:[%s15 + $0x28] sm:$0xff]
    %v2815 = vld [vmem:[%s15 + $0x30] sm:$0xff]
    %v2816 = vld [vmem:[%s15 + $0x38] sm:$0xff]
    %s2817 = scalar_lea.vmem %s15, 64
    %v2818 = vld [vmem:[%s2817] sm:$0xff]
    %v2819 = vld [vmem:[%s2817 + $0x8] sm:$0xff]
    %v2820 = vld [vmem:[%s2817 + $0x10] sm:$0xff]
    %v2821 = vld [vmem:[%s2817 + $0x18] sm:$0xff]
    %v2822 = vld [vmem:[%s2817 + $0x20] sm:$0xff]
    %v2823 = vld [vmem:[%s2817 + $0x28] sm:$0xff]
    %v2824 = vld [vmem:[%s2817 + $0x30] sm:$0xff]
    %v2825 = vld [vmem:[%s2817 + $0x38] sm:$0xff]
    %2827 = vrot.lane.b32.xlu0 %v2808, 96
    %v2828 = vpop.permute.xlu0 %2827
    %v2829 = vsel %vm1971, %v2828, 0
    %2831 = vmatprep.subr.mxu0 0.0
    %2832 = vmatpush1.msra.mxu0 %v2813
    %2833 = vmatprep.subr.mxu0 0.0
    %2834 = vmatpush1.msra.mxu0 %v2814
    %2835 = vmatprep.subr.mxu0 0.0
    %2836 = vmatpush1.msra.mxu0 %v2815
    %2837 = vmatprep.subr.mxu0 0.0
    %2838 = vmatpush1.msra.mxu0 %v2816
    %2839 = vmatprep.subr.mxu0 0.0
    %2840 = vmatpush1.msra.mxu0 0.0
    %2841 = vmatprep.subr.mxu0 0.0
    %2842 = vmatpush1.msra.mxu0 0.0
    %2843 = vmatprep.subr.mxu0 0.0
    %2844 = vmatpush1.msra.mxu0 0.0
    %2845 = vmatprep.subr.mxu0 0.0
    %2846 = vmatpush1.msra.mxu0 0.0
    %2847 = vmatprep.subr.mxu0 0.0
    %2848 = vmatpush1.msra.mxu0 0.0
    %2849 = vmatprep.subr.mxu0 0.0
    %2850 = vmatpush1.msra.mxu0 0.0
    %2851 = vmatprep.subr.mxu0 0.0
    %2852 = vmatpush1.msra.mxu0 0.0
    %2853 = vmatprep.subr.mxu0 0.0
    %2854 = vmatpush1.msra.mxu0 0.0
    %2855 = vmatprep.subr.mxu0 0.0
    %2856 = vmatpush1.msra.mxu0 0.0
    %2857 = vmatprep.subr.mxu0 0.0
    %2858 = vmatpush1.msra.mxu0 0.0
    %2859 = vmatprep.subr.mxu0 0.0
    %2860 = vmatpush1.msra.mxu0 0.0
    %2861 = vmatprep.subr.mxu0 0.0
    %2862 = vmatpush1.msra.mxu0 0.0
    %2863 = vmatprep.subr.mxu0 0.0
    %2864 = vmatpush1.msra.mxu0 0.0
    %2865 = vmatprep.subr.mxu0 0.0
    %2866 = vmatpush1.msra.mxu0 0.0
    %2867 = vmatprep.subr.mxu0 0.0
    %2868 = vmatpush1.msra.mxu0 0.0
    %2869 = vmatprep.subr.mxu0 0.0
    %2870 = vmatpush1.msra.mxu0 0.0
    %2871 = vmatprep.subr.mxu0 0.0
    %2872 = vmatpush1.msra.mxu0 0.0
    %2873 = vmatprep.subr.mxu0 0.0
    %2874 = vmatpush1.msra.mxu0 0.0
    %2875 = vmatprep.subr.mxu0 0.0
    %2876 = vmatpush1.msra.mxu0 0.0
    %2877 = vmatprep.subr.mxu0 0.0
    %2878 = vmatpush1.msra.mxu0 0.0
    %2879 = vmatprep.subr.mxu0 0.0
    %2880 = vmatpush1.msra.mxu0 0.0
    %2881 = vmatprep.subr.mxu0 0.0
    %2882 = vmatpush1.msra.mxu0 0.0
    %2883 = vmatprep.subr.mxu0 0.0
    %2884 = vmatpush1.msra.mxu0 0.0
    %2885 = vmatprep.subr.mxu0 0.0
    %2886 = vmatpush1.msra.mxu0 0.0
    %2887 = vmatprep.subr.mxu0 0.0
    %2888 = vmatpush1.msra.mxu0 0.0
    %2889 = vmatprep.subr.mxu0 0.0
    %2890 = vmatpush1.msra.mxu0 0.0
    %2891 = vmatprep.subr.mxu0 0.0
    %2892 = vmatpush1.msra.mxu0 0.0
    %2893 = vmatprep.subr.mxu0 0.0
    %2894 = vmatpush1.msra.mxu0 0.0
    %2895 = vmatprep.mubr.f32.mxu0 0.0
    %2896 = vmatmul.mubr.f32.gmra.mrb[0].mxu0 %v2829
    %v2897 = vpop.f32.mrb[0].mxu0
    %v2898 = vadd.f32 0.0, %v2897
    %v2899 = vpop.f32.mrb[0].mxu0
    %2900 = vdwg.mxu0
    %2902 = vrot.lane.b32.xlu0 %v2805, 96
    %v2903 = vpop.permute.xlu0 %2902
    %v2904 = vsel %vm1971, %v2903, 0
    %2906 = vmatprep.subr.mxu0 0.0
    %2907 = vmatpush1.msra.mxu0 %v2809
    %2908 = vmatprep.subr.mxu0 0.0
    %2909 = vmatpush1.msra.mxu0 %v2810
    %2910 = vmatprep.subr.mxu0 0.0
    %2911 = vmatpush1.msra.mxu0 %v2811
    %2912 = vmatprep.subr.mxu0 0.0
    %2913 = vmatpush1.msra.mxu0 %v2812
    %2914 = vmatprep.subr.mxu0 0.0
    %2915 = vmatpush1.msra.mxu0 0.0
    %2916 = vmatprep.subr.mxu0 0.0
    %2917 = vmatpush1.msra.mxu0 0.0
    %2918 = vmatprep.subr.mxu0 0.0
    %2919 = vmatpush1.msra.mxu0 0.0
    %2920 = vmatprep.subr.mxu0 0.0
    %2921 = vmatpush1.msra.mxu0 0.0
    %2922 = vmatprep.subr.mxu0 0.0
    %2923 = vmatpush1.msra.mxu0 0.0
    %2924 = vmatprep.subr.mxu0 0.0
    %2925 = vmatpush1.msra.mxu0 0.0
    %2926 = vmatprep.subr.mxu0 0.0
    %2927 = vmatpush1.msra.mxu0 0.0
    %2928 = vmatprep.subr.mxu0 0.0
    %2929 = vmatpush1.msra.mxu0 0.0
    %2930 = vmatprep.subr.mxu0 0.0
    %2931 = vmatpush1.msra.mxu0 0.0
    %2932 = vmatprep.subr.mxu0 0.0
    %2933 = vmatpush1.msra.mxu0 0.0
    %2934 = vmatprep.subr.mxu0 0.0
    %2935 = vmatpush1.msra.mxu0 0.0
    %2936 = vmatprep.subr.mxu0 0.0
    %2937 = vmatpush1.msra.mxu0 0.0
    %2938 = vmatprep.subr.mxu0 0.0
    %2939 = vmatpush1.msra.mxu0 0.0
    %2940 = vmatprep.subr.mxu0 0.0
    %2941 = vmatpush1.msra.mxu0 0.0
    %2942 = vmatprep.subr.mxu0 0.0
    %2943 = vmatpush1.msra.mxu0 0.0
    %2944 = vmatprep.subr.mxu0 0.0
    %2945 = vmatpush1.msra.mxu0 0.0
    %2946 = vmatprep.subr.mxu0 0.0
    %2947 = vmatpush1.msra.mxu0 0.0
    %2948 = vmatprep.subr.mxu0 0.0
    %2949 = vmatpush1.msra.mxu0 0.0
    %2950 = vmatprep.subr.mxu0 0.0
    %2951 = vmatpush1.msra.mxu0 0.0
    %2952 = vmatprep.subr.mxu0 0.0
    %2953 = vmatpush1.msra.mxu0 0.0
    %2954 = vmatprep.subr.mxu0 0.0
    %2955 = vmatpush1.msra.mxu0 0.0
    %2956 = vmatprep.subr.mxu0 0.0
    %2957 = vmatpush1.msra.mxu0 0.0
    %2958 = vmatprep.subr.mxu0 0.0
    %2959 = vmatpush1.msra.mxu0 0.0
    %2960 = vmatprep.subr.mxu0 0.0
    %2961 = vmatpush1.msra.mxu0 0.0
    %2962 = vmatprep.subr.mxu0 0.0
    %2963 = vmatpush1.msra.mxu0 0.0
    %2964 = vmatprep.subr.mxu0 0.0
    %2965 = vmatpush1.msra.mxu0 0.0
    %2966 = vmatprep.subr.mxu0 0.0
    %2967 = vmatpush1.msra.mxu0 0.0
    %2968 = vmatprep.subr.mxu0 0.0
    %2969 = vmatpush1.msra.mxu0 0.0
    %2970 = vmatprep.mubr.f32.mxu0 0.0
    %2971 = vmatmul.mubr.f32.gmra.mrb[0].mxu0 %v2904
    %v2972 = vpop.f32.mrb[0].mxu0
    %v2973 = vadd.f32 %v2898, %v2972
    %v2974 = vpop.f32.mrb[0].mxu0
    %2975 = vdwg.mxu0
    %v2976 = vld [vmem:[%s17] sm:$0x1]
    %v2978 = vlaneseq
    %v2979 = vshrl.u32 %v2978, 7
    %v2980 = vsub.s32 0, %v2979
    %v2981 = vrot.slane %v2976, %v2980
    %v2983 = vadd.f32 %v2973, %v2981
    %2984 = vmatprep.subr.mxu0 0.0
    %2985 = vmatpush1.msra.mxu0 %v2822
    %2986 = vmatprep.subr.mxu0 0.0
    %2987 = vmatpush1.msra.mxu0 %v2823
    %2988 = vmatprep.subr.mxu0 0.0
    %2989 = vmatpush1.msra.mxu0 %v2824
    %2990 = vmatprep.subr.mxu0 0.0
    %2991 = vmatpush1.msra.mxu0 %v2825
    %2992 = vmatprep.subr.mxu0 0.0
    %2993 = vmatpush1.msra.mxu0 0.0
    %2994 = vmatprep.subr.mxu0 0.0
    %2995 = vmatpush1.msra.mxu0 0.0
    %2996 = vmatprep.subr.mxu0 0.0
    %2997 = vmatpush1.msra.mxu0 0.0
    %2998 = vmatprep.subr.mxu0 0.0
    %2999 = vmatpush1.msra.mxu0 0.0
    %3000 = vmatprep.subr.mxu0 0.0
    %3001 = vmatpush1.msra.mxu0 0.0
    %3002 = vmatprep.subr.mxu0 0.0
    %3003 = vmatpush1.msra.mxu0 0.0
    %3004 = vmatprep.subr.mxu0 0.0
    %3005 = vmatpush1.msra.mxu0 0.0
    %3006 = vmatprep.subr.mxu0 0.0
    %3007 = vmatpush1.msra.mxu0 0.0
    %3008 = vmatprep.subr.mxu0 0.0
    %3009 = vmatpush1.msra.mxu0 0.0
    %3010 = vmatprep.subr.mxu0 0.0
    %3011 = vmatpush1.msra.mxu0 0.0
    %3012 = vmatprep.subr.mxu0 0.0
    %3013 = vmatpush1.msra.mxu0 0.0
    %3014 = vmatprep.subr.mxu0 0.0
    %3015 = vmatpush1.msra.mxu0 0.0
    %3016 = vmatprep.subr.mxu0 0.0
    %3017 = vmatpush1.msra.mxu0 0.0
    %3018 = vmatprep.subr.mxu0 0.0
    %3019 = vmatpush1.msra.mxu0 0.0
    %3020 = vmatprep.subr.mxu0 0.0
    %3021 = vmatpush1.msra.mxu0 0.0
    %3022 = vmatprep.subr.mxu0 0.0
    %3023 = vmatpush1.msra.mxu0 0.0
    %3024 = vmatprep.subr.mxu0 0.0
    %3025 = vmatpush1.msra.mxu0 0.0
    %3026 = vmatprep.subr.mxu0 0.0
    %3027 = vmatpush1.msra.mxu0 0.0
    %3028 = vmatprep.subr.mxu0 0.0
    %3029 = vmatpush1.msra.mxu0 0.0
    %3030 = vmatprep.subr.mxu0 0.0
    %3031 = vmatpush1.msra.mxu0 0.0
    %3032 = vmatprep.subr.mxu0 0.0
    %3033 = vmatpush1.msra.mxu0 0.0
    %3034 = vmatprep.subr.mxu0 0.0
    %3035 = vmatpush1.msra.mxu0 0.0
    %3036 = vmatprep.subr.mxu0 0.0
    %3037 = vmatpush1.msra.mxu0 0.0
    %3038 = vmatprep.subr.mxu0 0.0
    %3039 = vmatpush1.msra.mxu0 0.0
    %3040 = vmatprep.subr.mxu0 0.0
    %3041 = vmatpush1.msra.mxu0 0.0
    %3042 = vmatprep.subr.mxu0 0.0
    %3043 = vmatpush1.msra.mxu0 0.0
    %3044 = vmatprep.subr.mxu0 0.0
    %3045 = vmatpush1.msra.mxu0 0.0
    %3046 = vmatprep.subr.mxu0 0.0
    %3047 = vmatpush1.msra.mxu0 0.0
    %3048 = vmatprep.mubr.f32.mxu0 0.0
    %3049 = vmatmul.mubr.f32.gmra.mrb[0].mxu0 %v2829
    %v3050 = vpop.f32.mrb[0].mxu0
    %v3051 = vadd.f32 0.0, %v3050
    %v3052 = vpop.f32.mrb[0].mxu0
    %3053 = vdwg.mxu0
    %3054 = vmatprep.subr.mxu0 0.0
    %3055 = vmatpush1.msra.mxu0 %v2818
    %3056 = vmatprep.subr.mxu0 0.0
    %3057 = vmatpush1.msra.mxu0 %v2819
    %3058 = vmatprep.subr.mxu0 0.0
    %3059 = vmatpush1.msra.mxu0 %v2820
    %3060 = vmatprep.subr.mxu0 0.0
    %3061 = vmatpush1.msra.mxu0 %v2821
    %3062 = vmatprep.subr.mxu0 0.0
    %3063 = vmatpush1.msra.mxu0 0.0
    %3064 = vmatprep.subr.mxu0 0.0
    %3065 = vmatpush1.msra.mxu0 0.0
    %3066 = vmatprep.subr.mxu0 0.0
    %3067 = vmatpush1.msra.mxu0 0.0
    %3068 = vmatprep.subr.mxu0 0.0
    %3069 = vmatpush1.msra.mxu0 0.0
    %3070 = vmatprep.subr.mxu0 0.0
    %3071 = vmatpush1.msra.mxu0 0.0
    %3072 = vmatprep.subr.mxu0 0.0
    %3073 = vmatpush1.msra.mxu0 0.0
    %3074 = vmatprep.subr.mxu0 0.0
    %3075 = vmatpush1.msra.mxu0 0.0
    %3076 = vmatprep.subr.mxu0 0.0
    %3077 = vmatpush1.msra.mxu0 0.0
    %3078 = vmatprep.subr.mxu0 0.0
    %3079 = vmatpush1.msra.mxu0 0.0
    %3080 = vmatprep.subr.mxu0 0.0
    %3081 = vmatpush1.msra.mxu0 0.0
    %3082 = vmatprep.subr.mxu0 0.0
    %3083 = vmatpush1.msra.mxu0 0.0
    %3084 = vmatprep.subr.mxu0 0.0
    %3085 = vmatpush1.msra.mxu0 0.0
    %3086 = vmatprep.subr.mxu0 0.0
    %3087 = vmatpush1.msra.mxu0 0.0
    %3088 = vmatprep.subr.mxu0 0.0
    %3089 = vmatpush1.msra.mxu0 0.0
    %3090 = vmatprep.subr.mxu0 0.0
    %3091 = vmatpush1.msra.mxu0 0.0
    %3092 = vmatprep.subr.mxu0 0.0
    %3093 = vmatpush1.msra.mxu0 0.0
    %3094 = vmatprep.subr.mxu0 0.0
    %3095 = vmatpush1.msra.mxu0 0.0
    %3096 = vmatprep.subr.mxu0 0.0
    %3097 = vmatpush1.msra.mxu0 0.0
    %3098 = vmatprep.subr.mxu0 0.0
    %3099 = vmatpush1.msra.mxu0 0.0
    %3100 = vmatprep.subr.mxu0 0.0
    %3101 = vmatpush1.msra.mxu0 0.0
    %3102 = vmatprep.subr.mxu0 0.0
    %3103 = vmatpush1.msra.mxu0 0.0
    %3104 = vmatprep.subr.mxu0 0.0
    %3105 = vmatpush1.msra.mxu0 0.0
    %3106 = vmatprep.subr.mxu0 0.0
    %3107 = vmatpush1.msra.mxu0 0.0
    %3108 = vmatprep.subr.mxu0 0.0
    %3109 = vmatpush1.msra.mxu0 0.0
    %3110 = vmatprep.subr.mxu0 0.0
    %3111 = vmatpush1.msra.mxu0 0.0
    %3112 = vmatprep.subr.mxu0 0.0
    %3113 = vmatpush1.msra.mxu0 0.0
    %3114 = vmatprep.subr.mxu0 0.0
    %3115 = vmatpush1.msra.mxu0 0.0
    %3116 = vmatprep.subr.mxu0 0.0
    %3117 = vmatpush1.msra.mxu0 0.0
    %3118 = vmatprep.mubr.f32.mxu0 0.0
    %3119 = vmatmul.mubr.f32.gmra.mrb[0].mxu0 %v2904
    %v3120 = vpop.f32.mrb[0].mxu0
    %v3121 = vadd.f32 %v3051, %v3120
    %v3122 = vpop.f32.mrb[0].mxu0
    %3123 = vdwg.mxu0
    %s3124 = scalar_lea.vmem %s17, 1
    %v3125 = vld [vmem:[%s3124] sm:$0x1]
    %v3127 = vlaneseq
    %v3128 = vshrl.u32 %v3127, 7
    %v3129 = vsub.s32 0, %v3128
    %v3130 = vrot.slane %v3125, %v3129
    %v3132 = vadd.f32 %v3121, %v3130
    %v3133 = vld [vmem:[%s16] sm:$0xff]
    %v3134 = vld [vmem:[%s16 + $0x8] sm:$0xff]
    %v3135 = vld [vmem:[%s16 + $0x10] sm:$0xff]
    %v3136 = vld [vmem:[%s16 + $0x18] sm:$0xff]
    %v3137 = vld [vmem:[%s18] sm:$0x1]
    %s3138 = scalar_lea.vmem %s16, 32
    %v3139 = vld [vmem:[%s3138] sm:$0xff]
    %v3140 = vld [vmem:[%s3138 + $0x8] sm:$0xff]
    %v3141 = vld [vmem:[%s3138 + $0x10] sm:$0xff]
    %v3142 = vld [vmem:[%s3138 + $0x18] sm:$0xff]
    %s3143 = scalar_lea.vmem %s18, 1
    %v3144 = vld [vmem:[%s3143] sm:$0x1]
    %3145 = vmatprep.subr.mxu0 0.0
    %3146 = vmatpush1.msra.mxu0 %v3133
    %3147 = vmatprep.subr.mxu0 0.0
    %3148 = vmatpush1.msra.mxu0 %v3134
    %3149 = vmatprep.subr.mxu0 0.0
    %3150 = vmatpush1.msra.mxu0 %v3135
    %3151 = vmatprep.subr.mxu0 0.0
    %3152 = vmatpush1.msra.mxu0 %v3136
    %3153 = vmatprep.subr.mxu0 0.0
    %3154 = vmatpush1.msra.mxu0 0.0
    %3155 = vmatprep.subr.mxu0 0.0
    %3156 = vmatpush1.msra.mxu0 0.0
    %3157 = vmatprep.subr.mxu0 0.0
    %3158 = vmatpush1.msra.mxu0 0.0
    %3159 = vmatprep.subr.mxu0 0.0
    %3160 = vmatpush1.msra.mxu0 0.0
    %3161 = vmatprep.subr.mxu0 0.0
    %3162 = vmatpush1.msra.mxu0 0.0
    %3163 = vmatprep.subr.mxu0 0.0
    %3164 = vmatpush1.msra.mxu0 0.0
    %3165 = vmatprep.subr.mxu0 0.0
    %3166 = vmatpush1.msra.mxu0 0.0
    %3167 = vmatprep.subr.mxu0 0.0
    %3168 = vmatpush1.msra.mxu0 0.0
    %3169 = vmatprep.subr.mxu0 0.0
    %3170 = vmatpush1.msra.mxu0 0.0
    %3171 = vmatprep.subr.mxu0 0.0
    %3172 = vmatpush1.msra.mxu0 0.0
    %3173 = vmatprep.subr.mxu0 0.0
    %3174 = vmatpush1.msra.mxu0 0.0
    %3175 = vmatprep.subr.mxu0 0.0
    %3176 = vmatpush1.msra.mxu0 0.0
    %3177 = vmatprep.subr.mxu0 0.0
    %3178 = vmatpush1.msra.mxu0 0.0
    %3179 = vmatprep.subr.mxu0 0.0
    %3180 = vmatpush1.msra.mxu0 0.0
    %3181 = vmatprep.subr.mxu0 0.0
    %3182 = vmatpush1.msra.mxu0 0.0
    %3183 = vmatprep.subr.mxu0 0.0
    %3184 = vmatpush1.msra.mxu0 0.0
    %3185 = vmatprep.subr.mxu0 0.0
    %3186 = vmatpush1.msra.mxu0 0.0
    %3187 = vmatprep.subr.mxu0 0.0
    %3188 = vmatpush1.msra.mxu0 0.0
    %3189 = vmatprep.subr.mxu0 0.0
    %3190 = vmatpush1.msra.mxu0 0.0
    %3191 = vmatprep.subr.mxu0 0.0
    %3192 = vmatpush1.msra.mxu0 0.0
    %3193 = vmatprep.subr.mxu0 0.0
    %3194 = vmatpush1.msra.mxu0 0.0
    %3195 = vmatprep.subr.mxu0 0.0
    %3196 = vmatpush1.msra.mxu0 0.0
    %3197 = vmatprep.subr.mxu0 0.0
    %3198 = vmatpush1.msra.mxu0 0.0
    %3199 = vmatprep.subr.mxu0 0.0
    %3200 = vmatpush1.msra.mxu0 0.0
    %3201 = vmatprep.subr.mxu0 0.0
    %3202 = vmatpush1.msra.mxu0 0.0
    %3203 = vmatprep.subr.mxu0 0.0
    %3204 = vmatpush1.msra.mxu0 0.0
    %3205 = vmatprep.subr.mxu0 0.0
    %3206 = vmatpush1.msra.mxu0 0.0
    %3207 = vmatprep.subr.mxu0 0.0
    %3208 = vmatpush1.msra.mxu0 0.0
    %3209 = vmatprep.mubr.f32.mxu0 0.0
    %3210 = vmatmul.mubr.f32.gmra.mrb[0].mxu0 %v1972
    %v3211 = vpop.f32.mrb[0].mxu0
    %v3212 = vadd.f32 %v3137, %v3211
    %v3213 = vpop.f32.mrb[0].mxu0
    %3214 = vdwg.mxu0
    %v3215 = vadd.f32 %v2983, %v3212
    %v3216 = vxor.u32 %v3215, 2147483648
    %v3217 = vmul.f32 %v3216, 1.442695
    %v3218 = vpow.pop %v3217
    %v3219 = vadd.f32 %v3218, 1.0
    %v3220 = vrcp.pop %v3219
    %v3221 = vmul.f32 1.0, %v3220
    %3223 = vrot.lane.b32.xlu0 %v3212, 64
    %v3224 = vpop.permute.xlu0 %3223
    %v3226 = vmul.f32 %v3221, %v3224
    %3228 = vrot.lane.b32.xlu0 %v3226, 64
    %v3229 = vpop.permute.xlu0 %3228
    %v3231 = vadd.f32 %v2983, %v3229
    %v3232 = vtanh.pop %v3231
    %v3233 = vsub.f32 1.0, %v3221
    %3235 = vrot.lane.b32.xlu0 %v3232, 96
    %v3236 = vpop.permute.xlu0 %3235
    %v3238 = vmul.f32 %v3233, %v3236
    %v3239 = vmul.f32 %v3221, 0.0
    %v3240 = vadd.f32 %v3238, %v3239
    %3242 = vrot.lane.b32.xlu0 %v3240, 96
    %v3243 = vpop.permute.xlu0 %3242
    %v3244 = vsel %vm1971, %v3243, 0
    %3246 = vmatprep.subr.mxu0 0.0
    %3247 = vmatpush1.msra.mxu0 %v3133
    %3248 = vmatprep.subr.mxu0 0.0
    %3249 = vmatpush1.msra.mxu0 %v3134
    %3250 = vmatprep.subr.mxu0 0.0
    %3251 = vmatpush1.msra.mxu0 %v3135
    %3252 = vmatprep.subr.mxu0 0.0
    %3253 = vmatpush1.msra.mxu0 %v3136
    %3254 = vmatprep.subr.mxu0 0.0
    %3255 = vmatpush1.msra.mxu0 0.0
    %3256 = vmatprep.subr.mxu0 0.0
    %3257 = vmatpush1.msra.mxu0 0.0
    %3258 = vmatprep.subr.mxu0 0.0
    %3259 = vmatpush1.msra.mxu0 0.0
    %3260 = vmatprep.subr.mxu0 0.0
    %3261 = vmatpush1.msra.mxu0 0.0
    %3262 = vmatprep.subr.mxu0 0.0
    %3263 = vmatpush1.msra.mxu0 0.0
    %3264 = vmatprep.subr.mxu0 0.0
    %3265 = vmatpush1.msra.mxu0 0.0
    %3266 = vmatprep.subr.mxu0 0.0
    %3267 = vmatpush1.msra.mxu0 0.0
    %3268 = vmatprep.subr.mxu0 0.0
    %3269 = vmatpush1.msra.mxu0 0.0
    %3270 = vmatprep.subr.mxu0 0.0
    %3271 = vmatpush1.msra.mxu0 0.0
    %3272 = vmatprep.subr.mxu0 0.0
    %3273 = vmatpush1.msra.mxu0 0.0
    %3274 = vmatprep.subr.mxu0 0.0
    %3275 = vmatpush1.msra.mxu0 0.0
    %3276 = vmatprep.subr.mxu0 0.0
    %3277 = vmatpush1.msra.mxu0 0.0
    %3278 = vmatprep.subr.mxu0 0.0
    %3279 = vmatpush1.msra.mxu0 0.0
    %3280 = vmatprep.subr.mxu0 0.0
    %3281 = vmatpush1.msra.mxu0 0.0
    %3282 = vmatprep.subr.mxu0 0.0
    %3283 = vmatpush1.msra.mxu0 0.0
    %3284 = vmatprep.subr.mxu0 0.0
    %3285 = vmatpush1.msra.mxu0 0.0
    %3286 = vmatprep.subr.mxu0 0.0
    %3287 = vmatpush1.msra.mxu0 0.0
    %3288 = vmatprep.subr.mxu0 0.0
    %3289 = vmatpush1.msra.mxu0 0.0
    %3290 = vmatprep.subr.mxu0 0.0
    %3291 = vmatpush1.msra.mxu0 0.0
    %3292 = vmatprep.subr.mxu0 0.0
    %3293 = vmatpush1.msra.mxu0 0.0
    %3294 = vmatprep.subr.mxu0 0.0
    %3295 = vmatpush1.msra.mxu0 0.0
    %3296 = vmatprep.subr.mxu0 0.0
    %3297 = vmatpush1.msra.mxu0 0.0
    %3298 = vmatprep.subr.mxu0 0.0
    %3299 = vmatpush1.msra.mxu0 0.0
    %3300 = vmatprep.subr.mxu0 0.0
    %3301 = vmatpush1.msra.mxu0 0.0
    %3302 = vmatprep.subr.mxu0 0.0
    %3303 = vmatpush1.msra.mxu0 0.0
    %3304 = vmatprep.subr.mxu0 0.0
    %3305 = vmatpush1.msra.mxu0 0.0
    %3306 = vmatprep.subr.mxu0 0.0
    %3307 = vmatpush1.msra.mxu0 0.0
    %3308 = vmatprep.subr.mxu0 0.0
    %3309 = vmatpush1.msra.mxu0 0.0
    %3310 = vmatprep.mubr.f32.mxu0 0.0
    %3311 = vmatmul.mubr.f32.gmra.mrb[0].mxu0 %v3244
    %v3312 = vpop.f32.mrb[0].mxu0
    %v3313 = vadd.f32 %v3137, %v3312
    %v3314 = vpop.f32.mrb[0].mxu0
    %3315 = vdwg.mxu0
    %v3317 = vrot.slane %v3313, 7
    %v3319 = vadd.f32 %v2983, %v3317
    %v3320 = vxor.u32 %v3319, 2147483648
    %v3321 = vmul.f32 %v3320, 1.442695
    %v3322 = vpow.pop %v3321
    %v3323 = vadd.f32 %v3322, 1.0
    %v3324 = vrcp.pop %v3323
    %v3325 = vmul.f32 1.0, %v3324
    %3326 = vrot.lane.b32.xlu0 %v3317, 64
    %v3327 = vpop.permute.xlu0 %3326
    %v3329 = vmul.f32 %v3325, %v3327
    %3331 = vrot.lane.b32.xlu0 %v3329, 64
    %v3332 = vpop.permute.xlu0 %3331
    %v3334 = vadd.f32 %v2983, %v3332
    %v3335 = vtanh.pop %v3334
    %v3336 = vsub.f32 1.0, %v3325
    %3338 = vrot.lane.b32.xlu0 %v3335, 96
    %v3339 = vpop.permute.xlu0 %3338
    %v3341 = vmul.f32 %v3336, %v3339
    %v3342 = vrot.slane %v3240, 7
    %v3344 = vmul.f32 %v3325, %v3342
    %v3345 = vadd.f32 %v3341, %v3344
    %v3347 = vrot.slane %v3345, 1
    %3348 = vrot.lane.b32.xlu0 %v3347, 96
    %v3349 = vpop.permute.xlu0 %3348
    %v3350 = vsel %vm1971, %v3349, 0
    %3352 = vmatprep.subr.mxu0 0.0
    %3353 = vmatpush1.msra.mxu0 %v3133
    %3354 = vmatprep.subr.mxu0 0.0
    %3355 = vmatpush1.msra.mxu0 %v3134
    %3356 = vmatprep.subr.mxu0 0.0
    %3357 = vmatpush1.msra.mxu0 %v3135
    %3358 = vmatprep.subr.mxu0 0.0
    %3359 = vmatpush1.msra.mxu0 %v3136
    %3360 = vmatprep.subr.mxu0 0.0
    %3361 = vmatpush1.msra.mxu0 0.0
    %3362 = vmatprep.subr.mxu0 0.0
    %3363 = vmatpush1.msra.mxu0 0.0
    %3364 = vmatprep.subr.mxu0 0.0
    %3365 = vmatpush1.msra.mxu0 0.0
    %3366 = vmatprep.subr.mxu0 0.0
    %3367 = vmatpush1.msra.mxu0 0.0
    %3368 = vmatprep.subr.mxu0 0.0
    %3369 = vmatpush1.msra.mxu0 0.0
    %3370 = vmatprep.subr.mxu0 0.0
    %3371 = vmatpush1.msra.mxu0 0.0
    %3372 = vmatprep.subr.mxu0 0.0
    %3373 = vmatpush1.msra.mxu0 0.0
    %3374 = vmatprep.subr.mxu0 0.0
    %3375 = vmatpush1.msra.mxu0 0.0
    %3376 = vmatprep.subr.mxu0 0.0
    %3377 = vmatpush1.msra.mxu0 0.0
    %3378 = vmatprep.subr.mxu0 0.0
    %3379 = vmatpush1.msra.mxu0 0.0
    %3380 = vmatprep.subr.mxu0 0.0
    %3381 = vmatpush1.msra.mxu0 0.0
    %3382 = vmatprep.subr.mxu0 0.0
    %3383 = vmatpush1.msra.mxu0 0.0
    %3384 = vmatprep.subr.mxu0 0.0
    %3385 = vmatpush1.msra.mxu0 0.0
    %3386 = vmatprep.subr.mxu0 0.0
    %3387 = vmatpush1.msra.mxu0 0.0
    %3388 = vmatprep.subr.mxu0 0.0
    %3389 = vmatpush1.msra.mxu0 0.0
    %3390 = vmatprep.subr.mxu0 0.0
    %3391 = vmatpush1.msra.mxu0 0.0
    %3392 = vmatprep.subr.mxu0 0.0
    %3393 = vmatpush1.msra.mxu0 0.0
    %3394 = vmatprep.subr.mxu0 0.0
    %3395 = vmatpush1.msra.mxu0 0.0
    %3396 = vmatprep.subr.mxu0 0.0
    %3397 = vmatpush1.msra.mxu0 0.0
    %3398 = vmatprep.subr.mxu0 0.0
    %3399 = vmatpush1.msra.mxu0 0.0
    %3400 = vmatprep.subr.mxu0 0.0
    %3401 = vmatpush1.msra.mxu0 0.0
    %3402 = vmatprep.subr.mxu0 0.0
    %3403 = vmatpush1.msra.mxu0 0.0
    %3404 = vmatprep.subr.mxu0 0.0
    %3405 = vmatpush1.msra.mxu0 0.0
    %3406 = vmatprep.subr.mxu0 0.0
    %3407 = vmatpush1.msra.mxu0 0.0
    %3408 = vmatprep.subr.mxu0 0.0
    %3409 = vmatpush1.msra.mxu0 0.0
    %3410 = vmatprep.subr.mxu0 0.0
    %3411 = vmatpush1.msra.mxu0 0.0
    %3412 = vmatprep.subr.mxu0 0.0
    %3413 = vmatpush1.msra.mxu0 0.0
    %3414 = vmatprep.subr.mxu0 0.0
    %3415 = vmatpush1.msra.mxu0 0.0
    %3416 = vmatprep.mubr.f32.mxu0 0.0
    %3417 = vmatmul.mubr.f32.gmra.mrb[0].mxu0 %v3350
    %v3418 = vpop.f32.mrb[0].mxu0
    %v3419 = vadd.f32 %v3137, %v3418
    %v3420 = vpop.f32.mrb[0].mxu0
    %3421 = vdwg.mxu0
    %v3423 = vrot.slane %v3419, 6
    %v3425 = vadd.f32 %v2983, %v3423
    %v3426 = vxor.u32 %v3425, 2147483648
    %v3427 = vmul.f32 %v3426, 1.442695
    %v3428 = vpow.pop %v3427
    %v3429 = vadd.f32 %v3428, 1.0
    %v3430 = vrcp.pop %v3429
    %v3431 = vmul.f32 1.0, %v3430
    %3432 = vrot.lane.b32.xlu0 %v3423, 64
    %v3433 = vpop.permute.xlu0 %3432
    %v3435 = vmul.f32 %v3431, %v3433
    %3437 = vrot.lane.b32.xlu0 %v3435, 64
    %v3438 = vpop.permute.xlu0 %3437
    %v3440 = vadd.f32 %v2983, %v3438
    %v3441 = vtanh.pop %v3440
    %v3442 = vsub.f32 1.0, %v3431
    %3444 = vrot.lane.b32.xlu0 %v3441, 96
    %v3445 = vpop.permute.xlu0 %3444
    %v3447 = vmul.f32 %v3442, %v3445
    %v3448 = vrot.slane %v3345, 7
    %v3450 = vmul.f32 %v3431, %v3448
    %v3451 = vadd.f32 %v3447, %v3450
    %v3453 = vrot.slane %v3451, 2
    %3454 = vrot.lane.b32.xlu0 %v3453, 96
    %v3455 = vpop.permute.xlu0 %3454
    %v3456 = vsel %vm1971, %v3455, 0
    %3458 = vmatprep.subr.mxu0 0.0
    %3459 = vmatpush1.msra.mxu0 %v3133
    %3460 = vmatprep.subr.mxu0 0.0
    %3461 = vmatpush1.msra.mxu0 %v3134
    %3462 = vmatprep.subr.mxu0 0.0
    %3463 = vmatpush1.msra.mxu0 %v3135
    %3464 = vmatprep.subr.mxu0 0.0
    %3465 = vmatpush1.msra.mxu0 %v3136
    %3466 = vmatprep.subr.mxu0 0.0
    %3467 = vmatpush1.msra.mxu0 0.0
    %3468 = vmatprep.subr.mxu0 0.0
    %3469 = vmatpush1.msra.mxu0 0.0
    %3470 = vmatprep.subr.mxu0 0.0
    %3471 = vmatpush1.msra.mxu0 0.0
    %3472 = vmatprep.subr.mxu0 0.0
    %3473 = vmatpush1.msra.mxu0 0.0
    %3474 = vmatprep.subr.mxu0 0.0
    %3475 = vmatpush1.msra.mxu0 0.0
    %3476 = vmatprep.subr.mxu0 0.0
    %3477 = vmatpush1.msra.mxu0 0.0
    %3478 = vmatprep.subr.mxu0 0.0
    %3479 = vmatpush1.msra.mxu0 0.0
    %3480 = vmatprep.subr.mxu0 0.0
    %3481 = vmatpush1.msra.mxu0 0.0
    %3482 = vmatprep.subr.mxu0 0.0
    %3483 = vmatpush1.msra.mxu0 0.0
    %3484 = vmatprep.subr.mxu0 0.0
    %3485 = vmatpush1.msra.mxu0 0.0
    %3486 = vmatprep.subr.mxu0 0.0
    %3487 = vmatpush1.msra.mxu0 0.0
    %3488 = vmatprep.subr.mxu0 0.0
    %3489 = vmatpush1.msra.mxu0 0.0
    %3490 = vmatprep.subr.mxu0 0.0
    %3491 = vmatpush1.msra.mxu0 0.0
    %3492 = vmatprep.subr.mxu0 0.0
    %3493 = vmatpush1.msra.mxu0 0.0
    %3494 = vmatprep.subr.mxu0 0.0
    %3495 = vmatpush1.msra.mxu0 0.0
    %3496 = vmatprep.subr.mxu0 0.0
    %3497 = vmatpush1.msra.mxu0 0.0
    %3498 = vmatprep.subr.mxu0 0.0
    %3499 = vmatpush1.msra.mxu0 0.0
    %3500 = vmatprep.subr.mxu0 0.0
    %3501 = vmatpush1.msra.mxu0 0.0
    %3502 = vmatprep.subr.mxu0 0.0
    %3503 = vmatpush1.msra.mxu0 0.0
    %3504 = vmatprep.subr.mxu0 0.0
    %3505 = vmatpush1.msra.mxu0 0.0
    %3506 = vmatprep.subr.mxu0 0.0
    %3507 = vmatpush1.msra.mxu0 0.0
    %3508 = vmatprep.subr.mxu0 0.0
    %3509 = vmatpush1.msra.mxu0 0.0
    %3510 = vmatprep.subr.mxu0 0.0
    %3511 = vmatpush1.msra.mxu0 0.0
    %3512 = vmatprep.subr.mxu0 0.0
    %3513 = vmatpush1.msra.mxu0 0.0
    %3514 = vmatprep.subr.mxu0 0.0
    %3515 = vmatpush1.msra.mxu0 0.0
    %3516 = vmatprep.subr.mxu0 0.0
    %3517 = vmatpush1.msra.mxu0 0.0
    %3518 = vmatprep.subr.mxu0 0.0
    %3519 = vmatpush1.msra.mxu0 0.0
    %3520 = vmatprep.subr.mxu0 0.0
    %3521 = vmatpush1.msra.mxu0 0.0
    %3522 = vmatprep.mubr.f32.mxu0 0.0
    %3523 = vmatmul.mubr.f32.gmra.mrb[0].mxu0 %v3456
    %v3524 = vpop.f32.mrb[0].mxu0
    %v3525 = vadd.f32 %v3137, %v3524
    %v3526 = vpop.f32.mrb[0].mxu0
    %3527 = vdwg.mxu0
    %v3529 = vrot.slane %v3525, 5
    %v3531 = vadd.f32 %v2983, %v3529
    %v3532 = vxor.u32 %v3531, 2147483648
    %v3533 = vmul.f32 %v3532, 1.442695
    %v3534 = vpow.pop %v3533
    %v3535 = vadd.f32 %v3534, 1.0
    %v3536 = vrcp.pop %v3535
    %v3537 = vmul.f32 1.0, %v3536
    %3538 = vrot.lane.b32.xlu0 %v3529, 64
    %v3539 = vpop.permute.xlu0 %3538
    %v3541 = vmul.f32 %v3537, %v3539
    %3543 = vrot.lane.b32.xlu0 %v3541, 64
    %v3544 = vpop.permute.xlu0 %3543
    %v3546 = vadd.f32 %v2983, %v3544
    %v3547 = vtanh.pop %v3546
    %v3548 = vsub.f32 1.0, %v3537
    %3550 = vrot.lane.b32.xlu0 %v3547, 96
    %v3551 = vpop.permute.xlu0 %3550
    %v3553 = vmul.f32 %v3548, %v3551
    %v3554 = vrot.slane %v3451, 7
    %v3556 = vmul.f32 %v3537, %v3554
    %v3557 = vadd.f32 %v3553, %v3556
    %3558 = vmatprep.subr.mxu0 0.0
    %3559 = vmatpush1.msra.mxu0 %v3139
    %3560 = vmatprep.subr.mxu0 0.0
    %3561 = vmatpush1.msra.mxu0 %v3140
    %3562 = vmatprep.subr.mxu0 0.0
    %3563 = vmatpush1.msra.mxu0 %v3141
    %3564 = vmatprep.subr.mxu0 0.0
    %3565 = vmatpush1.msra.mxu0 %v3142
    %3566 = vmatprep.subr.mxu0 0.0
    %3567 = vmatpush1.msra.mxu0 0.0
    %3568 = vmatprep.subr.mxu0 0.0
    %3569 = vmatpush1.msra.mxu0 0.0
    %3570 = vmatprep.subr.mxu0 0.0
    %3571 = vmatpush1.msra.mxu0 0.0
    %3572 = vmatprep.subr.mxu0 0.0
    %3573 = vmatpush1.msra.mxu0 0.0
    %3574 = vmatprep.subr.mxu0 0.0
    %3575 = vmatpush1.msra.mxu0 0.0
    %3576 = vmatprep.subr.mxu0 0.0
    %3577 = vmatpush1.msra.mxu0 0.0
    %3578 = vmatprep.subr.mxu0 0.0
    %3579 = vmatpush1.msra.mxu0 0.0
    %3580 = vmatprep.subr.mxu0 0.0
    %3581 = vmatpush1.msra.mxu0 0.0
    %3582 = vmatprep.subr.mxu0 0.0
    %3583 = vmatpush1.msra.mxu0 0.0
    %3584 = vmatprep.subr.mxu0 0.0
    %3585 = vmatpush1.msra.mxu0 0.0
    %3586 = vmatprep.subr.mxu0 0.0
    %3587 = vmatpush1.msra.mxu0 0.0
    %3588 = vmatprep.subr.mxu0 0.0
    %3589 = vmatpush1.msra.mxu0 0.0
    %3590 = vmatprep.subr.mxu0 0.0
    %3591 = vmatpush1.msra.mxu0 0.0
    %3592 = vmatprep.subr.mxu0 0.0
    %3593 = vmatpush1.msra.mxu0 0.0
    %3594 = vmatprep.subr.mxu0 0.0
    %3595 = vmatpush1.msra.mxu0 0.0
    %3596 = vmatprep.subr.mxu0 0.0
    %3597 = vmatpush1.msra.mxu0 0.0
    %3598 = vmatprep.subr.mxu0 0.0
    %3599 = vmatpush1.msra.mxu0 0.0
    %3600 = vmatprep.subr.mxu0 0.0
    %3601 = vmatpush1.msra.mxu0 0.0
    %3602 = vmatprep.subr.mxu0 0.0
    %3603 = vmatpush1.msra.mxu0 0.0
    %3604 = vmatprep.subr.mxu0 0.0
    %3605 = vmatpush1.msra.mxu0 0.0
    %3606 = vmatprep.subr.mxu0 0.0
    %3607 = vmatpush1.msra.mxu0 0.0
    %3608 = vmatprep.subr.mxu0 0.0
    %3609 = vmatpush1.msra.mxu0 0.0
    %3610 = vmatprep.subr.mxu0 0.0
    %3611 = vmatpush1.msra.mxu0 0.0
    %3612 = vmatprep.subr.mxu0 0.0
    %3613 = vmatpush1.msra.mxu0 0.0
    %3614 = vmatprep.subr.mxu0 0.0
    %3615 = vmatpush1.msra.mxu0 0.0
    %3616 = vmatprep.subr.mxu0 0.0
    %3617 = vmatpush1.msra.mxu0 0.0
    %3618 = vmatprep.subr.mxu0 0.0
    %3619 = vmatpush1.msra.mxu0 0.0
    %3620 = vmatprep.subr.mxu0 0.0
    %3621 = vmatpush1.msra.mxu0 0.0
    %3622 = vmatprep.mubr.f32.mxu0 0.0
    %3623 = vmatmul.mubr.f32.gmra.mrb[0].mxu0 %v1972
    %v3624 = vpop.f32.mrb[0].mxu0
    %v3625 = vadd.f32 %v3144, %v3624
    %v3626 = vpop.f32.mrb[0].mxu0
    %3627 = vdwg.mxu0
    %v3629 = vrot.slane %v3625, 5
    %v3631 = vadd.f32 %v3132, %v3629
    %v3632 = vxor.u32 %v3631, 2147483648
    %v3633 = vmul.f32 %v3632, 1.442695
    %v3634 = vpow.pop %v3633
    %v3635 = vadd.f32 %v3634, 1.0
    %v3636 = vrcp.pop %v3635
    %v3637 = vmul.f32 1.0, %v3636
    %3638 = vrot.lane.b32.xlu0 %v3629, 64
    %v3639 = vpop.permute.xlu0 %3638
    %v3641 = vmul.f32 %v3637, %v3639
    %3643 = vrot.lane.b32.xlu0 %v3641, 64
    %v3644 = vpop.permute.xlu0 %3643
    %v3646 = vadd.f32 %v3132, %v3644
    %v3647 = vtanh.pop %v3646
    %v3648 = vsub.f32 1.0, %v3637
    %3650 = vrot.lane.b32.xlu0 %v3647, 96
    %v3651 = vpop.permute.xlu0 %3650
    %v3653 = vmul.f32 %v3648, %v3651
    %v3654 = vmul.f32 %v3637, 0.0
    %v3655 = vadd.f32 %v3653, %v3654
    %v3657 = vrot.slane %v3655, 3
    %3658 = vrot.lane.b32.xlu0 %v3657, 96
    %v3659 = vpop.permute.xlu0 %3658
    %v3660 = vsel %vm1971, %v3659, 0
    %3662 = vmatprep.subr.mxu0 0.0
    %3663 = vmatpush1.msra.mxu0 %v3139
    %3664 = vmatprep.subr.mxu0 0.0
    %3665 = vmatpush1.msra.mxu0 %v3140
    %3666 = vmatprep.subr.mxu0 0.0
    %3667 = vmatpush1.msra.mxu0 %v3141
    %3668 = vmatprep.subr.mxu0 0.0
    %3669 = vmatpush1.msra.mxu0 %v3142
    %3670 = vmatprep.subr.mxu0 0.0
    %3671 = vmatpush1.msra.mxu0 0.0
    %3672 = vmatprep.subr.mxu0 0.0
    %3673 = vmatpush1.msra.mxu0 0.0
    %3674 = vmatprep.subr.mxu0 0.0
    %3675 = vmatpush1.msra.mxu0 0.0
    %3676 = vmatprep.subr.mxu0 0.0
    %3677 = vmatpush1.msra.mxu0 0.0
    %3678 = vmatprep.subr.mxu0 0.0
    %3679 = vmatpush1.msra.mxu0 0.0
    %3680 = vmatprep.subr.mxu0 0.0
    %3681 = vmatpush1.msra.mxu0 0.0
    %3682 = vmatprep.subr.mxu0 0.0
    %3683 = vmatpush1.msra.mxu0 0.0
    %3684 = vmatprep.subr.mxu0 0.0
    %3685 = vmatpush1.msra.mxu0 0.0
    %3686 = vmatprep.subr.mxu0 0.0
    %3687 = vmatpush1.msra.mxu0 0.0
    %3688 = vmatprep.subr.mxu0 0.0
    %3689 = vmatpush1.msra.mxu0 0.0
    %3690 = vmatprep.subr.mxu0 0.0
    %3691 = vmatpush1.msra.mxu0 0.0
    %3692 = vmatprep.subr.mxu0 0.0
    %3693 = vmatpush1.msra.mxu0 0.0
    %3694 = vmatprep.subr.mxu0 0.0
    %3695 = vmatpush1.msra.mxu0 0.0
    %3696 = vmatprep.subr.mxu0 0.0
    %3697 = vmatpush1.msra.mxu0 0.0
    %3698 = vmatprep.subr.mxu0 0.0
    %3699 = vmatpush1.msra.mxu0 0.0
    %3700 = vmatprep.subr.mxu0 0.0
    %3701 = vmatpush1.msra.mxu0 0.0
    %3702 = vmatprep.subr.mxu0 0.0
    %3703 = vmatpush1.msra.mxu0 0.0
    %3704 = vmatprep.subr.mxu0 0.0
    %3705 = vmatpush1.msra.mxu0 0.0
    %3706 = vmatprep.subr.mxu0 0.0
    %3707 = vmatpush1.msra.mxu0 0.0
    %3708 = vmatprep.subr.mxu0 0.0
    %3709 = vmatpush1.msra.mxu0 0.0
    %3710 = vmatprep.subr.mxu0 0.0
    %3711 = vmatpush1.msra.mxu0 0.0
    %3712 = vmatprep.subr.mxu0 0.0
    %3713 = vmatpush1.msra.mxu0 0.0
    %3714 = vmatprep.subr.mxu0 0.0
    %3715 = vmatpush1.msra.mxu0 0.0
    %3716 = vmatprep.subr.mxu0 0.0
    %3717 = vmatpush1.msra.mxu0 0.0
    %3718 = vmatprep.subr.mxu0 0.0
    %3719 = vmatpush1.msra.mxu0 0.0
    %3720 = vmatprep.subr.mxu0 0.0
    %3721 = vmatpush1.msra.mxu0 0.0
    %3722 = vmatprep.subr.mxu0 0.0
    %3723 = vmatpush1.msra.mxu0 0.0
    %3724 = vmatprep.subr.mxu0 0.0
    %3725 = vmatpush1.msra.mxu0 0.0
    %3726 = vmatprep.mubr.f32.mxu0 0.0
    %3727 = vmatmul.mubr.f32.gmra.mrb[0].mxu0 %v3660
    %v3728 = vpop.f32.mrb[0].mxu0
    %v3729 = vadd.f32 %v3144, %v3728
    %v3730 = vpop.f32.mrb[0].mxu0
    %3731 = vdwg.mxu0
    %v3733 = vrot.slane %v3729, 6
    %v3735 = vadd.f32 %v3132, %v3733
    %v3736 = vxor.u32 %v3735, 2147483648
    %v3737 = vmul.f32 %v3736, 1.442695
    %v3738 = vpow.pop %v3737
    %v3739 = vadd.f32 %v3738, 1.0
    %v3740 = vrcp.pop %v3739
    %v3741 = vmul.f32 1.0, %v3740
    %3742 = vrot.lane.b32.xlu0 %v3733, 64
    %v3743 = vpop.permute.xlu0 %3742
    %v3745 = vmul.f32 %v3741, %v3743
    %3747 = vrot.lane.b32.xlu0 %v3745, 64
    %v3748 = vpop.permute.xlu0 %3747
    %v3750 = vadd.f32 %v3132, %v3748
    %v3751 = vtanh.pop %v3750
    %v3752 = vsub.f32 1.0, %v3741
    %3754 = vrot.lane.b32.xlu0 %v3751, 96
    %v3755 = vpop.permute.xlu0 %3754
    %v3757 = vmul.f32 %v3752, %v3755
    %v3758 = vrot.slane %v3655, 1
    %v3760 = vmul.f32 %v3741, %v3758
    %v3761 = vadd.f32 %v3757, %v3760
    %v3763 = vrot.slane %v3761, 2
    %3764 = vrot.lane.b32.xlu0 %v3763, 96
    %v3765 = vpop.permute.xlu0 %3764
    %v3766 = vsel %vm1971, %v3765, 0
    %3768 = vmatprep.subr.mxu0 0.0
    %3769 = vmatpush1.msra.mxu0 %v3139
    %3770 = vmatprep.subr.mxu0 0.0
    %3771 = vmatpush1.msra.mxu0 %v3140
    %3772 = vmatprep.subr.mxu0 0.0
    %3773 = vmatpush1.msra.mxu0 %v3141
    %3774 = vmatprep.subr.mxu0 0.0
    %3775 = vmatpush1.msra.mxu0 %v3142
    %3776 = vmatprep.subr.mxu0 0.0
    %3777 = vmatpush1.msra.mxu0 0.0
    %3778 = vmatprep.subr.mxu0 0.0
    %3779 = vmatpush1.msra.mxu0 0.0
    %3780 = vmatprep.subr.mxu0 0.0
    %3781 = vmatpush1.msra.mxu0 0.0
    %3782 = vmatprep.subr.mxu0 0.0
    %3783 = vmatpush1.msra.mxu0 0.0
    %3784 = vmatprep.subr.mxu0 0.0
    %3785 = vmatpush1.msra.mxu0 0.0
    %3786 = vmatprep.subr.mxu0 0.0
    %3787 = vmatpush1.msra.mxu0 0.0
    %3788 = vmatprep.subr.mxu0 0.0
    %3789 = vmatpush1.msra.mxu0 0.0
    %3790 = vmatprep.subr.mxu0 0.0
    %3791 = vmatpush1.msra.mxu0 0.0
    %3792 = vmatprep.subr.mxu0 0.0
    %3793 = vmatpush1.msra.mxu0 0.0
    %3794 = vmatprep.subr.mxu0 0.0
    %3795 = vmatpush1.msra.mxu0 0.0
    %3796 = vmatprep.subr.mxu0 0.0
    %3797 = vmatpush1.msra.mxu0 0.0
    %3798 = vmatprep.subr.mxu0 0.0
    %3799 = vmatpush1.msra.mxu0 0.0
    %3800 = vmatprep.subr.mxu0 0.0
    %3801 = vmatpush1.msra.mxu0 0.0
    %3802 = vmatprep.subr.mxu0 0.0
    %3803 = vmatpush1.msra.mxu0 0.0
    %3804 = vmatprep.subr.mxu0 0.0
    %3805 = vmatpush1.msra.mxu0 0.0
    %3806 = vmatprep.subr.mxu0 0.0
    %3807 = vmatpush1.msra.mxu0 0.0
    %3808 = vmatprep.subr.mxu0 0.0
    %3809 = vmatpush1.msra.mxu0 0.0
    %3810 = vmatprep.subr.mxu0 0.0
    %3811 = vmatpush1.msra.mxu0 0.0
    %3812 = vmatprep.subr.mxu0 0.0
    %3813 = vmatpush1.msra.mxu0 0.0
    %3814 = vmatprep.subr.mxu0 0.0
    %3815 = vmatpush1.msra.mxu0 0.0
    %3816 = vmatprep.subr.mxu0 0.0
    %3817 = vmatpush1.msra.mxu0 0.0
    %3818 = vmatprep.subr.mxu0 0.0
    %3819 = vmatpush1.msra.mxu0 0.0
    %3820 = vmatprep.subr.mxu0 0.0
    %3821 = vmatpush1.msra.mxu0 0.0
    %3822 = vmatprep.subr.mxu0 0.0
    %3823 = vmatpush1.msra.mxu0 0.0
    %3824 = vmatprep.subr.mxu0 0.0
    %3825 = vmatpush1.msra.mxu0 0.0
    %3826 = vmatprep.subr.mxu0 0.0
    %3827 = vmatpush1.msra.mxu0 0.0
    %3828 = vmatprep.subr.mxu0 0.0
    %3829 = vmatpush1.msra.mxu0 0.0
    %3830 = vmatprep.subr.mxu0 0.0
    %3831 = vmatpush1.msra.mxu0 0.0
    %3832 = vmatprep.mubr.f32.mxu0 0.0
    %3833 = vmatmul.mubr.f32.gmra.mrb[0].mxu0 %v3766
    %v3834 = vpop.f32.mrb[0].mxu0
    %v3835 = vadd.f32 %v3144, %v3834
    %v3836 = vpop.f32.mrb[0].mxu0
    %3837 = vdwg.mxu0
    %v3839 = vrot.slane %v3835, 7
    %v3841 = vadd.f32 %v3132, %v3839
    %v3842 = vxor.u32 %v3841, 2147483648
    %v3843 = vmul.f32 %v3842, 1.442695
    %v3844 = vpow.pop %v3843
    %v3845 = vadd.f32 %v3844, 1.0
    %v3846 = vrcp.pop %v3845
    %v3847 = vmul.f32 1.0, %v3846
    %3848 = vrot.lane.b32.xlu0 %v3839, 64
    %v3849 = vpop.permute.xlu0 %3848
    %v3851 = vmul.f32 %v3847, %v3849
    %3853 = vrot.lane.b32.xlu0 %v3851, 64
    %v3854 = vpop.permute.xlu0 %3853
    %v3856 = vadd.f32 %v3132, %v3854
    %v3857 = vtanh.pop %v3856
    %v3858 = vsub.f32 1.0, %v3847
    %3860 = vrot.lane.b32.xlu0 %v3857, 96
    %v3861 = vpop.permute.xlu0 %3860
    %v3863 = vmul.f32 %v3858, %v3861
    %v3864 = vrot.slane %v3761, 1
    %v3866 = vmul.f32 %v3847, %v3864
    %v3867 = vadd.f32 %v3863, %v3866
    %v3869 = vrot.slane %v3867, 1
    %3870 = vrot.lane.b32.xlu0 %v3869, 96
    %v3871 = vpop.permute.xlu0 %3870
    %v3872 = vsel %vm1971, %v3871, 0
    %3874 = vmatprep.subr.mxu0 0.0
    %3875 = vmatpush1.msra.mxu0 %v3139
    %3876 = vmatprep.subr.mxu0 0.0
    %3877 = vmatpush1.msra.mxu0 %v3140
    %3878 = vmatprep.subr.mxu0 0.0
    %3879 = vmatpush1.msra.mxu0 %v3141
    %3880 = vmatprep.subr.mxu0 0.0
    %3881 = vmatpush1.msra.mxu0 %v3142
    %3882 = vmatprep.subr.mxu0 0.0
    %3883 = vmatpush1.msra.mxu0 0.0
    %3884 = vmatprep.subr.mxu0 0.0
    %3885 = vmatpush1.msra.mxu0 0.0
    %3886 = vmatprep.subr.mxu0 0.0
    %3887 = vmatpush1.msra.mxu0 0.0
    %3888 = vmatprep.subr.mxu0 0.0
    %3889 = vmatpush1.msra.mxu0 0.0
    %3890 = vmatprep.subr.mxu0 0.0
    %3891 = vmatpush1.msra.mxu0 0.0
    %3892 = vmatprep.subr.mxu0 0.0
    %3893 = vmatpush1.msra.mxu0 0.0
    %3894 = vmatprep.subr.mxu0 0.0
    %3895 = vmatpush1.msra.mxu0 0.0
    %3896 = vmatprep.subr.mxu0 0.0
    %3897 = vmatpush1.msra.mxu0 0.0
    %3898 = vmatprep.subr.mxu0 0.0
    %3899 = vmatpush1.msra.mxu0 0.0
    %3900 = vmatprep.subr.mxu0 0.0
    %3901 = vmatpush1.msra.mxu0 0.0
    %3902 = vmatprep.subr.mxu0 0.0
    %3903 = vmatpush1.msra.mxu0 0.0
    %3904 = vmatprep.subr.mxu0 0.0
    %3905 = vmatpush1.msra.mxu0 0.0
    %3906 = vmatprep.subr.mxu0 0.0
    %3907 = vmatpush1.msra.mxu0 0.0
    %3908 = vmatprep.subr.mxu0 0.0
    %3909 = vmatpush1.msra.mxu0 0.0
    %3910 = vmatprep.subr.mxu0 0.0
    %3911 = vmatpush1.msra.mxu0 0.0
    %3912 = vmatprep.subr.mxu0 0.0
    %3913 = vmatpush1.msra.mxu0 0.0
    %3914 = vmatprep.subr.mxu0 0.0
    %3915 = vmatpush1.msra.mxu0 0.0
    %3916 = vmatprep.subr.mxu0 0.0
    %3917 = vmatpush1.msra.mxu0 0.0
    %3918 = vmatprep.subr.mxu0 0.0
    %3919 = vmatpush1.msra.mxu0 0.0
    %3920 = vmatprep.subr.mxu0 0.0
    %3921 = vmatpush1.msra.mxu0 0.0
    %3922 = vmatprep.subr.mxu0 0.0
    %3923 = vmatpush1.msra.mxu0 0.0
    %3924 = vmatprep.subr.mxu0 0.0
    %3925 = vmatpush1.msra.mxu0 0.0
    %3926 = vmatprep.subr.mxu0 0.0
    %3927 = vmatpush1.msra.mxu0 0.0
    %3928 = vmatprep.subr.mxu0 0.0
    %3929 = vmatpush1.msra.mxu0 0.0
    %3930 = vmatprep.subr.mxu0 0.0
    %3931 = vmatpush1.msra.mxu0 0.0
    %3932 = vmatprep.subr.mxu0 0.0
    %3933 = vmatpush1.msra.mxu0 0.0
    %3934 = vmatprep.subr.mxu0 0.0
    %3935 = vmatpush1.msra.mxu0 0.0
    %3936 = vmatprep.subr.mxu0 0.0
    %3937 = vmatpush1.msra.mxu0 0.0
    %3938 = vmatprep.mubr.f32.mxu0 0.0
    %3939 = vmatmul.mubr.f32.gmra.mrb[0].mxu0 %v3872
    %v3940 = vpop.f32.mrb[0].mxu0
    %v3941 = vadd.f32 %v3144, %v3940
    %v3942 = vpop.f32.mrb[0].mxu0
    %3943 = vdwg.mxu0
    %v3944 = vadd.f32 %v3132, %v3941
    %v3945 = vxor.u32 %v3944, 2147483648
    %v3946 = vmul.f32 %v3945, 1.442695
    %v3947 = vpow.pop %v3946
    %v3948 = vadd.f32 %v3947, 1.0
    %v3949 = vrcp.pop %v3948
    %v3950 = vmul.f32 1.0, %v3949
    %3952 = vrot.lane.b32.xlu0 %v3941, 64
    %v3953 = vpop.permute.xlu0 %3952
    %v3955 = vmul.f32 %v3950, %v3953
    %3957 = vrot.lane.b32.xlu0 %v3955, 64
    %v3958 = vpop.permute.xlu0 %3957
    %v3960 = vadd.f32 %v3132, %v3958
    %v3961 = vtanh.pop %v3960
    %v3962 = vsub.f32 1.0, %v3950
    %3964 = vrot.lane.b32.xlu0 %v3961, 96
    %v3965 = vpop.permute.xlu0 %3964
    %v3967 = vmul.f32 %v3962, %v3965
    %v3969 = vmul.f32 %v3950, %v3869
    %v3970 = vadd.f32 %v3967, %v3969
    %v3971 = vsel %vm2800, %v3240, %v3345
    %v3972 = vsel %vm2802, %v3971, %v3451
    %v3973 = vsel %vm2804, %v3972, %v3557
    %v3974 = vsel %vm2800, %v3970, %v3867
    %v3975 = vsel %vm2802, %v3974, %v3761
    %v3976 = vsel %vm2804, %v3975, %v3655
    %v3977 = vld [vmem:[%s19] sm:$0xff]
    %v3978 = vld [vmem:[%s19 + $0x8] sm:$0xff]
    %v3979 = vld [vmem:[%s19 + $0x10] sm:$0xff]
    %v3980 = vld [vmem:[%s19 + $0x18] sm:$0xff]
    %v3981 = vld [vmem:[%s19 + $0x20] sm:$0xff]
    %v3982 = vld [vmem:[%s19 + $0x28] sm:$0xff]
    %v3983 = vld [vmem:[%s19 + $0x30] sm:$0xff]
    %v3984 = vld [vmem:[%s19 + $0x38] sm:$0xff]
    %3986 = vrot.lane.b32.xlu0 %v3976, 96
    %v3987 = vpop.permute.xlu0 %3986
    %v3988 = vsel %vm1971, %v3987, 0
    %3990 = vmatprep.subr.mxu0 0.0
    %3991 = vmatpush1.msra.mxu0 %v3981
    %3992 = vmatprep.subr.mxu0 0.0
    %3993 = vmatpush1.msra.mxu0 %v3982
    %3994 = vmatprep.subr.mxu0 0.0
    %3995 = vmatpush1.msra.mxu0 %v3983
    %3996 = vmatprep.subr.mxu0 0.0
    %3997 = vmatpush1.msra.mxu0 %v3984
    %3998 = vmatprep.subr.mxu0 0.0
    %3999 = vmatpush1.msra.mxu0 0.0
    %4000 = vmatprep.subr.mxu0 0.0
    %4001 = vmatpush1.msra.mxu0 0.0
    %4002 = vmatprep.subr.mxu0 0.0
    %4003 = vmatpush1.msra.mxu0 0.0
    %4004 = vmatprep.subr.mxu0 0.0
    %4005 = vmatpush1.msra.mxu0 0.0
    %4006 = vmatprep.subr.mxu0 0.0
    %4007 = vmatpush1.msra.mxu0 0.0
    %4008 = vmatprep.subr.mxu0 0.0
    %4009 = vmatpush1.msra.mxu0 0.0
    %4010 = vmatprep.subr.mxu0 0.0
    %4011 = vmatpush1.msra.mxu0 0.0
    %4012 = vmatprep.subr.mxu0 0.0
    %4013 = vmatpush1.msra.mxu0 0.0
    %4014 = vmatprep.subr.mxu0 0.0
    %4015 = vmatpush1.msra.mxu0 0.0
    %4016 = vmatprep.subr.mxu0 0.0
    %4017 = vmatpush1.msra.mxu0 0.0
    %4018 = vmatprep.subr.mxu0 0.0
    %4019 = vmatpush1.msra.mxu0 0.0
    %4020 = vmatprep.subr.mxu0 0.0
    %4021 = vmatpush1.msra.mxu0 0.0
    %4022 = vmatprep.subr.mxu0 0.0
    %4023 = vmatpush1.msra.mxu0 0.0
    %4024 = vmatprep.subr.mxu0 0.0
    %4025 = vmatpush1.msra.mxu0 0.0
    %4026 = vmatprep.subr.mxu0 0.0
    %4027 = vmatpush1.msra.mxu0 0.0
    %4028 = vmatprep.subr.mxu0 0.0
    %4029 = vmatpush1.msra.mxu0 0.0
    %4030 = vmatprep.subr.mxu0 0.0
    %4031 = vmatpush1.msra.mxu0 0.0
    %4032 = vmatprep.subr.mxu0 0.0
    %4033 = vmatpush1.msra.mxu0 0.0
    %4034 = vmatprep.subr.mxu0 0.0
    %4035 = vmatpush1.msra.mxu0 0.0
    %4036 = vmatprep.subr.mxu0 0.0
    %4037 = vmatpush1.msra.mxu0 0.0
    %4038 = vmatprep.subr.mxu0 0.0
    %4039 = vmatpush1.msra.mxu0 0.0
    %4040 = vmatprep.subr.mxu0 0.0
    %4041 = vmatpush1.msra.mxu0 0.0
    %4042 = vmatprep.subr.mxu0 0.0
    %4043 = vmatpush1.msra.mxu0 0.0
    %4044 = vmatprep.subr.mxu0 0.0
    %4045 = vmatpush1.msra.mxu0 0.0
    %4046 = vmatprep.subr.mxu0 0.0
    %4047 = vmatpush1.msra.mxu0 0.0
    %4048 = vmatprep.subr.mxu0 0.0
    %4049 = vmatpush1.msra.mxu0 0.0
    %4050 = vmatprep.subr.mxu0 0.0
    %4051 = vmatpush1.msra.mxu0 0.0
    %4052 = vmatprep.subr.mxu0 0.0
    %4053 = vmatpush1.msra.mxu0 0.0
    %4054 = vmatprep.mubr.f32.mxu0 0.0
    %4055 = vmatmul.mubr.f32.gmra.mrb[0].mxu0 %v3988
    %v4056 = vpop.f32.mrb[0].mxu0
    %v4057 = vadd.f32 0.0, %v4056
    %v4058 = vpop.f32.mrb[0].mxu0
    %4059 = vdwg.mxu0
    %4061 = vrot.lane.b32.xlu0 %v3973, 96
    %v4062 = vpop.permute.xlu0 %4061
    %v4063 = vsel %vm1971, %v4062, 0
    %4065 = vmatprep.subr.mxu0 0.0
    %4066 = vmatpush1.msra.mxu0 %v3977
    %4067 = vmatprep.subr.mxu0 0.0
    %4068 = vmatpush1.msra.mxu0 %v3978
    %4069 = vmatprep.subr.mxu0 0.0
    %4070 = vmatpush1.msra.mxu0 %v3979
    %4071 = vmatprep.subr.mxu0 0.0
    %4072 = vmatpush1.msra.mxu0 %v3980
    %4073 = vmatprep.subr.mxu0 0.0
    %4074 = vmatpush1.msra.mxu0 0.0
    %4075 = vmatprep.subr.mxu0 0.0
    %4076 = vmatpush1.msra.mxu0 0.0
    %4077 = vmatprep.subr.mxu0 0.0
    %4078 = vmatpush1.msra.mxu0 0.0
    %4079 = vmatprep.subr.mxu0 0.0
    %4080 = vmatpush1.msra.mxu0 0.0
    %4081 = vmatprep.subr.mxu0 0.0
    %4082 = vmatpush1.msra.mxu0 0.0
    %4083 = vmatprep.subr.mxu0 0.0
    %4084 = vmatpush1.msra.mxu0 0.0
    %4085 = vmatprep.subr.mxu0 0.0
    %4086 = vmatpush1.msra.mxu0 0.0
    %4087 = vmatprep.subr.mxu0 0.0
    %4088 = vmatpush1.msra.mxu0 0.0
    %4089 = vmatprep.subr.mxu0 0.0
    %4090 = vmatpush1.msra.mxu0 0.0
    %4091 = vmatprep.subr.mxu0 0.0
    %4092 = vmatpush1.msra.mxu0 0.0
    %4093 = vmatprep.subr.mxu0 0.0
    %4094 = vmatpush1.msra.mxu0 0.0
    %4095 = vmatprep.subr.mxu0 0.0
    %4096 = vmatpush1.msra.mxu0 0.0
    %4097 = vmatprep.subr.mxu0 0.0
    %4098 = vmatpush1.msra.mxu0 0.0
    %4099 = vmatprep.subr.mxu0 0.0
    %4100 = vmatpush1.msra.mxu0 0.0
    %4101 = vmatprep.subr.mxu0 0.0
    %4102 = vmatpush1.msra.mxu0 0.0
    %4103 = vmatprep.subr.mxu0 0.0
    %4104 = vmatpush1.msra.mxu0 0.0
    %4105 = vmatprep.subr.mxu0 0.0
    %4106 = vmatpush1.msra.mxu0 0.0
    %4107 = vmatprep.subr.mxu0 0.0
    %4108 = vmatpush1.msra.mxu0 0.0
    %4109 = vmatprep.subr.mxu0 0.0
    %4110 = vmatpush1.msra.mxu0 0.0
    %4111 = vmatprep.subr.mxu0 0.0
    %4112 = vmatpush1.msra.mxu0 0.0
    %4113 = vmatprep.subr.mxu0 0.0
    %4114 = vmatpush1.msra.mxu0 0.0
    %4115 = vmatprep.subr.mxu0 0.0
    %4116 = vmatpush1.msra.mxu0 0.0
    %4117 = vmatprep.subr.mxu0 0.0
    %4118 = vmatpush1.msra.mxu0 0.0
    %4119 = vmatprep.subr.mxu0 0.0
    %4120 = vmatpush1.msra.mxu0 0.0
    %4121 = vmatprep.subr.mxu0 0.0
    %4122 = vmatpush1.msra.mxu0 0.0
    %4123 = vmatprep.subr.mxu0 0.0
    %4124 = vmatpush1.msra.mxu0 0.0
    %4125 = vmatprep.subr.mxu0 0.0
    %4126 = vmatpush1.msra.mxu0 0.0
    %4127 = vmatprep.subr.mxu0 0.0
    %4128 = vmatpush1.msra.mxu0 0.0
    %4129 = vmatprep.mubr.f32.mxu0 0.0
    %4130 = vmatmul.mubr.f32.gmra.mrb[0].mxu0 %v4063
    %v4131 = vpop.f32.mrb[0].mxu0
    %v4132 = vadd.f32 %v4057, %v4131
    %v4133 = vpop.f32.mrb[0].mxu0
    %4134 = vdwg.mxu0
    %v4135 = vld [vmem:[%s20] sm:$0x1]
    %v4137 = vlaneseq
    %v4138 = vshrl.u32 %v4137, 7
    %v4139 = vsub.s32 0, %v4138
    %v4140 = vrot.slane %v4135, %v4139
    %v4142 = vadd.f32 %v4132, %v4140
    %vm4143 = vcmask 35840
    %4144 = vst.msk [vmem:[#allocation19] sm:$0xf] %vm4143, %v4142
    // Predicated region
    $region126: #{tpu_custom_call.1} parent=1 // pred_check
      _
    $region127: #{tpu_custom_call.1} parent=1 // pred_check_branch
      %4146 = sbr.rel (0) target = $region129
    $region128: #{tpu_custom_call.1} parent=1 // pred_region
      %s4148 = ssub.s32 64, 64
      %4149 = vsyncadd [#allocation4], %s4148
      %s4151 = sshll.u32 [#allocation19], 4
      %s4152 = int_to_ptr.vmem [resolvable:$true] %s4151
      %4154 = dma.vmem_to_hbm [thread:$0]  %s4152, 64, %s21, [#allocation4]
    $region129: #{tpu_custom_call.1} parent=1 // pred_fallthru
      _
    // Predicated region
    $region130: #{tpu_custom_call.1} parent=1 // pred_check
      _
    $region131: #{tpu_custom_call.1} parent=1 // pred_check_branch
      %4156 = sbr.rel (0) target = $region133
    $region132: #{tpu_custom_call.1} parent=1 // pred_region
      %4157 = dma.done [#allocation4], 64
    $region133: #{tpu_custom_call.1} parent=1 // pred_fallthru
      _
    %4158 = vsyncpa [#allocation3], 1
    %4159 = vsyncpa [#allocation6], 1
    %4160 = vsyncpa [#allocation9], 1
    %4161 = vsyncpa [#allocation12], 1
    %4162 = vsyncpa [#allocation15], 1
    %4163 = vsyncpa [#allocation18], 1
    %4164 = vsyncpa [#allocation4], 1

</llo_original>
